<compile_context>
chip_gen: v5e
topology: v5e:2x2
jax: 0.10.0
libtpu: 0.0.40
codegen_flags: <defaults>
</compile_context>

<pallas_src>
import functools

import jax
import jax.numpy as jnp
from jax import lax
from jax.experimental import pallas as pl
from jax.experimental.pallas import tpu as pltpu

KSIZE = 3  # kernel_size, padding = KSIZE // 2 = 1 ("same" conv)


def _conv1d_same_3dot(y, w_ref, b_ref, mask_first, mask_last):
    """Conv1d(k=3, 'same'), channels-last, as three accumulating MXU dots.

    y:          (M, F) f32 activations, M = Bt*L rows (batch-major, consecutive
                sequence positions).
    w_ref:      (3, F, F) bf16 ref; taps 0/1/2 multiply x[l-1]/x[l]/x[l+1].
    b_ref:      (1, F) f32 conv bias.
    mask_first: (M, 1) bool, rows with l == 0     (hoisted by caller).
    mask_last:  (M, 1) bool, rows with l == L - 1 (hoisted by caller).

    No lane-boundary-crossing concat and no (M, 3F) live intermediate: the
    three K=F dots share one f32 accumulator.  pltpu.roll wraps across
    sequence boundaries, but exactly those rows are masked to zero.
    """
    M = y.shape[0]
    y_prev = jnp.where(mask_first, 0.0, pltpu.roll(y, shift=1, axis=0))      # x[l-1]
    y_next = jnp.where(mask_last, 0.0, pltpu.roll(y, shift=M - 1, axis=0))   # x[l+1]
    # Taps built in f32 (portable: v5e VPU has no bf16); cast only at the MXU edge.
    acc = jnp.dot(y.astype(jnp.bfloat16), w_ref[1],
                  preferred_element_type=jnp.float32)
    acc += jnp.dot(y_prev.astype(jnp.bfloat16), w_ref[0],
                   preferred_element_type=jnp.float32)
    acc += jnp.dot(y_next.astype(jnp.bfloat16), w_ref[2],
                   preferred_element_type=jnp.float32)
    return acc + b_ref[...]


def model_kernel(L, F_pad,
                 x_ref,
                 w1_ref, b1_ref, s1_ref, t1_ref,
                 w2_ref, b2_ref, s2_ref, t2_ref,
                 w3_ref, b3_ref, s3_ref, t3_ref,
                 wfc_ref, bfc_ref,
                 feat_ref, pooled_ref):
    M = x_ref.shape[0]          # Bt * L rows (pre-im2col'd in the wrapper)
    Bt = M // L

    # Conv1: LHS already im2col'd on the host -> one (M,3*Cin)x(3*Cin,F) matmul.
    # Kept f32 (K = 3*Cin is tiny) to limit bf16 error compounding.
    y = jnp.dot(x_ref[...], w1_ref[...],
                preferred_element_type=jnp.float32) + b1_ref[...]
    y = jnp.maximum(y, 0.0) * s1_ref[...] + t1_ref[...]        # ReLU -> BN1 (eval affine)

    # Boundary masks hoisted once (reused by conv2 and conv3).
    pos = lax.broadcasted_iota(jnp.int32, (M, 1), 0) % L
    mask_first = pos == 0
    mask_last = pos == (L - 1)

    # Conv2 -> ReLU -> BN2
    y = _conv1d_same_3dot(y, w2_ref, b2_ref, mask_first, mask_last)
    y = jnp.maximum(y, 0.0) * s2_ref[...] + t2_ref[...]
    # Conv3 -> ReLU   (BN3 affine commutes with the mean -> applied after pool)
    y = _conv1d_same_3dot(y, w3_ref, b3_ref, mask_first, mask_last)
    y = jnp.maximum(y, 0.0)

    F = y.shape[-1]
    pooled = jnp.mean(y.reshape(Bt, L, F), axis=1)             # AdaptiveAvgPool1d(1)
    pooled = pooled * s3_ref[...] + t3_ref[...]                # BN3 after pool (exact)

    feats = jnp.dot(pooled.astype(jnp.bfloat16), wfc_ref[...],
                    preferred_element_type=jnp.float32)
    feats = jnp.maximum(feats + bfc_ref[...], 0.0)             # Linear + ReLU
    # TODO(synk): nn.Dropout(0.2) is identity in eval mode; no stochastic drop applied.
    feat_ref[...] = feats.astype(feat_ref.dtype)

    # Lane-dense pooled output: pad F -> F_pad (multiple of 128) so the store is
    # an unmasked vst; the wrapper slices the pad off.
    if F_pad > F:
        pooled = jnp.concatenate(
            [pooled, jnp.zeros((Bt, F_pad - F), pooled.dtype)], axis=-1)
    pooled_ref[...] = pooled.astype(pooled_ref.dtype)


def _im2col_k3(x):
    """(B, L, Cin) -> (B*L, 3*Cin) im2col for the k=3 'same' conv.  Done once
    in XLA so layer-1 tap construction leaves the kernel's critical path."""
    B, L, Cin = x.shape
    zero = jnp.zeros((B, 1, Cin), x.dtype)
    x_prev = jnp.concatenate([zero, x[:, :-1, :]], axis=1)   # x[l-1]
    x_next = jnp.concatenate([x[:, 1:, :], zero], axis=1)    # x[l+1]
    return jnp.concatenate([x_prev, x, x_next], axis=-1).reshape(B * L, 3 * Cin)


def _default_batch_tile(B):
    """One grid step per TensorCore: grid=(1,) on single-TC v5e/v6e, grid=(2,)
    on dual-TC v7x.  Extra steps only add ~0.35us/step pipeline overhead on
    this latency-bound kernel."""
    try:
        kind = jax.devices()[0].device_kind.lower()
    except Exception:
        kind = ""
    if "v7" in kind and B % 2 == 0:
        return B // 2
    return B


def modified_cnn_forward(x, kp, *, batch_tile=None):
    """x: (B, L, Cin) f32; kp: kernel params (see kernel_params)."""
    B, L, Cin = x.shape
    F = kp["b1"].shape[1]
    H = kp["wfc"].shape[1]
    F_pad = max(128, pl.cdiv(F, 128) * 128)       # lane-dense pooled output slab
    Bt = batch_tile if batch_tile is not None else _default_batch_tile(B)
    assert B % Bt == 0, "batch must be divisible by batch_tile"
    nb = B // Bt
    # TODO(synk): for very long L, add a halo-tiled grid axis over L (pooled
    # accumulator resident across an "arbitrary" axis), budgeted for v7x 64 MiB VMEM.

    x_col = _im2col_k3(x)                          # (B*L, 3*Cin)

    def full(shape):
        # Constant-index full-array block for weights/bias/BN operands.
        return pl.BlockSpec(shape, lambda b, _s=shape: (0,) * len(_s))

    in_specs = [
        pl.BlockSpec((Bt * L, 3 * Cin), lambda b: (b, 0)),          # im2col row tile
        full(kp["w1"].shape), full((1, F)), full((1, F)), full((1, F)),
        full(kp["w2"].shape), full((1, F)), full((1, F)), full((1, F)),
        full(kp["w3"].shape), full((1, F)), full((1, F)), full((1, F)),
        full(kp["wfc"].shape), full((1, H)),
    ]
    args = (x_col,
            kp["w1"], kp["b1"], kp["s1"], kp["t1"],
            kp["w2"], kp["b2"], kp["s2"], kp["t2"],
            kp["w3"], kp["b3"], kp["s3"], kp["t3"],
            kp["wfc"], kp["bfc"])

    feats, pooled_pad = pl.pallas_call(
        functools.partial(model_kernel, L, F_pad),
        grid=(nb,),
        out_shape=(jax.ShapeDtypeStruct((B, H), jnp.float32),
                   jax.ShapeDtypeStruct((B, F_pad), jnp.float32)),
        in_specs=in_specs,
        out_specs=(pl.BlockSpec((Bt, H), lambda b: (b, 0)),
                   pl.BlockSpec((Bt, F_pad), lambda b: (b, 0))),
        compiler_params=pltpu.CompilerParams(
            dimension_semantics=("parallel",),           # v7x megacore batch split
            vmem_limit_bytes=32 * 1024 * 1024),
    )(*args)
    return feats, pooled_pad[:, :F]


def init_params(key, input_size, filters, hidden_size):
    """Deterministic synthetic f32 master parameters (no checkpoint load)."""
    ks = jax.random.split(key, 12)
    eps = 1e-5

    def conv_w(k, cin, cout):
        # stored as (K, Cin, Cout); PyTorch layout is (Cout, Cin, K)
        fan_in = cin * KSIZE
        return (jax.random.normal(k, (KSIZE, cin, cout), jnp.float32)
                / jnp.sqrt(jnp.float32(fan_in)))

    def bn(k):
        k1, k2, k3, k4 = jax.random.split(k, 4)
        gamma = 1.0 + 0.1 * jax.random.normal(k1, (filters,), jnp.float32)
        beta = 0.1 * jax.random.normal(k2, (filters,), jnp.float32)
        mean = 0.1 * jax.random.normal(k3, (filters,), jnp.float32)
        var = jax.random.uniform(k4, (filters,), jnp.float32, minval=0.5, maxval=1.5)
        scale = gamma / jnp.sqrt(var + eps)          # eval-mode fold
        shift = beta - mean * scale
        return scale.reshape(1, -1), shift.reshape(1, -1)

    p = {}
    p["w1"] = conv_w(ks[0], input_size, filters)
    p["b1"] = 0.01 * jax.random.normal(ks[1], (1, filters), jnp.float32)
    p["s1"], p["t1"] = bn(ks[2])
    p["w2"] = conv_w(ks[3], filters, filters)
    p["b2"] = 0.01 * jax.random.normal(ks[4], (1, filters), jnp.float32)
    p["s2"], p["t2"] = bn(ks[5])
    p["w3"] = conv_w(ks[6], filters, filters)
    p["b3"] = 0.01 * jax.random.normal(ks[7], (1, filters), jnp.float32)
    p["s3"], p["t3"] = bn(ks[8])
    p["wfc"] = (jax.random.normal(ks[9], (filters, hidden_size), jnp.float32)
                / jnp.sqrt(jnp.float32(filters)))
    p["bfc"] = 0.01 * jax.random.normal(ks[10], (1, hidden_size), jnp.float32)
    return p


def kernel_params(p):
    """Kernel-side params:
       - conv1 taps flattened to (3*Cin, F), kept f32 (tiny K, better precision),
       - conv2/conv3 taps kept as (3, F, F) bf16 (one (F,F) dot per tap),
       - FC weight bf16; bias / BN affine stay f32 for the VPU epilogue."""
    kp = {}
    kp["w1"] = p["w1"].reshape(-1, p["w1"].shape[-1])            # (3*Cin, F) f32
    kp["b1"], kp["s1"], kp["t1"] = p["b1"], p["s1"], p["t1"]
    for i in (2, 3):
        kp[f"w{i}"] = p[f"w{i}"].astype(jnp.bfloat16)            # (3, F, F) bf16
        kp[f"b{i}"] = p[f"b{i}"]
        kp[f"s{i}"] = p[f"s{i}"]
        kp[f"t{i}"] = p[f"t{i}"]
    kp["wfc"] = p["wfc"].astype(jnp.bfloat16)
    kp["bfc"] = p["bfc"]
    return kp


def reference_forward(x, p):
    """Pure-JAX f32 reference mirroring the PyTorch forward (eval mode)."""
    h = jnp.transpose(x, (0, 2, 1))  # (B, Cin, L) == x.permute(0, 2, 1)
    for wk, bk, sk, tk in (("w1", "b1", "s1", "t1"),
                           ("w2", "b2", "s2", "t2"),
                           ("w3", "b3", "s3", "t3")):
        w_oik = jnp.transpose(p[wk], (2, 1, 0))  # (Cout, Cin, K)
        h = lax.conv_general_dilated(h, w_oik, window_strides=(1,),
                                     padding=((1, 1),),
                                     dimension_numbers=("NCH", "OIH", "NCH"))
        h = h + p[bk].reshape(1, -1, 1)
        h = jnp.maximum(h, 0.0)
        h = h * p[sk].reshape(1, -1, 1) + p[tk].reshape(1, -1, 1)
    pooled = jnp.mean(h, axis=-1)  # (B, F)
    feats = jnp.maximum(pooled @ p["wfc"] + p["bfc"], 0.0)
    return feats, pooled


if __name__ == "__main__":
    # Small shapes: batch=16, seq_length=32, input_size=8; module defaults
    # filters=64, hidden_size=128 (lane-dense feature output).
    B, L, Cin = 16, 32, 8
    FILTERS, HIDDEN = 64, 128

    key = jax.random.PRNGKey(0)
    kx, kprm = jax.random.split(key)
    x = jax.random.normal(kx, (B, L, Cin), jnp.float32)
    params = init_params(kprm, Cin, FILTERS, HIDDEN)
    kparams = kernel_params(params)

    # batch_tile=None -> auto: full batch per step (grid=(1,)) on v5e/v6e,
    # B//2 per step (grid=(2,), one per TensorCore) on v7x.
    feats, pooled = modified_cnn_forward(x, kparams, batch_tile=None)
    feats = jax.block_until_ready(feats)
    pooled = jax.block_until_ready(pooled)

    ref_feats, ref_pooled = reference_forward(x, params)
    assert feats.shape == (B, HIDDEN) and pooled.shape == (B, FILTERS)
    assert jnp.allclose(pooled, ref_pooled, rtol=2e-2, atol=2e-2)
    assert jnp.allclose(feats, ref_feats, rtol=2e-2, atol=2e-2)

    print("KERNEL_OK")
</pallas_src>

<mosaic_0001>
module attributes {stable_mosaic.version = 11 : i64} {
  func.func @model_kernel(%arg0: i32, %arg1: memref<512x24xf32, #tpu.memory_space<vmem>>, %arg2: memref<24x64xf32, #tpu.memory_space<vmem>>, %arg3: memref<1x64xf32, #tpu.memory_space<vmem>>, %arg4: memref<1x64xf32, #tpu.memory_space<vmem>>, %arg5: memref<1x64xf32, #tpu.memory_space<vmem>>, %arg6: memref<3x64x64xbf16, #tpu.memory_space<vmem>>, %arg7: memref<1x64xf32, #tpu.memory_space<vmem>>, %arg8: memref<1x64xf32, #tpu.memory_space<vmem>>, %arg9: memref<1x64xf32, #tpu.memory_space<vmem>>, %arg10: memref<3x64x64xbf16, #tpu.memory_space<vmem>>, %arg11: memref<1x64xf32, #tpu.memory_space<vmem>>, %arg12: memref<1x64xf32, #tpu.memory_space<vmem>>, %arg13: memref<1x64xf32, #tpu.memory_space<vmem>>, %arg14: memref<64x128xbf16, #tpu.memory_space<vmem>>, %arg15: memref<1x128xf32, #tpu.memory_space<vmem>>, %arg16: memref<16x128xf32, #tpu.memory_space<vmem>>, %arg17: memref<16x128xf32, #tpu.memory_space<vmem>>) attributes {dimension_semantics = [#tpu.dimension_semantics<parallel>], iteration_bounds = array<i64: 1>, scalar_prefetch = 0 : i64, scratch_operands = 0 : i64, tpu.core_type = #tpu.core_type<tc>, window_params = [{transform_indices = @transform_0, window_bounds = array<i64: 512, 24>}, {pipeline_mode = #tpu.pipeline_mode<synchronous>, transform_indices = @transform_1, window_bounds = array<i64: 24, 64>}, {pipeline_mode = #tpu.pipeline_mode<synchronous>, transform_indices = @transform_2, window_bounds = array<i64: 1, 64>}, {pipeline_mode = #tpu.pipeline_mode<synchronous>, transform_indices = @transform_3, window_bounds = array<i64: 1, 64>}, {pipeline_mode = #tpu.pipeline_mode<synchronous>, transform_indices = @transform_4, window_bounds = array<i64: 1, 64>}, {pipeline_mode = #tpu.pipeline_mode<synchronous>, transform_indices = @transform_5, window_bounds = array<i64: 3, 64, 64>}, {pipeline_mode = #tpu.pipeline_mode<synchronous>, transform_indices = @transform_6, window_bounds = array<i64: 1, 64>}, {pipeline_mode = #tpu.pipeline_mode<synchronous>, transform_indices = @transform_7, window_bounds = array<i64: 1, 64>}, {pipeline_mode = #tpu.pipeline_mode<synchronous>, transform_indices = @transform_8, window_bounds = array<i64: 1, 64>}, {pipeline_mode = #tpu.pipeline_mode<synchronous>, transform_indices = @transform_9, window_bounds = array<i64: 3, 64, 64>}, {pipeline_mode = #tpu.pipeline_mode<synchronous>, transform_indices = @transform_10, window_bounds = array<i64: 1, 64>}, {pipeline_mode = #tpu.pipeline_mode<synchronous>, transform_indices = @transform_11, window_bounds = array<i64: 1, 64>}, {pipeline_mode = #tpu.pipeline_mode<synchronous>, transform_indices = @transform_12, window_bounds = array<i64: 1, 64>}, {pipeline_mode = #tpu.pipeline_mode<synchronous>, transform_indices = @transform_13, window_bounds = array<i64: 64, 128>}, {pipeline_mode = #tpu.pipeline_mode<synchronous>, transform_indices = @transform_14, window_bounds = array<i64: 1, 128>}, {transform_indices = @transform_15, window_bounds = array<i64: 16, 128>}, {transform_indices = @transform_16, window_bounds = array<i64: 16, 128>}]} {
    %c0 = arith.constant 0 : index
    %c0_0 = arith.constant 0 : index
    %0 = vector.load %arg1[%c0, %c0_0] : memref<512x24xf32, #tpu.memory_space<vmem>>, vector<512x24xf32>
    %c0_1 = arith.constant 0 : index
    %c0_2 = arith.constant 0 : index
    %1 = vector.load %arg2[%c0_1, %c0_2] : memref<24x64xf32, #tpu.memory_space<vmem>>, vector<24x64xf32>
    %cst = arith.constant dense<0.000000e+00> : vector<512x64xf32>
    %2 = tpu.matmul %0, %1, %cst {dimension_numbers = #tpu.dot_dimension_numbers<[1], [0], [0], [1], [0, 0, 1, 1], [], []>} : vector<512x24xf32>, vector<24x64xf32>, vector<512x64xf32> -> vector<512x64xf32>
    %c0_3 = arith.constant 0 : index
    %c0_4 = arith.constant 0 : index
    %3 = vector.load %arg3[%c0_3, %c0_4] : memref<1x64xf32, #tpu.memory_space<vmem>>, vector<1x64xf32>
    %4 = vector.broadcast %3 : vector<1x64xf32> to vector<512x64xf32>
    %5 = arith.addf %2, %4 : vector<512x64xf32>
    %cst_5 = arith.constant 0.000000e+00 : f32
    %6 = vector.broadcast %cst_5 : f32 to vector<512x64xf32>
    %7 = arith.maximumf %5, %6 : vector<512x64xf32>
    %c0_6 = arith.constant 0 : index
    %c0_7 = arith.constant 0 : index
    %8 = vector.load %arg4[%c0_6, %c0_7] : memref<1x64xf32, #tpu.memory_space<vmem>>, vector<1x64xf32>
    %9 = vector.broadcast %8 : vector<1x64xf32> to vector<512x64xf32>
    %10 = arith.mulf %7, %9 : vector<512x64xf32>
    %c0_8 = arith.constant 0 : index
    %c0_9 = arith.constant 0 : index
    %11 = vector.load %arg5[%c0_8, %c0_9] : memref<1x64xf32, #tpu.memory_space<vmem>>, vector<1x64xf32>
    %12 = vector.broadcast %11 : vector<1x64xf32> to vector<512x64xf32>
    %13 = arith.addf %10, %12 : vector<512x64xf32>
    %14 = tpu.iota {dimensions = array<i32: 0>} : vector<512x1xi32>
    %c32_i32 = arith.constant 32 : i32
    %c0_i32 = arith.constant 0 : i32
    %15 = arith.cmpi eq, %c32_i32, %c0_i32 : i32
    %c1_i32 = arith.constant 1 : i32
    %16 = arith.select %15, %c1_i32, %c32_i32 : i32
    %17 = vector.broadcast %16 : i32 to vector<512x1xi32>
    %18 = arith.remsi %14, %17 : vector<512x1xi32>
    %c0_i32_10 = arith.constant 0 : i32
    %19 = vector.broadcast %c0_i32_10 : i32 to vector<512x1xi32>
    %20 = arith.cmpi ne, %18, %19 : vector<512x1xi32>
    %c0_i32_11 = arith.constant 0 : i32
    %21 = vector.broadcast %c0_i32_11 : i32 to vector<512x1xi32>
    %22 = arith.cmpi slt, %18, %21 : vector<512x1xi32>
    %c0_i32_12 = arith.constant 0 : i32
    %23 = arith.cmpi slt, %16, %c0_i32_12 : i32
    %24 = vector.broadcast %23 : i1 to vector<512x1xi1>
    %25 = vector.broadcast %24 : vector<512x1xi1> to vector<512x1xi1>
    %26 = arith.xori %22, %25 : vector<512x1xi1>
    %27 = arith.andi %26, %20 : vector<512x1xi1>
    %28 = vector.broadcast %16 : i32 to vector<512x1xi32>
    %29 = arith.addi %18, %28 : vector<512x1xi32>
    %30 = arith.select %27, %29, %18 : vector<512x1xi1>, vector<512x1xi32>
    %c0_i32_13 = arith.constant 0 : i32
    %31 = vector.broadcast %c0_i32_13 : i32 to vector<512x1xi32>
    %32 = arith.cmpi eq, %30, %31 : vector<512x1xi32>
    %c31_i32 = arith.constant 31 : i32
    %33 = vector.broadcast %c31_i32 : i32 to vector<512x1xi32>
    %34 = arith.cmpi eq, %30, %33 : vector<512x1xi32>
    %c1_i32_14 = arith.constant 1 : i32
    %35 = tpu.dynamic_rotate %13 by %c1_i32_14 dim 0 : vector<512x64xf32>, i32 -> vector<512x64xf32>
    %cst_15 = arith.constant 0.000000e+00 : f32
    %36 = vector.shape_cast %32 : vector<512x1xi1> to vector<512x1xi1>
    %37 = vector.broadcast %36 : vector<512x1xi1> to vector<512x64xi1>
    %38 = vector.broadcast %cst_15 : f32 to vector<512x64xf32>
    %39 = arith.select %37, %38, %35 : vector<512x64xi1>, vector<512x64xf32>
    %c511_i32 = arith.constant 511 : i32
    %40 = tpu.dynamic_rotate %13 by %c511_i32 dim 0 : vector<512x64xf32>, i32 -> vector<512x64xf32>
    %cst_16 = arith.constant 0.000000e+00 : f32
    %41 = vector.shape_cast %34 : vector<512x1xi1> to vector<512x1xi1>
    %42 = vector.broadcast %41 : vector<512x1xi1> to vector<512x64xi1>
    %43 = vector.broadcast %cst_16 : f32 to vector<512x64xf32>
    %44 = arith.select %42, %43, %40 : vector<512x64xi1>, vector<512x64xf32>
    %45 = arith.truncf %13 : vector<512x64xf32> to vector<512x64xbf16>
    %c1 = arith.constant 1 : index
    %c0_17 = arith.constant 0 : index
    %c0_18 = arith.constant 0 : index
    %46 = vector.load %arg6[%c1, %c0_17, %c0_18] : memref<3x64x64xbf16, #tpu.memory_space<vmem>>, vector<1x64x64xbf16>
    %47 = vector.shape_cast %46 : vector<1x64x64xbf16> to vector<64x64xbf16>
    %cst_19 = arith.constant dense<0.000000e+00> : vector<512x64xf32>
    %48 = tpu.matmul %45, %47, %cst_19 {dimension_numbers = #tpu.dot_dimension_numbers<[1], [0], [0], [1], [0, 0, 1, 1], [], []>} : vector<512x64xbf16>, vector<64x64xbf16>, vector<512x64xf32> -> vector<512x64xf32>
    %49 = arith.truncf %39 : vector<512x64xf32> to vector<512x64xbf16>
    %c0_20 = arith.constant 0 : index
    %c0_21 = arith.constant 0 : index
    %c0_22 = arith.constant 0 : index
    %50 = vector.load %arg6[%c0_20, %c0_21, %c0_22] : memref<3x64x64xbf16, #tpu.memory_space<vmem>>, vector<1x64x64xbf16>
    %51 = vector.shape_cast %50 : vector<1x64x64xbf16> to vector<64x64xbf16>
    %cst_23 = arith.constant dense<0.000000e+00> : vector<512x64xf32>
    %52 = tpu.matmul %49, %51, %cst_23 {dimension_numbers = #tpu.dot_dimension_numbers<[1], [0], [0], [1], [0, 0, 1, 1], [], []>} : vector<512x64xbf16>, vector<64x64xbf16>, vector<512x64xf32> -> vector<512x64xf32>
    %53 = arith.addf %48, %52 : vector<512x64xf32>
    %54 = arith.truncf %44 : vector<512x64xf32> to vector<512x64xbf16>
    %c2 = arith.constant 2 : index
    %c0_24 = arith.constant 0 : index
    %c0_25 = arith.constant 0 : index
    %55 = vector.load %arg6[%c2, %c0_24, %c0_25] : memref<3x64x64xbf16, #tpu.memory_space<vmem>>, vector<1x64x64xbf16>
    %56 = vector.shape_cast %55 : vector<1x64x64xbf16> to vector<64x64xbf16>
    %cst_26 = arith.constant dense<0.000000e+00> : vector<512x64xf32>
    %57 = tpu.matmul %54, %56, %cst_26 {dimension_numbers = #tpu.dot_dimension_numbers<[1], [0], [0], [1], [0, 0, 1, 1], [], []>} : vector<512x64xbf16>, vector<64x64xbf16>, vector<512x64xf32> -> vector<512x64xf32>
    %58 = arith.addf %53, %57 : vector<512x64xf32>
    %c0_27 = arith.constant 0 : index
    %c0_28 = arith.constant 0 : index
    %59 = vector.load %arg7[%c0_27, %c0_28] : memref<1x64xf32, #tpu.memory_space<vmem>>, vector<1x64xf32>
    %60 = vector.broadcast %59 : vector<1x64xf32> to vector<512x64xf32>
    %61 = arith.addf %58, %60 : vector<512x64xf32>
    %cst_29 = arith.constant 0.000000e+00 : f32
    %62 = vector.broadcast %cst_29 : f32 to vector<512x64xf32>
    %63 = arith.maximumf %61, %62 : vector<512x64xf32>
    %c0_30 = arith.constant 0 : index
    %c0_31 = arith.constant 0 : index
    %64 = vector.load %arg8[%c0_30, %c0_31] : memref<1x64xf32, #tpu.memory_space<vmem>>, vector<1x64xf32>
    %65 = vector.broadcast %64 : vector<1x64xf32> to vector<512x64xf32>
    %66 = arith.mulf %63, %65 : vector<512x64xf32>
    %c0_32 = arith.constant 0 : index
    %c0_33 = arith.constant 0 : index
    %67 = vector.load %arg9[%c0_32, %c0_33] : memref<1x64xf32, #tpu.memory_space<vmem>>, vector<1x64xf32>
    %68 = vector.broadcast %67 : vector<1x64xf32> to vector<512x64xf32>
    %69 = arith.addf %66, %68 : vector<512x64xf32>
    %c1_i32_34 = arith.constant 1 : i32
    %70 = tpu.dynamic_rotate %69 by %c1_i32_34 dim 0 : vector<512x64xf32>, i32 -> vector<512x64xf32>
    %cst_35 = arith.constant 0.000000e+00 : f32
    %71 = vector.shape_cast %32 : vector<512x1xi1> to vector<512x1xi1>
    %72 = vector.broadcast %71 : vector<512x1xi1> to vector<512x64xi1>
    %73 = vector.broadcast %cst_35 : f32 to vector<512x64xf32>
    %74 = arith.select %72, %73, %70 : vector<512x64xi1>, vector<512x64xf32>
    %c511_i32_36 = arith.constant 511 : i32
    %75 = tpu.dynamic_rotate %69 by %c511_i32_36 dim 0 : vector<512x64xf32>, i32 -> vector<512x64xf32>
    %cst_37 = arith.constant 0.000000e+00 : f32
    %76 = vector.shape_cast %34 : vector<512x1xi1> to vector<512x1xi1>
    %77 = vector.broadcast %76 : vector<512x1xi1> to vector<512x64xi1>
    %78 = vector.broadcast %cst_37 : f32 to vector<512x64xf32>
    %79 = arith.select %77, %78, %75 : vector<512x64xi1>, vector<512x64xf32>
    %80 = arith.truncf %69 : vector<512x64xf32> to vector<512x64xbf16>
    %c1_38 = arith.constant 1 : index
    %c0_39 = arith.constant 0 : index
    %c0_40 = arith.constant 0 : index
    %81 = vector.load %arg10[%c1_38, %c0_39, %c0_40] : memref<3x64x64xbf16, #tpu.memory_space<vmem>>, vector<1x64x64xbf16>
    %82 = vector.shape_cast %81 : vector<1x64x64xbf16> to vector<64x64xbf16>
    %cst_41 = arith.constant dense<0.000000e+00> : vector<512x64xf32>
    %83 = tpu.matmul %80, %82, %cst_41 {dimension_numbers = #tpu.dot_dimension_numbers<[1], [0], [0], [1], [0, 0, 1, 1], [], []>} : vector<512x64xbf16>, vector<64x64xbf16>, vector<512x64xf32> -> vector<512x64xf32>
    %84 = arith.truncf %74 : vector<512x64xf32> to vector<512x64xbf16>
    %c0_42 = arith.constant 0 : index
    %c0_43 = arith.constant 0 : index
    %c0_44 = arith.constant 0 : index
    %85 = vector.load %arg10[%c0_42, %c0_43, %c0_44] : memref<3x64x64xbf16, #tpu.memory_space<vmem>>, vector<1x64x64xbf16>
    %86 = vector.shape_cast %85 : vector<1x64x64xbf16> to vector<64x64xbf16>
    %cst_45 = arith.constant dense<0.000000e+00> : vector<512x64xf32>
    %87 = tpu.matmul %84, %86, %cst_45 {dimension_numbers = #tpu.dot_dimension_numbers<[1], [0], [0], [1], [0, 0, 1, 1], [], []>} : vector<512x64xbf16>, vector<64x64xbf16>, vector<512x64xf32> -> vector<512x64xf32>
    %88 = arith.addf %83, %87 : vector<512x64xf32>
    %89 = arith.truncf %79 : vector<512x64xf32> to vector<512x64xbf16>
    %c2_46 = arith.constant 2 : index
    %c0_47 = arith.constant 0 : index
    %c0_48 = arith.constant 0 : index
    %90 = vector.load %arg10[%c2_46, %c0_47, %c0_48] : memref<3x64x64xbf16, #tpu.memory_space<vmem>>, vector<1x64x64xbf16>
    %91 = vector.shape_cast %90 : vector<1x64x64xbf16> to vector<64x64xbf16>
    %cst_49 = arith.constant dense<0.000000e+00> : vector<512x64xf32>
    %92 = tpu.matmul %89, %91, %cst_49 {dimension_numbers = #tpu.dot_dimension_numbers<[1], [0], [0], [1], [0, 0, 1, 1], [], []>} : vector<512x64xbf16>, vector<64x64xbf16>, vector<512x64xf32> -> vector<512x64xf32>
    %93 = arith.addf %88, %92 : vector<512x64xf32>
    %c0_50 = arith.constant 0 : index
    %c0_51 = arith.constant 0 : index
    %94 = vector.load %arg11[%c0_50, %c0_51] : memref<1x64xf32, #tpu.memory_space<vmem>>, vector<1x64xf32>
    %95 = vector.broadcast %94 : vector<1x64xf32> to vector<512x64xf32>
    %96 = arith.addf %93, %95 : vector<512x64xf32>
    %cst_52 = arith.constant 0.000000e+00 : f32
    %97 = vector.broadcast %cst_52 : f32 to vector<512x64xf32>
    %98 = arith.maximumf %96, %97 : vector<512x64xf32>
    %99 = vector.shape_cast %98 : vector<512x64xf32> to vector<16x32x64xf32>
    %cst_53 = arith.constant dense<0.000000e+00> : vector<16x64xf32>
    %100 = vector.multi_reduction <add>, %99, %cst_53 [1] : vector<16x32x64xf32> to vector<16x64xf32>
    %cst_54 = arith.constant 3.200000e+01 : f32
    %101 = vector.broadcast %cst_54 : f32 to vector<16x64xf32>
    %102 = arith.divf %100, %101 : vector<16x64xf32>
    %c0_55 = arith.constant 0 : index
    %c0_56 = arith.constant 0 : index
    %103 = vector.load %arg12[%c0_55, %c0_56] : memref<1x64xf32, #tpu.memory_space<vmem>>, vector<1x64xf32>
    %104 = vector.broadcast %103 : vector<1x64xf32> to vector<16x64xf32>
    %105 = arith.mulf %102, %104 : vector<16x64xf32>
    %c0_57 = arith.constant 0 : index
    %c0_58 = arith.constant 0 : index
    %106 = vector.load %arg13[%c0_57, %c0_58] : memref<1x64xf32, #tpu.memory_space<vmem>>, vector<1x64xf32>
    %107 = vector.broadcast %106 : vector<1x64xf32> to vector<16x64xf32>
    %108 = arith.addf %105, %107 : vector<16x64xf32>
    %109 = arith.truncf %108 : vector<16x64xf32> to vector<16x64xbf16>
    %c0_59 = arith.constant 0 : index
    %c0_60 = arith.constant 0 : index
    %110 = vector.load %arg14[%c0_59, %c0_60] : memref<64x128xbf16, #tpu.memory_space<vmem>>, vector<64x128xbf16>
    %cst_61 = arith.constant dense<0.000000e+00> : vector<16x128xf32>
    %111 = tpu.matmul %109, %110, %cst_61 {dimension_numbers = #tpu.dot_dimension_numbers<[1], [0], [0], [1], [0, 0, 1, 1], [], []>} : vector<16x64xbf16>, vector<64x128xbf16>, vector<16x128xf32> -> vector<16x128xf32>
    %c0_62 = arith.constant 0 : index
    %c0_63 = arith.constant 0 : index
    %112 = vector.load %arg15[%c0_62, %c0_63] : memref<1x128xf32, #tpu.memory_space<vmem>>, vector<1x128xf32>
    %113 = vector.broadcast %112 : vector<1x128xf32> to vector<16x128xf32>
    %114 = arith.addf %111, %113 : vector<16x128xf32>
    %cst_64 = arith.constant 0.000000e+00 : f32
    %115 = vector.broadcast %cst_64 : f32 to vector<16x128xf32>
    %116 = arith.maximumf %114, %115 : vector<16x128xf32>
    %c0_65 = arith.constant 0 : index
    %c0_66 = arith.constant 0 : index
    %117 = vector.load %arg16[%c0_65, %c0_66] : memref<16x128xf32, #tpu.memory_space<vmem>>, vector<16x128xf32>
    tpu.vector_store %arg16[%c0_65, %c0_66], %116 {strides = array<i32>} : memref<16x128xf32, #tpu.memory_space<vmem>>, vector<16x128xf32>,
    %cst_67 = arith.constant 0.000000e+00 : f32
    %118 = vector.broadcast %cst_67 : f32 to vector<16x64xf32>
    %119 = tpu.concatenate %108, %118 in 1 : vector<16x64xf32>, vector<16x64xf32> -> vector<16x128xf32>
    %c0_68 = arith.constant 0 : index
    %c0_69 = arith.constant 0 : index
    %120 = vector.load %arg17[%c0_68, %c0_69] : memref<16x128xf32, #tpu.memory_space<vmem>>, vector<16x128xf32>
    tpu.vector_store %arg17[%c0_68, %c0_69], %119 {strides = array<i32>} : memref<16x128xf32, #tpu.memory_space<vmem>>, vector<16x128xf32>,
    return
  }
  func.func @transform_0(%arg0: i32) -> (i32, i32) {
    %c0_i32 = arith.constant 0 : i32
    %c0_i32_0 = arith.constant 0 : i32
    return %arg0, %c0_i32 : i32, i32
  }
  func.func @transform_1(%arg0: i32) -> (i32, i32) {
    %c0_i32 = arith.constant 0 : i32
    %c0_i32_0 = arith.constant 0 : i32
    %c0_i32_1 = arith.constant 0 : i32
    return %c0_i32, %c0_i32_0 : i32, i32
  }
  func.func @transform_2(%arg0: i32) -> (i32, i32) {
    %c0_i32 = arith.constant 0 : i32
    %c0_i32_0 = arith.constant 0 : i32
    %c0_i32_1 = arith.constant 0 : i32
    return %c0_i32, %c0_i32_0 : i32, i32
  }
  func.func @transform_3(%arg0: i32) -> (i32, i32) {
    %c0_i32 = arith.constant 0 : i32
    %c0_i32_0 = arith.constant 0 : i32
    %c0_i32_1 = arith.constant 0 : i32
    return %c0_i32, %c0_i32_0 : i32, i32
  }
  func.func @transform_4(%arg0: i32) -> (i32, i32) {
    %c0_i32 = arith.constant 0 : i32
    %c0_i32_0 = arith.constant 0 : i32
    %c0_i32_1 = arith.constant 0 : i32
    return %c0_i32, %c0_i32_0 : i32, i32
  }
  func.func @transform_5(%arg0: i32) -> (i32, i32, i32) {
    %c0_i32 = arith.constant 0 : i32
    %c0_i32_0 = arith.constant 0 : i32
    %c0_i32_1 = arith.constant 0 : i32
    %c0_i32_2 = arith.constant 0 : i32
    return %c0_i32, %c0_i32_0, %c0_i32_1 : i32, i32, i32
  }
  func.func @transform_6(%arg0: i32) -> (i32, i32) {
    %c0_i32 = arith.constant 0 : i32
    %c0_i32_0 = arith.constant 0 : i32
    %c0_i32_1 = arith.constant 0 : i32
    return %c0_i32, %c0_i32_0 : i32, i32
  }
  func.func @transform_7(%arg0: i32) -> (i32, i32) {
    %c0_i32 = arith.constant 0 : i32
    %c0_i32_0 = arith.constant 0 : i32
    %c0_i32_1 = arith.constant 0 : i32
    return %c0_i32, %c0_i32_0 : i32, i32
  }
  func.func @transform_8(%arg0: i32) -> (i32, i32) {
    %c0_i32 = arith.constant 0 : i32
    %c0_i32_0 = arith.constant 0 : i32
    %c0_i32_1 = arith.constant 0 : i32
    return %c0_i32, %c0_i32_0 : i32, i32
  }
  func.func @transform_9(%arg0: i32) -> (i32, i32, i32) {
    %c0_i32 = arith.constant 0 : i32
    %c0_i32_0 = arith.constant 0 : i32
    %c0_i32_1 = arith.constant 0 : i32
    %c0_i32_2 = arith.constant 0 : i32
    return %c0_i32, %c0_i32_0, %c0_i32_1 : i32, i32, i32
  }
  func.func @transform_10(%arg0: i32) -> (i32, i32) {
    %c0_i32 = arith.constant 0 : i32
    %c0_i32_0 = arith.constant 0 : i32
    %c0_i32_1 = arith.constant 0 : i32
    return %c0_i32, %c0_i32_0 : i32, i32
  }
  func.func @transform_11(%arg0: i32) -> (i32, i32) {
    %c0_i32 = arith.constant 0 : i32
    %c0_i32_0 = arith.constant 0 : i32
    %c0_i32_1 = arith.constant 0 : i32
    return %c0_i32, %c0_i32_0 : i32, i32
  }
  func.func @transform_12(%arg0: i32) -> (i32, i32) {
    %c0_i32 = arith.constant 0 : i32
    %c0_i32_0 = arith.constant 0 : i32
    %c0_i32_1 = arith.constant 0 : i32
    return %c0_i32, %c0_i32_0 : i32, i32
  }
  func.func @transform_13(%arg0: i32) -> (i32, i32) {
    %c0_i32 = arith.constant 0 : i32
    %c0_i32_0 = arith.constant 0 : i32
    %c0_i32_1 = arith.constant 0 : i32
    return %c0_i32, %c0_i32_0 : i32, i32
  }
  func.func @transform_14(%arg0: i32) -> (i32, i32) {
    %c0_i32 = arith.constant 0 : i32
    %c0_i32_0 = arith.constant 0 : i32
    %c0_i32_1 = arith.constant 0 : i32
    return %c0_i32, %c0_i32_0 : i32, i32
  }
  func.func @transform_15(%arg0: i32) -> (i32, i32) {
    %c0_i32 = arith.constant 0 : i32
    %c0_i32_0 = arith.constant 0 : i32
    return %arg0, %c0_i32 : i32, i32
  }
  func.func @transform_16(%arg0: i32) -> (i32, i32) {
    %c0_i32 = arith.constant 0 : i32
    %c0_i32_0 = arith.constant 0 : i32
    return %arg0, %c0_i32 : i32, i32
  }
}

</mosaic_0001>

<llo_original>
// kernel: tpu_custom_call.1
$region0: #{tpu_custom_call.1}
  #allocation0 [shape = 'u32[]', space=smem, size = 0x4, offset = 0x4, fixed_abs, tag = 'smem constant byte address 0x4 - core index']
  #allocation1 [shape = 'u32[72,128]{1,0:T(1,128)}', space=vmem, size = 0x9000, scoped, tag = 'internal scratch']
  %s0 = inlined_call_operand.vmem [shape: f32[512,24], index: 0, kind: input, shape index: {}]
  %s1 = inlined_call_operand.vmem [shape: f32[24,64], index: 1, kind: input, shape index: {}]
  %s2 = inlined_call_operand.vmem [shape: f32[1,64], index: 2, kind: input, shape index: {}]
  %s3 = inlined_call_operand.vmem [shape: f32[1,64], index: 3, kind: input, shape index: {}]
  %s4 = inlined_call_operand.vmem [shape: f32[1,64], index: 4, kind: input, shape index: {}]
  %s5 = inlined_call_operand.vmem [shape: bf16[3,64,64], index: 5, kind: input, shape index: {}]
  %s6 = inlined_call_operand.vmem [shape: f32[1,64], index: 6, kind: input, shape index: {}]
  %s7 = inlined_call_operand.vmem [shape: f32[1,64], index: 7, kind: input, shape index: {}]
  %s8 = inlined_call_operand.vmem [shape: f32[1,64], index: 8, kind: input, shape index: {}]
  %s9 = inlined_call_operand.vmem [shape: bf16[3,64,64], index: 9, kind: input, shape index: {}]
  %s10 = inlined_call_operand.vmem [shape: f32[1,64], index: 10, kind: input, shape index: {}]
  %s11 = inlined_call_operand.vmem [shape: f32[1,64], index: 11, kind: input, shape index: {}]
  %s12 = inlined_call_operand.vmem [shape: f32[1,64], index: 12, kind: input, shape index: {}]
  %s13 = inlined_call_operand.vmem [shape: bf16[64,128], index: 13, kind: input, shape index: {}]
  %s14 = inlined_call_operand.vmem [shape: f32[1,128], index: 14, kind: input, shape index: {}]
  %s15 = inlined_call_operand.hbm [shape: f32[16,128], index: 15, kind: output, shape index: {0}]
  %s16 = inlined_call_operand.hbm [shape: f32[16,128], index: 16, kind: output, shape index: {1}]
  %17 = xla_tuple %s15, %s16
  %s18 = sld [smem:[#allocation0]]
  $region78: #{tpu_custom_call.1} parent=0
    _
  %s20 = ssub.s32 1, %s18
  %s21 = scalar_select 0, %s20, %s18
  $region1: #{tpu_custom_call.1} parent=0
    #allocation2 [shape = 'u8[8192]{0}', space=vmem, size = 0x2000, scoped, tag = 'output window, operand 0, single buffered']
    #allocation3 [shape = 's32[1]{0}', space=sflag, size = 0x4, scoped, tag = 'scoped memory for tpu_custom_call.1']
    #allocation4 [shape = 'u8[8192]{0}', space=vmem, size = 0x2000, scoped, tag = 'output window, operand 1, single buffered']
    #allocation5 [shape = 's32[1]{0}', space=sflag, size = 0x4, scoped, tag = 'scoped memory for tpu_custom_call.1']
    %22 = vsyncpa [#allocation3], 0
    %23 = vsyncpa [#allocation5], 0
    // Predicated region
    $region2: #{tpu_custom_call.1} parent=1 // pred_check
      _
    $region3: #{tpu_custom_call.1} parent=1 // pred_check_branch
      %25 = sbr.rel (0) target = $region5
    $region4: #{tpu_custom_call.1} parent=1 // pred_region
      _
    $region5: #{tpu_custom_call.1} parent=1 // pred_fallthru
      _
    // Predicated region
    $region6: #{tpu_custom_call.1} parent=1 // pred_check
      _
    $region7: #{tpu_custom_call.1} parent=1 // pred_check_branch
      %27 = sbr.rel (0) target = $region9
    $region8: #{tpu_custom_call.1} parent=1 // pred_region
      _
    $region9: #{tpu_custom_call.1} parent=1 // pred_fallthru
      _
    // Predicated region
    $region10: #{tpu_custom_call.1} parent=1 // pred_check
      _
    $region11: #{tpu_custom_call.1} parent=1 // pred_check_branch
      %29 = sbr.rel (0) target = $region13
    $region12: #{tpu_custom_call.1} parent=1 // pred_region
      _
    $region13: #{tpu_custom_call.1} parent=1 // pred_fallthru
      _
    // Predicated region
    $region14: #{tpu_custom_call.1} parent=1 // pred_check
      _
    $region15: #{tpu_custom_call.1} parent=1 // pred_check_branch
      %31 = sbr.rel (0) target = $region17
    $region16: #{tpu_custom_call.1} parent=1 // pred_region
      _
    $region17: #{tpu_custom_call.1} parent=1 // pred_fallthru
      _
    // Predicated region
    $region18: #{tpu_custom_call.1} parent=1 // pred_check
      _
    $region19: #{tpu_custom_call.1} parent=1 // pred_check_branch
      %33 = sbr.rel (0) target = $region21
    $region20: #{tpu_custom_call.1} parent=1 // pred_region
      _
    $region21: #{tpu_custom_call.1} parent=1 // pred_fallthru
      _
    // Predicated region
    $region22: #{tpu_custom_call.1} parent=1 // pred_check
      _
    $region23: #{tpu_custom_call.1} parent=1 // pred_check_branch
      %35 = sbr.rel (0) target = $region25
    $region24: #{tpu_custom_call.1} parent=1 // pred_region
      _
    $region25: #{tpu_custom_call.1} parent=1 // pred_fallthru
      _
    // Predicated region
    $region26: #{tpu_custom_call.1} parent=1 // pred_check
      _
    $region27: #{tpu_custom_call.1} parent=1 // pred_check_branch
      %37 = sbr.rel (0) target = $region29
    $region28: #{tpu_custom_call.1} parent=1 // pred_region
      _
    $region29: #{tpu_custom_call.1} parent=1 // pred_fallthru
      _
    // Predicated region
    $region30: #{tpu_custom_call.1} parent=1 // pred_check
      _
    $region31: #{tpu_custom_call.1} parent=1 // pred_check_branch
      %39 = sbr.rel (0) target = $region33
    $region32: #{tpu_custom_call.1} parent=1 // pred_region
      _
    $region33: #{tpu_custom_call.1} parent=1 // pred_fallthru
      _
    // Predicated region
    $region34: #{tpu_custom_call.1} parent=1 // pred_check
      _
    $region35: #{tpu_custom_call.1} parent=1 // pred_check_branch
      %41 = sbr.rel (0) target = $region37
    $region36: #{tpu_custom_call.1} parent=1 // pred_region
      _
    $region37: #{tpu_custom_call.1} parent=1 // pred_fallthru
      _
    // Predicated region
    $region38: #{tpu_custom_call.1} parent=1 // pred_check
      _
    $region39: #{tpu_custom_call.1} parent=1 // pred_check_branch
      %43 = sbr.rel (0) target = $region41
    $region40: #{tpu_custom_call.1} parent=1 // pred_region
      _
    $region41: #{tpu_custom_call.1} parent=1 // pred_fallthru
      _
    // Predicated region
    $region42: #{tpu_custom_call.1} parent=1 // pred_check
      _
    $region43: #{tpu_custom_call.1} parent=1 // pred_check_branch
      %45 = sbr.rel (0) target = $region45
    $region44: #{tpu_custom_call.1} parent=1 // pred_region
      _
    $region45: #{tpu_custom_call.1} parent=1 // pred_fallthru
      _
    // Predicated region
    $region46: #{tpu_custom_call.1} parent=1 // pred_check
      _
    $region47: #{tpu_custom_call.1} parent=1 // pred_check_branch
      %47 = sbr.rel (0) target = $region49
    $region48: #{tpu_custom_call.1} parent=1 // pred_region
      _
    $region49: #{tpu_custom_call.1} parent=1 // pred_fallthru
      _
    // Predicated region
    $region50: #{tpu_custom_call.1} parent=1 // pred_check
      _
    $region51: #{tpu_custom_call.1} parent=1 // pred_check_branch
      %49 = sbr.rel (0) target = $region53
    $region52: #{tpu_custom_call.1} parent=1 // pred_region
      _
    $region53: #{tpu_custom_call.1} parent=1 // pred_fallthru
      _
    // Predicated region
    $region54: #{tpu_custom_call.1} parent=1 // pred_check
      _
    $region55: #{tpu_custom_call.1} parent=1 // pred_check_branch
      %51 = sbr.rel (0) target = $region57
    $region56: #{tpu_custom_call.1} parent=1 // pred_region
      _
    $region57: #{tpu_custom_call.1} parent=1 // pred_fallthru
      _
    // Predicated region
    $region58: #{tpu_custom_call.1} parent=1 // pred_check
      _
    $region59: #{tpu_custom_call.1} parent=1 // pred_check_branch
      %53 = sbr.rel (0) target = $region61
    $region60: #{tpu_custom_call.1} parent=1 // pred_region
      _
    $region61: #{tpu_custom_call.1} parent=1 // pred_fallthru
      _
    %v55 = vld [vmem:[%s0] sm:$0xff]
    %v56 = vld [vmem:[%s0 + $0x8] sm:$0xff]
    %v57 = vld [vmem:[%s0 + $0x10] sm:$0xff]
    %v58 = vld [vmem:[%s0 + $0x18] sm:$0xff]
    %v59 = vld [vmem:[%s0 + $0x20] sm:$0xff]
    %v60 = vld [vmem:[%s0 + $0x28] sm:$0xff]
    %v61 = vld [vmem:[%s0 + $0x30] sm:$0xff]
    %v62 = vld [vmem:[%s0 + $0x38] sm:$0xff]
    %v63 = vld [vmem:[%s0 + $0x40] sm:$0xff]
    %v64 = vld [vmem:[%s0 + $0x48] sm:$0xff]
    %v65 = vld [vmem:[%s0 + $0x50] sm:$0xff]
    %v66 = vld [vmem:[%s0 + $0x58] sm:$0xff]
    %v67 = vld [vmem:[%s0 + $0x60] sm:$0xff]
    %v68 = vld [vmem:[%s0 + $0x68] sm:$0xff]
    %v69 = vld [vmem:[%s0 + $0x70] sm:$0xff]
    %v70 = vld [vmem:[%s0 + $0x78] sm:$0xff]
    %v71 = vld [vmem:[%s0 + $0x80] sm:$0xff]
    %v72 = vld [vmem:[%s0 + $0x88] sm:$0xff]
    %v73 = vld [vmem:[%s0 + $0x90] sm:$0xff]
    %v74 = vld [vmem:[%s0 + $0x98] sm:$0xff]
    %v75 = vld [vmem:[%s0 + $0xa0] sm:$0xff]
    %v76 = vld [vmem:[%s0 + $0xa8] sm:$0xff]
    %v77 = vld [vmem:[%s0 + $0xb0] sm:$0xff]
    %v78 = vld [vmem:[%s0 + $0xb8] sm:$0xff]
    %v79 = vld [vmem:[%s0 + $0xc0] sm:$0xff]
    %v80 = vld [vmem:[%s0 + $0xc8] sm:$0xff]
    %v81 = vld [vmem:[%s0 + $0xd0] sm:$0xff]
    %v82 = vld [vmem:[%s0 + $0xd8] sm:$0xff]
    %v83 = vld [vmem:[%s0 + $0xe0] sm:$0xff]
    %v84 = vld [vmem:[%s0 + $0xe8] sm:$0xff]
    %v85 = vld [vmem:[%s0 + $0xf0] sm:$0xff]
    %v86 = vld [vmem:[%s0 + $0xf8] sm:$0xff]
    %v87 = vld [vmem:[%s0 + $0x100] sm:$0xff]
    %v88 = vld [vmem:[%s0 + $0x108] sm:$0xff]
    %v89 = vld [vmem:[%s0 + $0x110] sm:$0xff]
    %v90 = vld [vmem:[%s0 + $0x118] sm:$0xff]
    %v91 = vld [vmem:[%s0 + $0x120] sm:$0xff]
    %v92 = vld [vmem:[%s0 + $0x128] sm:$0xff]
    %v93 = vld [vmem:[%s0 + $0x130] sm:$0xff]
    %v94 = vld [vmem:[%s0 + $0x138] sm:$0xff]
    %v95 = vld [vmem:[%s0 + $0x140] sm:$0xff]
    %v96 = vld [vmem:[%s0 + $0x148] sm:$0xff]
    %v97 = vld [vmem:[%s0 + $0x150] sm:$0xff]
    %v98 = vld [vmem:[%s0 + $0x158] sm:$0xff]
    %v99 = vld [vmem:[%s0 + $0x160] sm:$0xff]
    %v100 = vld [vmem:[%s0 + $0x168] sm:$0xff]
    %v101 = vld [vmem:[%s0 + $0x170] sm:$0xff]
    %v102 = vld [vmem:[%s0 + $0x178] sm:$0xff]
    %v103 = vld [vmem:[%s0 + $0x180] sm:$0xff]
    %v104 = vld [vmem:[%s0 + $0x188] sm:$0xff]
    %v105 = vld [vmem:[%s0 + $0x190] sm:$0xff]
    %v106 = vld [vmem:[%s0 + $0x198] sm:$0xff]
    %v107 = vld [vmem:[%s0 + $0x1a0] sm:$0xff]
    %v108 = vld [vmem:[%s0 + $0x1a8] sm:$0xff]
    %v109 = vld [vmem:[%s0 + $0x1b0] sm:$0xff]
    %v110 = vld [vmem:[%s0 + $0x1b8] sm:$0xff]
    %v111 = vld [vmem:[%s0 + $0x1c0] sm:$0xff]
    %v112 = vld [vmem:[%s0 + $0x1c8] sm:$0xff]
    %v113 = vld [vmem:[%s0 + $0x1d0] sm:$0xff]
    %v114 = vld [vmem:[%s0 + $0x1d8] sm:$0xff]
    %v115 = vld [vmem:[%s0 + $0x1e0] sm:$0xff]
    %v116 = vld [vmem:[%s0 + $0x1e8] sm:$0xff]
    %v117 = vld [vmem:[%s0 + $0x1f0] sm:$0xff]
    %v118 = vld [vmem:[%s0 + $0x1f8] sm:$0xff]
    %v119 = vld [vmem:[%s1] sm:$0xff]
    %v120 = vld [vmem:[%s1 + $0x8] sm:$0xff]
    %v121 = vld [vmem:[%s1 + $0x10] sm:$0xff]
    %v122 = vld [vmem:[%s2] sm:$0x1]
    %v124 = vperm.slane %v122, 0
    %vm126 = vcmask 195584
    %v128 = vsel %vm126, %v55, 0
    %v131 = vsel %vm126, %v56, 0
    %v134 = vsel %vm126, %v57, 0
    %v137 = vsel %vm126, %v58, 0
    %v140 = vsel %vm126, %v59, 0
    %v143 = vsel %vm126, %v60, 0
    %v146 = vsel %vm126, %v61, 0
    %v149 = vsel %vm126, %v62, 0
    %v152 = vsel %vm126, %v63, 0
    %v155 = vsel %vm126, %v64, 0
    %v158 = vsel %vm126, %v65, 0
    %v161 = vsel %vm126, %v66, 0
    %v164 = vsel %vm126, %v67, 0
    %v167 = vsel %vm126, %v68, 0
    %v170 = vsel %vm126, %v69, 0
    %v173 = vsel %vm126, %v70, 0
    %v176 = vsel %vm126, %v71, 0
    %v179 = vsel %vm126, %v72, 0
    %v182 = vsel %vm126, %v73, 0
    %v185 = vsel %vm126, %v74, 0
    %v188 = vsel %vm126, %v75, 0
    %v191 = vsel %vm126, %v76, 0
    %v194 = vsel %vm126, %v77, 0
    %v197 = vsel %vm126, %v78, 0
    %v200 = vsel %vm126, %v79, 0
    %v203 = vsel %vm126, %v80, 0
    %v206 = vsel %vm126, %v81, 0
    %v209 = vsel %vm126, %v82, 0
    %v212 = vsel %vm126, %v83, 0
    %v215 = vsel %vm126, %v84, 0
    %v218 = vsel %vm126, %v85, 0
    %v221 = vsel %vm126, %v86, 0
    %v224 = vsel %vm126, %v87, 0
    %v227 = vsel %vm126, %v88, 0
    %v230 = vsel %vm126, %v89, 0
    %v233 = vsel %vm126, %v90, 0
    %v236 = vsel %vm126, %v91, 0
    %v239 = vsel %vm126, %v92, 0
    %v242 = vsel %vm126, %v93, 0
    %v245 = vsel %vm126, %v94, 0
    %v248 = vsel %vm126, %v95, 0
    %v251 = vsel %vm126, %v96, 0
    %v254 = vsel %vm126, %v97, 0
    %v257 = vsel %vm126, %v98, 0
    %v260 = vsel %vm126, %v99, 0
    %v263 = vsel %vm126, %v100, 0
    %v266 = vsel %vm126, %v101, 0
    %v269 = vsel %vm126, %v102, 0
    %v272 = vsel %vm126, %v103, 0
    %v275 = vsel %vm126, %v104, 0
    %v278 = vsel %vm126, %v105, 0
    %v281 = vsel %vm126, %v106, 0
    %v284 = vsel %vm126, %v107, 0
    %v287 = vsel %vm126, %v108, 0
    %v290 = vsel %vm126, %v109, 0
    %v293 = vsel %vm126, %v110, 0
    %v296 = vsel %vm126, %v111, 0
    %v299 = vsel %vm126, %v112, 0
    %v302 = vsel %vm126, %v113, 0
    %v305 = vsel %vm126, %v114, 0
    %v308 = vsel %vm126, %v115, 0
    %v311 = vsel %vm126, %v116, 0
    %v314 = vsel %vm126, %v117, 0
    %v317 = vsel %vm126, %v118, 0
    %319 = vmatpush.msra.mxu0 0.0
    %320 = vmatpush.msra.mxu0 0.0
    %321 = vmatpush.msra.mxu0 0.0
    %322 = vmatpush.msra.mxu0 0.0
    %323 = vmatpush.msra.mxu0 0.0
    %324 = vmatpush.msra.mxu0 0.0
    %325 = vmatpush.msra.mxu0 0.0
    %326 = vmatpush.msra.mxu0 0.0
    %327 = vmatpush.msra.mxu0 0.0
    %328 = vmatpush.msra.mxu0 0.0
    %329 = vmatpush.msra.mxu0 0.0
    %330 = vmatpush.msra.mxu0 0.0
    %331 = vmatpush.msra.mxu0 0.0
    %332 = vmatpush.msra.mxu0 %v121
    %333 = vmatpush.msra.mxu0 %v120
    %334 = vmatpush.msra.mxu0 %v119
    %335 = vmatmul.f32.gmra.mxu0 %v128
    %v336 = vpop.f32.mrf.mxu0
    %v337 = vadd.f32 %v124, %v336
    %338 = vmatmul.f32.gmra.mxu0 %v131
    %v339 = vpop.f32.mrf.mxu0
    %v340 = vadd.f32 %v124, %v339
    %341 = vmatmul.f32.gmra.mxu0 %v134
    %v342 = vpop.f32.mrf.mxu0
    %v343 = vadd.f32 %v124, %v342
    %344 = vmatmul.f32.gmra.mxu0 %v137
    %v345 = vpop.f32.mrf.mxu0
    %v346 = vadd.f32 %v124, %v345
    %347 = vmatmul.f32.gmra.mxu0 %v140
    %v348 = vpop.f32.mrf.mxu0
    %v349 = vadd.f32 %v124, %v348
    %350 = vmatmul.f32.gmra.mxu0 %v143
    %v351 = vpop.f32.mrf.mxu0
    %v352 = vadd.f32 %v124, %v351
    %353 = vmatmul.f32.gmra.mxu0 %v146
    %v354 = vpop.f32.mrf.mxu0
    %v355 = vadd.f32 %v124, %v354
    %356 = vmatmul.f32.gmra.mxu0 %v149
    %v357 = vpop.f32.mrf.mxu0
    %v358 = vadd.f32 %v124, %v357
    %359 = vmatmul.f32.gmra.mxu0 %v152
    %v360 = vpop.f32.mrf.mxu0
    %v361 = vadd.f32 %v124, %v360
    %362 = vmatmul.f32.gmra.mxu0 %v155
    %v363 = vpop.f32.mrf.mxu0
    %v364 = vadd.f32 %v124, %v363
    %365 = vmatmul.f32.gmra.mxu0 %v158
    %v366 = vpop.f32.mrf.mxu0
    %v367 = vadd.f32 %v124, %v366
    %368 = vmatmul.f32.gmra.mxu0 %v161
    %v369 = vpop.f32.mrf.mxu0
    %v370 = vadd.f32 %v124, %v369
    %371 = vmatmul.f32.gmra.mxu0 %v164
    %v372 = vpop.f32.mrf.mxu0
    %v373 = vadd.f32 %v124, %v372
    %374 = vmatmul.f32.gmra.mxu0 %v167
    %v375 = vpop.f32.mrf.mxu0
    %v376 = vadd.f32 %v124, %v375
    %377 = vmatmul.f32.gmra.mxu0 %v170
    %v378 = vpop.f32.mrf.mxu0
    %v379 = vadd.f32 %v124, %v378
    %380 = vmatmul.f32.gmra.mxu0 %v173
    %v381 = vpop.f32.mrf.mxu0
    %v382 = vadd.f32 %v124, %v381
    %383 = vmatmul.f32.gmra.mxu0 %v176
    %v384 = vpop.f32.mrf.mxu0
    %v385 = vadd.f32 %v124, %v384
    %386 = vmatmul.f32.gmra.mxu0 %v179
    %v387 = vpop.f32.mrf.mxu0
    %v388 = vadd.f32 %v124, %v387
    %389 = vmatmul.f32.gmra.mxu0 %v182
    %v390 = vpop.f32.mrf.mxu0
    %v391 = vadd.f32 %v124, %v390
    %392 = vmatmul.f32.gmra.mxu0 %v185
    %v393 = vpop.f32.mrf.mxu0
    %v394 = vadd.f32 %v124, %v393
    %395 = vmatmul.f32.gmra.mxu0 %v188
    %v396 = vpop.f32.mrf.mxu0
    %v397 = vadd.f32 %v124, %v396
    %398 = vmatmul.f32.gmra.mxu0 %v191
    %v399 = vpop.f32.mrf.mxu0
    %v400 = vadd.f32 %v124, %v399
    %401 = vmatmul.f32.gmra.mxu0 %v194
    %v402 = vpop.f32.mrf.mxu0
    %v403 = vadd.f32 %v124, %v402
    %404 = vmatmul.f32.gmra.mxu0 %v197
    %v405 = vpop.f32.mrf.mxu0
    %v406 = vadd.f32 %v124, %v405
    %407 = vmatmul.f32.gmra.mxu0 %v200
    %v408 = vpop.f32.mrf.mxu0
    %v409 = vadd.f32 %v124, %v408
    %410 = vmatmul.f32.gmra.mxu0 %v203
    %v411 = vpop.f32.mrf.mxu0
    %v412 = vadd.f32 %v124, %v411
    %413 = vmatmul.f32.gmra.mxu0 %v206
    %v414 = vpop.f32.mrf.mxu0
    %v415 = vadd.f32 %v124, %v414
    %416 = vmatmul.f32.gmra.mxu0 %v209
    %v417 = vpop.f32.mrf.mxu0
    %v418 = vadd.f32 %v124, %v417
    %419 = vmatmul.f32.gmra.mxu0 %v212
    %v420 = vpop.f32.mrf.mxu0
    %v421 = vadd.f32 %v124, %v420
    %422 = vmatmul.f32.gmra.mxu0 %v215
    %v423 = vpop.f32.mrf.mxu0
    %v424 = vadd.f32 %v124, %v423
    %425 = vmatmul.f32.gmra.mxu0 %v218
    %v426 = vpop.f32.mrf.mxu0
    %v427 = vadd.f32 %v124, %v426
    %428 = vmatmul.f32.gmra.mxu0 %v221
    %v429 = vpop.f32.mrf.mxu0
    %v430 = vadd.f32 %v124, %v429
    %431 = vmatmul.f32.gmra.mxu0 %v224
    %v432 = vpop.f32.mrf.mxu0
    %v433 = vadd.f32 %v124, %v432
    %434 = vmatmul.f32.gmra.mxu0 %v227
    %v435 = vpop.f32.mrf.mxu0
    %v436 = vadd.f32 %v124, %v435
    %437 = vmatmul.f32.gmra.mxu0 %v230
    %v438 = vpop.f32.mrf.mxu0
    %v439 = vadd.f32 %v124, %v438
    %440 = vmatmul.f32.gmra.mxu0 %v233
    %v441 = vpop.f32.mrf.mxu0
    %v442 = vadd.f32 %v124, %v441
    %443 = vmatmul.f32.gmra.mxu0 %v236
    %v444 = vpop.f32.mrf.mxu0
    %v445 = vadd.f32 %v124, %v444
    %446 = vmatmul.f32.gmra.mxu0 %v239
    %v447 = vpop.f32.mrf.mxu0
    %v448 = vadd.f32 %v124, %v447
    %449 = vmatmul.f32.gmra.mxu0 %v242
    %v450 = vpop.f32.mrf.mxu0
    %v451 = vadd.f32 %v124, %v450
    %452 = vmatmul.f32.gmra.mxu0 %v245
    %v453 = vpop.f32.mrf.mxu0
    %v454 = vadd.f32 %v124, %v453
    %455 = vmatmul.f32.gmra.mxu0 %v248
    %v456 = vpop.f32.mrf.mxu0
    %v457 = vadd.f32 %v124, %v456
    %458 = vmatmul.f32.gmra.mxu0 %v251
    %v459 = vpop.f32.mrf.mxu0
    %v460 = vadd.f32 %v124, %v459
    %461 = vmatmul.f32.gmra.mxu0 %v254
    %v462 = vpop.f32.mrf.mxu0
    %v463 = vadd.f32 %v124, %v462
    %464 = vmatmul.f32.gmra.mxu0 %v257
    %v465 = vpop.f32.mrf.mxu0
    %v466 = vadd.f32 %v124, %v465
    %467 = vmatmul.f32.gmra.mxu0 %v260
    %v468 = vpop.f32.mrf.mxu0
    %v469 = vadd.f32 %v124, %v468
    %470 = vmatmul.f32.gmra.mxu0 %v263
    %v471 = vpop.f32.mrf.mxu0
    %v472 = vadd.f32 %v124, %v471
    %473 = vmatmul.f32.gmra.mxu0 %v266
    %v474 = vpop.f32.mrf.mxu0
    %v475 = vadd.f32 %v124, %v474
    %476 = vmatmul.f32.gmra.mxu0 %v269
    %v477 = vpop.f32.mrf.mxu0
    %v478 = vadd.f32 %v124, %v477
    %479 = vmatmul.f32.gmra.mxu0 %v272
    %v480 = vpop.f32.mrf.mxu0
    %v481 = vadd.f32 %v124, %v480
    %482 = vmatmul.f32.gmra.mxu0 %v275
    %v483 = vpop.f32.mrf.mxu0
    %v484 = vadd.f32 %v124, %v483
    %485 = vmatmul.f32.gmra.mxu0 %v278
    %v486 = vpop.f32.mrf.mxu0
    %v487 = vadd.f32 %v124, %v486
    %488 = vmatmul.f32.gmra.mxu0 %v281
    %v489 = vpop.f32.mrf.mxu0
    %v490 = vadd.f32 %v124, %v489
    %491 = vmatmul.f32.gmra.mxu0 %v284
    %v492 = vpop.f32.mrf.mxu0
    %v493 = vadd.f32 %v124, %v492
    %494 = vmatmul.f32.gmra.mxu0 %v287
    %v495 = vpop.f32.mrf.mxu0
    %v496 = vadd.f32 %v124, %v495
    %497 = vmatmul.f32.gmra.mxu0 %v290
    %v498 = vpop.f32.mrf.mxu0
    %v499 = vadd.f32 %v124, %v498
    %500 = vmatmul.f32.gmra.mxu0 %v293
    %v501 = vpop.f32.mrf.mxu0
    %v502 = vadd.f32 %v124, %v501
    %503 = vmatmul.f32.gmra.mxu0 %v296
    %v504 = vpop.f32.mrf.mxu0
    %v505 = vadd.f32 %v124, %v504
    %506 = vmatmul.f32.gmra.mxu0 %v299
    %v507 = vpop.f32.mrf.mxu0
    %v508 = vadd.f32 %v124, %v507
    %509 = vmatmul.f32.gmra.mxu0 %v302
    %v510 = vpop.f32.mrf.mxu0
    %v511 = vadd.f32 %v124, %v510
    %512 = vmatmul.f32.gmra.mxu0 %v305
    %v513 = vpop.f32.mrf.mxu0
    %v514 = vadd.f32 %v124, %v513
    %515 = vmatmul.f32.gmra.mxu0 %v308
    %v516 = vpop.f32.mrf.mxu0
    %v517 = vadd.f32 %v124, %v516
    %518 = vmatmul.f32.gmra.mxu0 %v311
    %v519 = vpop.f32.mrf.mxu0
    %v520 = vadd.f32 %v124, %v519
    %521 = vmatmul.f32.gmra.mxu0 %v314
    %v522 = vpop.f32.mrf.mxu0
    %v523 = vadd.f32 %v124, %v522
    %524 = vmatmul.f32.gmra.mxu0 %v317
    %v525 = vpop.f32.mrf.mxu0
    %v526 = vadd.f32 %v124, %v525
    %527 = vdwg.mxu0
    %v528 = vmax.f32 %v337, 0.0
    %v529 = vmax.f32 %v340, 0.0
    %v530 = vmax.f32 %v343, 0.0
    %v531 = vmax.f32 %v346, 0.0
    %v532 = vmax.f32 %v349, 0.0
    %v533 = vmax.f32 %v352, 0.0
    %v534 = vmax.f32 %v355, 0.0
    %v535 = vmax.f32 %v358, 0.0
    %v536 = vmax.f32 %v361, 0.0
    %v537 = vmax.f32 %v364, 0.0
    %v538 = vmax.f32 %v367, 0.0
    %v539 = vmax.f32 %v370, 0.0
    %v540 = vmax.f32 %v373, 0.0
    %v541 = vmax.f32 %v376, 0.0
    %v542 = vmax.f32 %v379, 0.0
    %v543 = vmax.f32 %v382, 0.0
    %v544 = vmax.f32 %v385, 0.0
    %v545 = vmax.f32 %v388, 0.0
    %v546 = vmax.f32 %v391, 0.0
    %v547 = vmax.f32 %v394, 0.0
    %v548 = vmax.f32 %v397, 0.0
    %v549 = vmax.f32 %v400, 0.0
    %v550 = vmax.f32 %v403, 0.0
    %v551 = vmax.f32 %v406, 0.0
    %v552 = vmax.f32 %v409, 0.0
    %v553 = vmax.f32 %v412, 0.0
    %v554 = vmax.f32 %v415, 0.0
    %v555 = vmax.f32 %v418, 0.0
    %v556 = vmax.f32 %v421, 0.0
    %v557 = vmax.f32 %v424, 0.0
    %v558 = vmax.f32 %v427, 0.0
    %v559 = vmax.f32 %v430, 0.0
    %v560 = vmax.f32 %v433, 0.0
    %v561 = vmax.f32 %v436, 0.0
    %v562 = vmax.f32 %v439, 0.0
    %v563 = vmax.f32 %v442, 0.0
    %v564 = vmax.f32 %v445, 0.0
    %v565 = vmax.f32 %v448, 0.0
    %v566 = vmax.f32 %v451, 0.0
    %v567 = vmax.f32 %v454, 0.0
    %v568 = vmax.f32 %v457, 0.0
    %v569 = vmax.f32 %v460, 0.0
    %v570 = vmax.f32 %v463, 0.0
    %v571 = vmax.f32 %v466, 0.0
    %v572 = vmax.f32 %v469, 0.0
    %v573 = vmax.f32 %v472, 0.0
    %v574 = vmax.f32 %v475, 0.0
    %v575 = vmax.f32 %v478, 0.0
    %v576 = vmax.f32 %v481, 0.0
    %v577 = vmax.f32 %v484, 0.0
    %v578 = vmax.f32 %v487, 0.0
    %v579 = vmax.f32 %v490, 0.0
    %v580 = vmax.f32 %v493, 0.0
    %v581 = vmax.f32 %v496, 0.0
    %v582 = vmax.f32 %v499, 0.0
    %v583 = vmax.f32 %v502, 0.0
    %v584 = vmax.f32 %v505, 0.0
    %v585 = vmax.f32 %v508, 0.0
    %v586 = vmax.f32 %v511, 0.0
    %v587 = vmax.f32 %v514, 0.0
    %v588 = vmax.f32 %v517, 0.0
    %v589 = vmax.f32 %v520, 0.0
    %v590 = vmax.f32 %v523, 0.0
    %v591 = vmax.f32 %v526, 0.0
    %v592 = vld [vmem:[%s3] sm:$0x1]
    %v594 = vperm.slane %v592, 0
    %v596 = vmul.f32 %v528, %v594
    %v597 = vmul.f32 %v529, %v594
    %v598 = vmul.f32 %v530, %v594
    %v599 = vmul.f32 %v531, %v594
    %v600 = vmul.f32 %v532, %v594
    %v601 = vmul.f32 %v533, %v594
    %v602 = vmul.f32 %v534, %v594
    %v603 = vmul.f32 %v535, %v594
    %v604 = vmul.f32 %v536, %v594
    %v605 = vmul.f32 %v537, %v594
    %v606 = vmul.f32 %v538, %v594
    %v607 = vmul.f32 %v539, %v594
    %v608 = vmul.f32 %v540, %v594
    %v609 = vmul.f32 %v541, %v594
    %v610 = vmul.f32 %v542, %v594
    %v611 = vmul.f32 %v543, %v594
    %v612 = vmul.f32 %v544, %v594
    %v613 = vmul.f32 %v545, %v594
    %v614 = vmul.f32 %v546, %v594
    %v615 = vmul.f32 %v547, %v594
    %v616 = vmul.f32 %v548, %v594
    %v617 = vmul.f32 %v549, %v594
    %v618 = vmul.f32 %v550, %v594
    %v619 = vmul.f32 %v551, %v594
    %v620 = vmul.f32 %v552, %v594
    %v621 = vmul.f32 %v553, %v594
    %v622 = vmul.f32 %v554, %v594
    %v623 = vmul.f32 %v555, %v594
    %v624 = vmul.f32 %v556, %v594
    %v625 = vmul.f32 %v557, %v594
    %v626 = vmul.f32 %v558, %v594
    %v627 = vmul.f32 %v559, %v594
    %v628 = vmul.f32 %v560, %v594
    %v629 = vmul.f32 %v561, %v594
    %v630 = vmul.f32 %v562, %v594
    %v631 = vmul.f32 %v563, %v594
    %v632 = vmul.f32 %v564, %v594
    %v633 = vmul.f32 %v565, %v594
    %v634 = vmul.f32 %v566, %v594
    %v635 = vmul.f32 %v567, %v594
    %v636 = vmul.f32 %v568, %v594
    %v637 = vmul.f32 %v569, %v594
    %v638 = vmul.f32 %v570, %v594
    %v639 = vmul.f32 %v571, %v594
    %v640 = vmul.f32 %v572, %v594
    %v641 = vmul.f32 %v573, %v594
    %v642 = vmul.f32 %v574, %v594
    %v643 = vmul.f32 %v575, %v594
    %v644 = vmul.f32 %v576, %v594
    %v645 = vmul.f32 %v577, %v594
    %v646 = vmul.f32 %v578, %v594
    %v647 = vmul.f32 %v579, %v594
    %v648 = vmul.f32 %v580, %v594
    %v649 = vmul.f32 %v581, %v594
    %v650 = vmul.f32 %v582, %v594
    %v651 = vmul.f32 %v583, %v594
    %v652 = vmul.f32 %v584, %v594
    %v653 = vmul.f32 %v585, %v594
    %v654 = vmul.f32 %v586, %v594
    %v655 = vmul.f32 %v587, %v594
    %v656 = vmul.f32 %v588, %v594
    %v657 = vmul.f32 %v589, %v594
    %v658 = vmul.f32 %v590, %v594
    %v659 = vmul.f32 %v591, %v594
    %v660 = vld [vmem:[%s4] sm:$0x1]
    %v662 = vperm.slane %v660, 0
    %v664 = vadd.f32 %v596, %v662
    %v665 = vadd.f32 %v597, %v662
    %v666 = vadd.f32 %v598, %v662
    %v667 = vadd.f32 %v599, %v662
    %v668 = vadd.f32 %v600, %v662
    %v669 = vadd.f32 %v601, %v662
    %v670 = vadd.f32 %v602, %v662
    %v671 = vadd.f32 %v603, %v662
    %v672 = vadd.f32 %v604, %v662
    %v673 = vadd.f32 %v605, %v662
    %v674 = vadd.f32 %v606, %v662
    %v675 = vadd.f32 %v607, %v662
    %v676 = vadd.f32 %v608, %v662
    %v677 = vadd.f32 %v609, %v662
    %v678 = vadd.f32 %v610, %v662
    %v679 = vadd.f32 %v611, %v662
    %v680 = vadd.f32 %v612, %v662
    %v681 = vadd.f32 %v613, %v662
    %v682 = vadd.f32 %v614, %v662
    %v683 = vadd.f32 %v615, %v662
    %v684 = vadd.f32 %v616, %v662
    %v685 = vadd.f32 %v617, %v662
    %v686 = vadd.f32 %v618, %v662
    %v687 = vadd.f32 %v619, %v662
    %v688 = vadd.f32 %v620, %v662
    %v689 = vadd.f32 %v621, %v662
    %v690 = vadd.f32 %v622, %v662
    %v691 = vadd.f32 %v623, %v662
    %v692 = vadd.f32 %v624, %v662
    %v693 = vadd.f32 %v625, %v662
    %v694 = vadd.f32 %v626, %v662
    %v695 = vadd.f32 %v627, %v662
    %v696 = vadd.f32 %v628, %v662
    %v697 = vadd.f32 %v629, %v662
    %v698 = vadd.f32 %v630, %v662
    %v699 = vadd.f32 %v631, %v662
    %v700 = vadd.f32 %v632, %v662
    %v701 = vadd.f32 %v633, %v662
    %v702 = vadd.f32 %v634, %v662
    %v703 = vadd.f32 %v635, %v662
    %v704 = vadd.f32 %v636, %v662
    %v705 = vadd.f32 %v637, %v662
    %v706 = vadd.f32 %v638, %v662
    %v707 = vadd.f32 %v639, %v662
    %v708 = vadd.f32 %v640, %v662
    %v709 = vadd.f32 %v641, %v662
    %v710 = vadd.f32 %v642, %v662
    %v711 = vadd.f32 %v643, %v662
    %v712 = vadd.f32 %v644, %v662
    %v713 = vadd.f32 %v645, %v662
    %v714 = vadd.f32 %v646, %v662
    %v715 = vadd.f32 %v647, %v662
    %v716 = vadd.f32 %v648, %v662
    %v717 = vadd.f32 %v649, %v662
    %v718 = vadd.f32 %v650, %v662
    %v719 = vadd.f32 %v651, %v662
    %v720 = vadd.f32 %v652, %v662
    %v721 = vadd.f32 %v653, %v662
    %v722 = vadd.f32 %v654, %v662
    %v723 = vadd.f32 %v655, %v662
    %v724 = vadd.f32 %v656, %v662
    %v725 = vadd.f32 %v657, %v662
    %v726 = vadd.f32 %v658, %v662
    %v727 = vadd.f32 %v659, %v662
    %v728 = vlaneseq
    %v729 = vshrl.u32 %v728, 7
    %v730 = vadd.s32 %v729, 8
    %v731 = vadd.s32 %v729, 16
    %v732 = vadd.s32 %v729, 24
    %v733 = vadd.s32 %v729, 32
    %v734 = vadd.s32 %v729, 40
    %v735 = vadd.s32 %v729, 48
    %v736 = vadd.s32 %v729, 56
    %v737 = vadd.s32 %v729, 64
    %v738 = vadd.s32 %v729, 72
    %v739 = vadd.s32 %v729, 80
    %v740 = vadd.s32 %v729, 88
    %v741 = vadd.s32 %v729, 96
    %v742 = vadd.s32 %v729, 104
    %v743 = vadd.s32 %v729, 112
    %v744 = vadd.s32 %v729, 120
    %v745 = vadd.s32 %v729, 128
    %v746 = vadd.s32 %v729, 136
    %v747 = vadd.s32 %v729, 144
    %v748 = vadd.s32 %v729, 152
    %v749 = vadd.s32 %v729, 160
    %v750 = vadd.s32 %v729, 168
    %v751 = vadd.s32 %v729, 176
    %v752 = vadd.s32 %v729, 184
    %v753 = vadd.s32 %v729, 192
    %v754 = vadd.s32 %v729, 200
    %v755 = vadd.s32 %v729, 208
    %v756 = vadd.s32 %v729, 216
    %v757 = vadd.s32 %v729, 224
    %v758 = vadd.s32 %v729, 232
    %v759 = vadd.s32 %v729, 240
    %v760 = vadd.s32 %v729, 248
    %v761 = vadd.s32 %v729, 256
    %v762 = vadd.s32 %v729, 264
    %v763 = vadd.s32 %v729, 272
    %v764 = vadd.s32 %v729, 280
    %v765 = vadd.s32 %v729, 288
    %v766 = vadd.s32 %v729, 296
    %v767 = vadd.s32 %v729, 304
    %v768 = vadd.s32 %v729, 312
    %v769 = vadd.s32 %v729, 320
    %v770 = vadd.s32 %v729, 328
    %v771 = vadd.s32 %v729, 336
    %v772 = vadd.s32 %v729, 344
    %v773 = vadd.s32 %v729, 352
    %v774 = vadd.s32 %v729, 360
    %v775 = vadd.s32 %v729, 368
    %v776 = vadd.s32 %v729, 376
    %v777 = vadd.s32 %v729, 384
    %v778 = vadd.s32 %v729, 392
    %v779 = vadd.s32 %v729, 400
    %v780 = vadd.s32 %v729, 408
    %v781 = vadd.s32 %v729, 416
    %v782 = vadd.s32 %v729, 424
    %v783 = vadd.s32 %v729, 432
    %v784 = vadd.s32 %v729, 440
    %v785 = vadd.s32 %v729, 448
    %v786 = vadd.s32 %v729, 456
    %v787 = vadd.s32 %v729, 464
    %v788 = vadd.s32 %v729, 472
    %v789 = vadd.s32 %v729, 480
    %v790 = vadd.s32 %v729, 488
    %v791 = vadd.s32 %v729, 496
    %v792 = vadd.s32 %v729, 504
    %vm793 = vcmp.lt.s32.totalorder %v729, 0
    %v794 = vsub.s32 0, %v729
    %v795 = vsel %vm793, %v794, %v729
    %v796 = vshrl.u32 %v795, 5
    %v797 = vand.u32 %v795, 31
    %v798 = vsub.s32 0, %v797
    %v799 = vsel %vm793, %v798, %v797
    %vm800 = vcmp.lt.s32.totalorder %v730, 0
    %v801 = vsub.s32 0, %v730
    %v802 = vsel %vm800, %v801, %v730
    %v803 = vshrl.u32 %v802, 5
    %v804 = vand.u32 %v802, 31
    %v805 = vsub.s32 0, %v804
    %v806 = vsel %vm800, %v805, %v804
    %vm807 = vcmp.lt.s32.totalorder %v731, 0
    %v808 = vsub.s32 0, %v731
    %v809 = vsel %vm807, %v808, %v731
    %v810 = vshrl.u32 %v809, 5
    %v811 = vand.u32 %v809, 31
    %v812 = vsub.s32 0, %v811
    %v813 = vsel %vm807, %v812, %v811
    %vm814 = vcmp.lt.s32.totalorder %v732, 0
    %v815 = vsub.s32 0, %v732
    %v816 = vsel %vm814, %v815, %v732
    %v817 = vshrl.u32 %v816, 5
    %v818 = vand.u32 %v816, 31
    %v819 = vsub.s32 0, %v818
    %v820 = vsel %vm814, %v819, %v818
    %vm821 = vcmp.lt.s32.totalorder %v733, 0
    %v822 = vsub.s32 0, %v733
    %v823 = vsel %vm821, %v822, %v733
    %v824 = vshrl.u32 %v823, 5
    %v825 = vand.u32 %v823, 31
    %v826 = vsub.s32 0, %v825
    %v827 = vsel %vm821, %v826, %v825
    %vm828 = vcmp.lt.s32.totalorder %v734, 0
    %v829 = vsub.s32 0, %v734
    %v830 = vsel %vm828, %v829, %v734
    %v831 = vshrl.u32 %v830, 5
    %v832 = vand.u32 %v830, 31
    %v833 = vsub.s32 0, %v832
    %v834 = vsel %vm828, %v833, %v832
    %vm835 = vcmp.lt.s32.totalorder %v735, 0
    %v836 = vsub.s32 0, %v735
    %v837 = vsel %vm835, %v836, %v735
    %v838 = vshrl.u32 %v837, 5
    %v839 = vand.u32 %v837, 31
    %v840 = vsub.s32 0, %v839
    %v841 = vsel %vm835, %v840, %v839
    %vm842 = vcmp.lt.s32.totalorder %v736, 0
    %v843 = vsub.s32 0, %v736
    %v844 = vsel %vm842, %v843, %v736
    %v845 = vshrl.u32 %v844, 5
    %v846 = vand.u32 %v844, 31
    %v847 = vsub.s32 0, %v846
    %v848 = vsel %vm842, %v847, %v846
    %vm849 = vcmp.lt.s32.totalorder %v737, 0
    %v850 = vsub.s32 0, %v737
    %v851 = vsel %vm849, %v850, %v737
    %v852 = vshrl.u32 %v851, 5
    %v853 = vand.u32 %v851, 31
    %v854 = vsub.s32 0, %v853
    %v855 = vsel %vm849, %v854, %v853
    %vm856 = vcmp.lt.s32.totalorder %v738, 0
    %v857 = vsub.s32 0, %v738
    %v858 = vsel %vm856, %v857, %v738
    %v859 = vshrl.u32 %v858, 5
    %v860 = vand.u32 %v858, 31
    %v861 = vsub.s32 0, %v860
    %v862 = vsel %vm856, %v861, %v860
    %vm863 = vcmp.lt.s32.totalorder %v739, 0
    %v864 = vsub.s32 0, %v739
    %v865 = vsel %vm863, %v864, %v739
    %v866 = vshrl.u32 %v865, 5
    %v867 = vand.u32 %v865, 31
    %v868 = vsub.s32 0, %v867
    %v869 = vsel %vm863, %v868, %v867
    %vm870 = vcmp.lt.s32.totalorder %v740, 0
    %v871 = vsub.s32 0, %v740
    %v872 = vsel %vm870, %v871, %v740
    %v873 = vshrl.u32 %v872, 5
    %v874 = vand.u32 %v872, 31
    %v875 = vsub.s32 0, %v874
    %v876 = vsel %vm870, %v875, %v874
    %vm877 = vcmp.lt.s32.totalorder %v741, 0
    %v878 = vsub.s32 0, %v741
    %v879 = vsel %vm877, %v878, %v741
    %v880 = vshrl.u32 %v879, 5
    %v881 = vand.u32 %v879, 31
    %v882 = vsub.s32 0, %v881
    %v883 = vsel %vm877, %v882, %v881
    %vm884 = vcmp.lt.s32.totalorder %v742, 0
    %v885 = vsub.s32 0, %v742
    %v886 = vsel %vm884, %v885, %v742
    %v887 = vshrl.u32 %v886, 5
    %v888 = vand.u32 %v886, 31
    %v889 = vsub.s32 0, %v888
    %v890 = vsel %vm884, %v889, %v888
    %vm891 = vcmp.lt.s32.totalorder %v743, 0
    %v892 = vsub.s32 0, %v743
    %v893 = vsel %vm891, %v892, %v743
    %v894 = vshrl.u32 %v893, 5
    %v895 = vand.u32 %v893, 31
    %v896 = vsub.s32 0, %v895
    %v897 = vsel %vm891, %v896, %v895
    %vm898 = vcmp.lt.s32.totalorder %v744, 0
    %v899 = vsub.s32 0, %v744
    %v900 = vsel %vm898, %v899, %v744
    %v901 = vshrl.u32 %v900, 5
    %v902 = vand.u32 %v900, 31
    %v903 = vsub.s32 0, %v902
    %v904 = vsel %vm898, %v903, %v902
    %vm905 = vcmp.lt.s32.totalorder %v745, 0
    %v906 = vsub.s32 0, %v745
    %v907 = vsel %vm905, %v906, %v745
    %v908 = vshrl.u32 %v907, 5
    %v909 = vand.u32 %v907, 31
    %v910 = vsub.s32 0, %v909
    %v911 = vsel %vm905, %v910, %v909
    %vm912 = vcmp.lt.s32.totalorder %v746, 0
    %v913 = vsub.s32 0, %v746
    %v914 = vsel %vm912, %v913, %v746
    %v915 = vshrl.u32 %v914, 5
    %v916 = vand.u32 %v914, 31
    %v917 = vsub.s32 0, %v916
    %v918 = vsel %vm912, %v917, %v916
    %vm919 = vcmp.lt.s32.totalorder %v747, 0
    %v920 = vsub.s32 0, %v747
    %v921 = vsel %vm919, %v920, %v747
    %v922 = vshrl.u32 %v921, 5
    %v923 = vand.u32 %v921, 31
    %v924 = vsub.s32 0, %v923
    %v925 = vsel %vm919, %v924, %v923
    %vm926 = vcmp.lt.s32.totalorder %v748, 0
    %v927 = vsub.s32 0, %v748
    %v928 = vsel %vm926, %v927, %v748
    %v929 = vshrl.u32 %v928, 5
    %v930 = vand.u32 %v928, 31
    %v931 = vsub.s32 0, %v930
    %v932 = vsel %vm926, %v931, %v930
    %vm933 = vcmp.lt.s32.totalorder %v749, 0
    %v934 = vsub.s32 0, %v749
    %v935 = vsel %vm933, %v934, %v749
    %v936 = vshrl.u32 %v935, 5
    %v937 = vand.u32 %v935, 31
    %v938 = vsub.s32 0, %v937
    %v939 = vsel %vm933, %v938, %v937
    %vm940 = vcmp.lt.s32.totalorder %v750, 0
    %v941 = vsub.s32 0, %v750
    %v942 = vsel %vm940, %v941, %v750
    %v943 = vshrl.u32 %v942, 5
    %v944 = vand.u32 %v942, 31
    %v945 = vsub.s32 0, %v944
    %v946 = vsel %vm940, %v945, %v944
    %vm947 = vcmp.lt.s32.totalorder %v751, 0
    %v948 = vsub.s32 0, %v751
    %v949 = vsel %vm947, %v948, %v751
    %v950 = vshrl.u32 %v949, 5
    %v951 = vand.u32 %v949, 31
    %v952 = vsub.s32 0, %v951
    %v953 = vsel %vm947, %v952, %v951
    %vm954 = vcmp.lt.s32.totalorder %v752, 0
    %v955 = vsub.s32 0, %v752
    %v956 = vsel %vm954, %v955, %v752
    %v957 = vshrl.u32 %v956, 5
    %v958 = vand.u32 %v956, 31
    %v959 = vsub.s32 0, %v958
    %v960 = vsel %vm954, %v959, %v958
    %vm961 = vcmp.lt.s32.totalorder %v753, 0
    %v962 = vsub.s32 0, %v753
    %v963 = vsel %vm961, %v962, %v753
    %v964 = vshrl.u32 %v963, 5
    %v965 = vand.u32 %v963, 31
    %v966 = vsub.s32 0, %v965
    %v967 = vsel %vm961, %v966, %v965
    %vm968 = vcmp.lt.s32.totalorder %v754, 0
    %v969 = vsub.s32 0, %v754
    %v970 = vsel %vm968, %v969, %v754
    %v971 = vshrl.u32 %v970, 5
    %v972 = vand.u32 %v970, 31
    %v973 = vsub.s32 0, %v972
    %v974 = vsel %vm968, %v973, %v972
    %vm975 = vcmp.lt.s32.totalorder %v755, 0
    %v976 = vsub.s32 0, %v755
    %v977 = vsel %vm975, %v976, %v755
    %v978 = vshrl.u32 %v977, 5
    %v979 = vand.u32 %v977, 31
    %v980 = vsub.s32 0, %v979
    %v981 = vsel %vm975, %v980, %v979
    %vm982 = vcmp.lt.s32.totalorder %v756, 0
    %v983 = vsub.s32 0, %v756
    %v984 = vsel %vm982, %v983, %v756
    %v985 = vshrl.u32 %v984, 5
    %v986 = vand.u32 %v984, 31
    %v987 = vsub.s32 0, %v986
    %v988 = vsel %vm982, %v987, %v986
    %vm989 = vcmp.lt.s32.totalorder %v757, 0
    %v990 = vsub.s32 0, %v757
    %v991 = vsel %vm989, %v990, %v757
    %v992 = vshrl.u32 %v991, 5
    %v993 = vand.u32 %v991, 31
    %v994 = vsub.s32 0, %v993
    %v995 = vsel %vm989, %v994, %v993
    %vm996 = vcmp.lt.s32.totalorder %v758, 0
    %v997 = vsub.s32 0, %v758
    %v998 = vsel %vm996, %v997, %v758
    %v999 = vshrl.u32 %v998, 5
    %v1000 = vand.u32 %v998, 31
    %v1001 = vsub.s32 0, %v1000
    %v1002 = vsel %vm996, %v1001, %v1000
    %vm1003 = vcmp.lt.s32.totalorder %v759, 0
    %v1004 = vsub.s32 0, %v759
    %v1005 = vsel %vm1003, %v1004, %v759
    %v1006 = vshrl.u32 %v1005, 5
    %v1007 = vand.u32 %v1005, 31
    %v1008 = vsub.s32 0, %v1007
    %v1009 = vsel %vm1003, %v1008, %v1007
    %vm1010 = vcmp.lt.s32.totalorder %v760, 0
    %v1011 = vsub.s32 0, %v760
    %v1012 = vsel %vm1010, %v1011, %v760
    %v1013 = vshrl.u32 %v1012, 5
    %v1014 = vand.u32 %v1012, 31
    %v1015 = vsub.s32 0, %v1014
    %v1016 = vsel %vm1010, %v1015, %v1014
    %vm1017 = vcmp.lt.s32.totalorder %v761, 0
    %v1018 = vsub.s32 0, %v761
    %v1019 = vsel %vm1017, %v1018, %v761
    %v1020 = vshrl.u32 %v1019, 5
    %v1021 = vand.u32 %v1019, 31
    %v1022 = vsub.s32 0, %v1021
    %v1023 = vsel %vm1017, %v1022, %v1021
    %vm1024 = vcmp.lt.s32.totalorder %v762, 0
    %v1025 = vsub.s32 0, %v762
    %v1026 = vsel %vm1024, %v1025, %v762
    %v1027 = vshrl.u32 %v1026, 5
    %v1028 = vand.u32 %v1026, 31
    %v1029 = vsub.s32 0, %v1028
    %v1030 = vsel %vm1024, %v1029, %v1028
    %vm1031 = vcmp.lt.s32.totalorder %v763, 0
    %v1032 = vsub.s32 0, %v763
    %v1033 = vsel %vm1031, %v1032, %v763
    %v1034 = vshrl.u32 %v1033, 5
    %v1035 = vand.u32 %v1033, 31
    %v1036 = vsub.s32 0, %v1035
    %v1037 = vsel %vm1031, %v1036, %v1035
    %vm1038 = vcmp.lt.s32.totalorder %v764, 0
    %v1039 = vsub.s32 0, %v764
    %v1040 = vsel %vm1038, %v1039, %v764
    %v1041 = vshrl.u32 %v1040, 5
    %v1042 = vand.u32 %v1040, 31
    %v1043 = vsub.s32 0, %v1042
    %v1044 = vsel %vm1038, %v1043, %v1042
    %vm1045 = vcmp.lt.s32.totalorder %v765, 0
    %v1046 = vsub.s32 0, %v765
    %v1047 = vsel %vm1045, %v1046, %v765
    %v1048 = vshrl.u32 %v1047, 5
    %v1049 = vand.u32 %v1047, 31
    %v1050 = vsub.s32 0, %v1049
    %v1051 = vsel %vm1045, %v1050, %v1049
    %vm1052 = vcmp.lt.s32.totalorder %v766, 0
    %v1053 = vsub.s32 0, %v766
    %v1054 = vsel %vm1052, %v1053, %v766
    %v1055 = vshrl.u32 %v1054, 5
    %v1056 = vand.u32 %v1054, 31
    %v1057 = vsub.s32 0, %v1056
    %v1058 = vsel %vm1052, %v1057, %v1056
    %vm1059 = vcmp.lt.s32.totalorder %v767, 0
    %v1060 = vsub.s32 0, %v767
    %v1061 = vsel %vm1059, %v1060, %v767
    %v1062 = vshrl.u32 %v1061, 5
    %v1063 = vand.u32 %v1061, 31
    %v1064 = vsub.s32 0, %v1063
    %v1065 = vsel %vm1059, %v1064, %v1063
    %vm1066 = vcmp.lt.s32.totalorder %v768, 0
    %v1067 = vsub.s32 0, %v768
    %v1068 = vsel %vm1066, %v1067, %v768
    %v1069 = vshrl.u32 %v1068, 5
    %v1070 = vand.u32 %v1068, 31
    %v1071 = vsub.s32 0, %v1070
    %v1072 = vsel %vm1066, %v1071, %v1070
    %vm1073 = vcmp.lt.s32.totalorder %v769, 0
    %v1074 = vsub.s32 0, %v769
    %v1075 = vsel %vm1073, %v1074, %v769
    %v1076 = vshrl.u32 %v1075, 5
    %v1077 = vand.u32 %v1075, 31
    %v1078 = vsub.s32 0, %v1077
    %v1079 = vsel %vm1073, %v1078, %v1077
    %vm1080 = vcmp.lt.s32.totalorder %v770, 0
    %v1081 = vsub.s32 0, %v770
    %v1082 = vsel %vm1080, %v1081, %v770
    %v1083 = vshrl.u32 %v1082, 5
    %v1084 = vand.u32 %v1082, 31
    %v1085 = vsub.s32 0, %v1084
    %v1086 = vsel %vm1080, %v1085, %v1084
    %vm1087 = vcmp.lt.s32.totalorder %v771, 0
    %v1088 = vsub.s32 0, %v771
    %v1089 = vsel %vm1087, %v1088, %v771
    %v1090 = vshrl.u32 %v1089, 5
    %v1091 = vand.u32 %v1089, 31
    %v1092 = vsub.s32 0, %v1091
    %v1093 = vsel %vm1087, %v1092, %v1091
    %vm1094 = vcmp.lt.s32.totalorder %v772, 0
    %v1095 = vsub.s32 0, %v772
    %v1096 = vsel %vm1094, %v1095, %v772
    %v1097 = vshrl.u32 %v1096, 5
    %v1098 = vand.u32 %v1096, 31
    %v1099 = vsub.s32 0, %v1098
    %v1100 = vsel %vm1094, %v1099, %v1098
    %vm1101 = vcmp.lt.s32.totalorder %v773, 0
    %v1102 = vsub.s32 0, %v773
    %v1103 = vsel %vm1101, %v1102, %v773
    %v1104 = vshrl.u32 %v1103, 5
    %v1105 = vand.u32 %v1103, 31
    %v1106 = vsub.s32 0, %v1105
    %v1107 = vsel %vm1101, %v1106, %v1105
    %vm1108 = vcmp.lt.s32.totalorder %v774, 0
    %v1109 = vsub.s32 0, %v774
    %v1110 = vsel %vm1108, %v1109, %v774
    %v1111 = vshrl.u32 %v1110, 5
    %v1112 = vand.u32 %v1110, 31
    %v1113 = vsub.s32 0, %v1112
    %v1114 = vsel %vm1108, %v1113, %v1112
    %vm1115 = vcmp.lt.s32.totalorder %v775, 0
    %v1116 = vsub.s32 0, %v775
    %v1117 = vsel %vm1115, %v1116, %v775
    %v1118 = vshrl.u32 %v1117, 5
    %v1119 = vand.u32 %v1117, 31
    %v1120 = vsub.s32 0, %v1119
    %v1121 = vsel %vm1115, %v1120, %v1119
    %vm1122 = vcmp.lt.s32.totalorder %v776, 0
    %v1123 = vsub.s32 0, %v776
    %v1124 = vsel %vm1122, %v1123, %v776
    %v1125 = vshrl.u32 %v1124, 5
    %v1126 = vand.u32 %v1124, 31
    %v1127 = vsub.s32 0, %v1126
    %v1128 = vsel %vm1122, %v1127, %v1126
    %vm1129 = vcmp.lt.s32.totalorder %v777, 0
    %v1130 = vsub.s32 0, %v777
    %v1131 = vsel %vm1129, %v1130, %v777
    %v1132 = vshrl.u32 %v1131, 5
    %v1133 = vand.u32 %v1131, 31
    %v1134 = vsub.s32 0, %v1133
    %v1135 = vsel %vm1129, %v1134, %v1133
    %vm1136 = vcmp.lt.s32.totalorder %v778, 0
    %v1137 = vsub.s32 0, %v778
    %v1138 = vsel %vm1136, %v1137, %v778
    %v1139 = vshrl.u32 %v1138, 5
    %v1140 = vand.u32 %v1138, 31
    %v1141 = vsub.s32 0, %v1140
    %v1142 = vsel %vm1136, %v1141, %v1140
    %vm1143 = vcmp.lt.s32.totalorder %v779, 0
    %v1144 = vsub.s32 0, %v779
    %v1145 = vsel %vm1143, %v1144, %v779
    %v1146 = vshrl.u32 %v1145, 5
    %v1147 = vand.u32 %v1145, 31
    %v1148 = vsub.s32 0, %v1147
    %v1149 = vsel %vm1143, %v1148, %v1147
    %vm1150 = vcmp.lt.s32.totalorder %v780, 0
    %v1151 = vsub.s32 0, %v780
    %v1152 = vsel %vm1150, %v1151, %v780
    %v1153 = vshrl.u32 %v1152, 5
    %v1154 = vand.u32 %v1152, 31
    %v1155 = vsub.s32 0, %v1154
    %v1156 = vsel %vm1150, %v1155, %v1154
    %vm1157 = vcmp.lt.s32.totalorder %v781, 0
    %v1158 = vsub.s32 0, %v781
    %v1159 = vsel %vm1157, %v1158, %v781
    %v1160 = vshrl.u32 %v1159, 5
    %v1161 = vand.u32 %v1159, 31
    %v1162 = vsub.s32 0, %v1161
    %v1163 = vsel %vm1157, %v1162, %v1161
    %vm1164 = vcmp.lt.s32.totalorder %v782, 0
    %v1165 = vsub.s32 0, %v782
    %v1166 = vsel %vm1164, %v1165, %v782
    %v1167 = vshrl.u32 %v1166, 5
    %v1168 = vand.u32 %v1166, 31
    %v1169 = vsub.s32 0, %v1168
    %v1170 = vsel %vm1164, %v1169, %v1168
    %vm1171 = vcmp.lt.s32.totalorder %v783, 0
    %v1172 = vsub.s32 0, %v783
    %v1173 = vsel %vm1171, %v1172, %v783
    %v1174 = vshrl.u32 %v1173, 5
    %v1175 = vand.u32 %v1173, 31
    %v1176 = vsub.s32 0, %v1175
    %v1177 = vsel %vm1171, %v1176, %v1175
    %vm1178 = vcmp.lt.s32.totalorder %v784, 0
    %v1179 = vsub.s32 0, %v784
    %v1180 = vsel %vm1178, %v1179, %v784
    %v1181 = vshrl.u32 %v1180, 5
    %v1182 = vand.u32 %v1180, 31
    %v1183 = vsub.s32 0, %v1182
    %v1184 = vsel %vm1178, %v1183, %v1182
    %vm1185 = vcmp.lt.s32.totalorder %v785, 0
    %v1186 = vsub.s32 0, %v785
    %v1187 = vsel %vm1185, %v1186, %v785
    %v1188 = vshrl.u32 %v1187, 5
    %v1189 = vand.u32 %v1187, 31
    %v1190 = vsub.s32 0, %v1189
    %v1191 = vsel %vm1185, %v1190, %v1189
    %vm1192 = vcmp.lt.s32.totalorder %v786, 0
    %v1193 = vsub.s32 0, %v786
    %v1194 = vsel %vm1192, %v1193, %v786
    %v1195 = vshrl.u32 %v1194, 5
    %v1196 = vand.u32 %v1194, 31
    %v1197 = vsub.s32 0, %v1196
    %v1198 = vsel %vm1192, %v1197, %v1196
    %vm1199 = vcmp.lt.s32.totalorder %v787, 0
    %v1200 = vsub.s32 0, %v787
    %v1201 = vsel %vm1199, %v1200, %v787
    %v1202 = vshrl.u32 %v1201, 5
    %v1203 = vand.u32 %v1201, 31
    %v1204 = vsub.s32 0, %v1203
    %v1205 = vsel %vm1199, %v1204, %v1203
    %vm1206 = vcmp.lt.s32.totalorder %v788, 0
    %v1207 = vsub.s32 0, %v788
    %v1208 = vsel %vm1206, %v1207, %v788
    %v1209 = vshrl.u32 %v1208, 5
    %v1210 = vand.u32 %v1208, 31
    %v1211 = vsub.s32 0, %v1210
    %v1212 = vsel %vm1206, %v1211, %v1210
    %vm1213 = vcmp.lt.s32.totalorder %v789, 0
    %v1214 = vsub.s32 0, %v789
    %v1215 = vsel %vm1213, %v1214, %v789
    %v1216 = vshrl.u32 %v1215, 5
    %v1217 = vand.u32 %v1215, 31
    %v1218 = vsub.s32 0, %v1217
    %v1219 = vsel %vm1213, %v1218, %v1217
    %vm1220 = vcmp.lt.s32.totalorder %v790, 0
    %v1221 = vsub.s32 0, %v790
    %v1222 = vsel %vm1220, %v1221, %v790
    %v1223 = vshrl.u32 %v1222, 5
    %v1224 = vand.u32 %v1222, 31
    %v1225 = vsub.s32 0, %v1224
    %v1226 = vsel %vm1220, %v1225, %v1224
    %vm1227 = vcmp.lt.s32.totalorder %v791, 0
    %v1228 = vsub.s32 0, %v791
    %v1229 = vsel %vm1227, %v1228, %v791
    %v1230 = vshrl.u32 %v1229, 5
    %v1231 = vand.u32 %v1229, 31
    %v1232 = vsub.s32 0, %v1231
    %v1233 = vsel %vm1227, %v1232, %v1231
    %vm1234 = vcmp.lt.s32.totalorder %v792, 0
    %v1235 = vsub.s32 0, %v792
    %v1236 = vsel %vm1234, %v1235, %v792
    %v1237 = vshrl.u32 %v1236, 5
    %v1238 = vand.u32 %v1236, 31
    %v1239 = vsub.s32 0, %v1238
    %v1240 = vsel %vm1234, %v1239, %v1238
    %vm1241 = vcmp.ne.s32.totalorder %v799, 0
    %vm1242 = vcmp.ne.s32.totalorder %v806, 0
    %vm1243 = vcmp.ne.s32.totalorder %v813, 0
    %vm1244 = vcmp.ne.s32.totalorder %v820, 0
    %vm1245 = vcmp.ne.s32.totalorder %v827, 0
    %vm1246 = vcmp.ne.s32.totalorder %v834, 0
    %vm1247 = vcmp.ne.s32.totalorder %v841, 0
    %vm1248 = vcmp.ne.s32.totalorder %v848, 0
    %vm1249 = vcmp.ne.s32.totalorder %v855, 0
    %vm1250 = vcmp.ne.s32.totalorder %v862, 0
    %vm1251 = vcmp.ne.s32.totalorder %v869, 0
    %vm1252 = vcmp.ne.s32.totalorder %v876, 0
    %vm1253 = vcmp.ne.s32.totalorder %v883, 0
    %vm1254 = vcmp.ne.s32.totalorder %v890, 0
    %vm1255 = vcmp.ne.s32.totalorder %v897, 0
    %vm1256 = vcmp.ne.s32.totalorder %v904, 0
    %vm1257 = vcmp.ne.s32.totalorder %v911, 0
    %vm1258 = vcmp.ne.s32.totalorder %v918, 0
    %vm1259 = vcmp.ne.s32.totalorder %v925, 0
    %vm1260 = vcmp.ne.s32.totalorder %v932, 0
    %vm1261 = vcmp.ne.s32.totalorder %v939, 0
    %vm1262 = vcmp.ne.s32.totalorder %v946, 0
    %vm1263 = vcmp.ne.s32.totalorder %v953, 0
    %vm1264 = vcmp.ne.s32.totalorder %v960, 0
    %vm1265 = vcmp.ne.s32.totalorder %v967, 0
    %vm1266 = vcmp.ne.s32.totalorder %v974, 0
    %vm1267 = vcmp.ne.s32.totalorder %v981, 0
    %vm1268 = vcmp.ne.s32.totalorder %v988, 0
    %vm1269 = vcmp.ne.s32.totalorder %v995, 0
    %vm1270 = vcmp.ne.s32.totalorder %v1002, 0
    %vm1271 = vcmp.ne.s32.totalorder %v1009, 0
    %vm1272 = vcmp.ne.s32.totalorder %v1016, 0
    %vm1273 = vcmp.ne.s32.totalorder %v1023, 0
    %vm1274 = vcmp.ne.s32.totalorder %v1030, 0
    %vm1275 = vcmp.ne.s32.totalorder %v1037, 0
    %vm1276 = vcmp.ne.s32.totalorder %v1044, 0
    %vm1277 = vcmp.ne.s32.totalorder %v1051, 0
    %vm1278 = vcmp.ne.s32.totalorder %v1058, 0
    %vm1279 = vcmp.ne.s32.totalorder %v1065, 0
    %vm1280 = vcmp.ne.s32.totalorder %v1072, 0
    %vm1281 = vcmp.ne.s32.totalorder %v1079, 0
    %vm1282 = vcmp.ne.s32.totalorder %v1086, 0
    %vm1283 = vcmp.ne.s32.totalorder %v1093, 0
    %vm1284 = vcmp.ne.s32.totalorder %v1100, 0
    %vm1285 = vcmp.ne.s32.totalorder %v1107, 0
    %vm1286 = vcmp.ne.s32.totalorder %v1114, 0
    %vm1287 = vcmp.ne.s32.totalorder %v1121, 0
    %vm1288 = vcmp.ne.s32.totalorder %v1128, 0
    %vm1289 = vcmp.ne.s32.totalorder %v1135, 0
    %vm1290 = vcmp.ne.s32.totalorder %v1142, 0
    %vm1291 = vcmp.ne.s32.totalorder %v1149, 0
    %vm1292 = vcmp.ne.s32.totalorder %v1156, 0
    %vm1293 = vcmp.ne.s32.totalorder %v1163, 0
    %vm1294 = vcmp.ne.s32.totalorder %v1170, 0
    %vm1295 = vcmp.ne.s32.totalorder %v1177, 0
    %vm1296 = vcmp.ne.s32.totalorder %v1184, 0
    %vm1297 = vcmp.ne.s32.totalorder %v1191, 0
    %vm1298 = vcmp.ne.s32.totalorder %v1198, 0
    %vm1299 = vcmp.ne.s32.totalorder %v1205, 0
    %vm1300 = vcmp.ne.s32.totalorder %v1212, 0
    %vm1301 = vcmp.ne.s32.totalorder %v1219, 0
    %vm1302 = vcmp.ne.s32.totalorder %v1226, 0
    %vm1303 = vcmp.ne.s32.totalorder %v1233, 0
    %vm1304 = vcmp.ne.s32.totalorder %v1240, 0
    %vm1305 = vcmp.lt.s32.totalorder %v799, 0
    %vm1306 = vcmp.lt.s32.totalorder %v806, 0
    %vm1307 = vcmp.lt.s32.totalorder %v813, 0
    %vm1308 = vcmp.lt.s32.totalorder %v820, 0
    %vm1309 = vcmp.lt.s32.totalorder %v827, 0
    %vm1310 = vcmp.lt.s32.totalorder %v834, 0
    %vm1311 = vcmp.lt.s32.totalorder %v841, 0
    %vm1312 = vcmp.lt.s32.totalorder %v848, 0
    %vm1313 = vcmp.lt.s32.totalorder %v855, 0
    %vm1314 = vcmp.lt.s32.totalorder %v862, 0
    %vm1315 = vcmp.lt.s32.totalorder %v869, 0
    %vm1316 = vcmp.lt.s32.totalorder %v876, 0
    %vm1317 = vcmp.lt.s32.totalorder %v883, 0
    %vm1318 = vcmp.lt.s32.totalorder %v890, 0
    %vm1319 = vcmp.lt.s32.totalorder %v897, 0
    %vm1320 = vcmp.lt.s32.totalorder %v904, 0
    %vm1321 = vcmp.lt.s32.totalorder %v911, 0
    %vm1322 = vcmp.lt.s32.totalorder %v918, 0
    %vm1323 = vcmp.lt.s32.totalorder %v925, 0
    %vm1324 = vcmp.lt.s32.totalorder %v932, 0
    %vm1325 = vcmp.lt.s32.totalorder %v939, 0
    %vm1326 = vcmp.lt.s32.totalorder %v946, 0
    %vm1327 = vcmp.lt.s32.totalorder %v953, 0
    %vm1328 = vcmp.lt.s32.totalorder %v960, 0
    %vm1329 = vcmp.lt.s32.totalorder %v967, 0
    %vm1330 = vcmp.lt.s32.totalorder %v974, 0
    %vm1331 = vcmp.lt.s32.totalorder %v981, 0
    %vm1332 = vcmp.lt.s32.totalorder %v988, 0
    %vm1333 = vcmp.lt.s32.totalorder %v995, 0
    %vm1334 = vcmp.lt.s32.totalorder %v1002, 0
    %vm1335 = vcmp.lt.s32.totalorder %v1009, 0
    %vm1336 = vcmp.lt.s32.totalorder %v1016, 0
    %vm1337 = vcmp.lt.s32.totalorder %v1023, 0
    %vm1338 = vcmp.lt.s32.totalorder %v1030, 0
    %vm1339 = vcmp.lt.s32.totalorder %v1037, 0
    %vm1340 = vcmp.lt.s32.totalorder %v1044, 0
    %vm1341 = vcmp.lt.s32.totalorder %v1051, 0
    %vm1342 = vcmp.lt.s32.totalorder %v1058, 0
    %vm1343 = vcmp.lt.s32.totalorder %v1065, 0
    %vm1344 = vcmp.lt.s32.totalorder %v1072, 0
    %vm1345 = vcmp.lt.s32.totalorder %v1079, 0
    %vm1346 = vcmp.lt.s32.totalorder %v1086, 0
    %vm1347 = vcmp.lt.s32.totalorder %v1093, 0
    %vm1348 = vcmp.lt.s32.totalorder %v1100, 0
    %vm1349 = vcmp.lt.s32.totalorder %v1107, 0
    %vm1350 = vcmp.lt.s32.totalorder %v1114, 0
    %vm1351 = vcmp.lt.s32.totalorder %v1121, 0
    %vm1352 = vcmp.lt.s32.totalorder %v1128, 0
    %vm1353 = vcmp.lt.s32.totalorder %v1135, 0
    %vm1354 = vcmp.lt.s32.totalorder %v1142, 0
    %vm1355 = vcmp.lt.s32.totalorder %v1149, 0
    %vm1356 = vcmp.lt.s32.totalorder %v1156, 0
    %vm1357 = vcmp.lt.s32.totalorder %v1163, 0
    %vm1358 = vcmp.lt.s32.totalorder %v1170, 0
    %vm1359 = vcmp.lt.s32.totalorder %v1177, 0
    %vm1360 = vcmp.lt.s32.totalorder %v1184, 0
    %vm1361 = vcmp.lt.s32.totalorder %v1191, 0
    %vm1362 = vcmp.lt.s32.totalorder %v1198, 0
    %vm1363 = vcmp.lt.s32.totalorder %v1205, 0
    %vm1364 = vcmp.lt.s32.totalorder %v1212, 0
    %vm1365 = vcmp.lt.s32.totalorder %v1219, 0
    %vm1366 = vcmp.lt.s32.totalorder %v1226, 0
    %vm1367 = vcmp.lt.s32.totalorder %v1233, 0
    %vm1368 = vcmp.lt.s32.totalorder %v1240, 0
    %vm1369 = vmand %vm1305, %vm1241
    %vm1370 = vmand %vm1306, %vm1242
    %vm1371 = vmand %vm1307, %vm1243
    %vm1372 = vmand %vm1308, %vm1244
    %vm1373 = vmand %vm1309, %vm1245
    %vm1374 = vmand %vm1310, %vm1246
    %vm1375 = vmand %vm1311, %vm1247
    %vm1376 = vmand %vm1312, %vm1248
    %vm1377 = vmand %vm1313, %vm1249
    %vm1378 = vmand %vm1314, %vm1250
    %vm1379 = vmand %vm1315, %vm1251
    %vm1380 = vmand %vm1316, %vm1252
    %vm1381 = vmand %vm1317, %vm1253
    %vm1382 = vmand %vm1318, %vm1254
    %vm1383 = vmand %vm1319, %vm1255
    %vm1384 = vmand %vm1320, %vm1256
    %vm1385 = vmand %vm1321, %vm1257
    %vm1386 = vmand %vm1322, %vm1258
    %vm1387 = vmand %vm1323, %vm1259
    %vm1388 = vmand %vm1324, %vm1260
    %vm1389 = vmand %vm1325, %vm1261
    %vm1390 = vmand %vm1326, %vm1262
    %vm1391 = vmand %vm1327, %vm1263
    %vm1392 = vmand %vm1328, %vm1264
    %vm1393 = vmand %vm1329, %vm1265
    %vm1394 = vmand %vm1330, %vm1266
    %vm1395 = vmand %vm1331, %vm1267
    %vm1396 = vmand %vm1332, %vm1268
    %vm1397 = vmand %vm1333, %vm1269
    %vm1398 = vmand %vm1334, %vm1270
    %vm1399 = vmand %vm1335, %vm1271
    %vm1400 = vmand %vm1336, %vm1272
    %vm1401 = vmand %vm1337, %vm1273
    %vm1402 = vmand %vm1338, %vm1274
    %vm1403 = vmand %vm1339, %vm1275
    %vm1404 = vmand %vm1340, %vm1276
    %vm1405 = vmand %vm1341, %vm1277
    %vm1406 = vmand %vm1342, %vm1278
    %vm1407 = vmand %vm1343, %vm1279
    %vm1408 = vmand %vm1344, %vm1280
    %vm1409 = vmand %vm1345, %vm1281
    %vm1410 = vmand %vm1346, %vm1282
    %vm1411 = vmand %vm1347, %vm1283
    %vm1412 = vmand %vm1348, %vm1284
    %vm1413 = vmand %vm1349, %vm1285
    %vm1414 = vmand %vm1350, %vm1286
    %vm1415 = vmand %vm1351, %vm1287
    %vm1416 = vmand %vm1352, %vm1288
    %vm1417 = vmand %vm1353, %vm1289
    %vm1418 = vmand %vm1354, %vm1290
    %vm1419 = vmand %vm1355, %vm1291
    %vm1420 = vmand %vm1356, %vm1292
    %vm1421 = vmand %vm1357, %vm1293
    %vm1422 = vmand %vm1358, %vm1294
    %vm1423 = vmand %vm1359, %vm1295
    %vm1424 = vmand %vm1360, %vm1296
    %vm1425 = vmand %vm1361, %vm1297
    %vm1426 = vmand %vm1362, %vm1298
    %vm1427 = vmand %vm1363, %vm1299
    %vm1428 = vmand %vm1364, %vm1300
    %vm1429 = vmand %vm1365, %vm1301
    %vm1430 = vmand %vm1366, %vm1302
    %vm1431 = vmand %vm1367, %vm1303
    %vm1432 = vmand %vm1368, %vm1304
    %v1433 = vadd.s32 %v799, 32
    %v1434 = vadd.s32 %v806, 32
    %v1435 = vadd.s32 %v813, 32
    %v1436 = vadd.s32 %v820, 32
    %v1437 = vadd.s32 %v827, 32
    %v1438 = vadd.s32 %v834, 32
    %v1439 = vadd.s32 %v841, 32
    %v1440 = vadd.s32 %v848, 32
    %v1441 = vadd.s32 %v855, 32
    %v1442 = vadd.s32 %v862, 32
    %v1443 = vadd.s32 %v869, 32
    %v1444 = vadd.s32 %v876, 32
    %v1445 = vadd.s32 %v883, 32
    %v1446 = vadd.s32 %v890, 32
    %v1447 = vadd.s32 %v897, 32
    %v1448 = vadd.s32 %v904, 32
    %v1449 = vadd.s32 %v911, 32
    %v1450 = vadd.s32 %v918, 32
    %v1451 = vadd.s32 %v925, 32
    %v1452 = vadd.s32 %v932, 32
    %v1453 = vadd.s32 %v939, 32
    %v1454 = vadd.s32 %v946, 32
    %v1455 = vadd.s32 %v953, 32
    %v1456 = vadd.s32 %v960, 32
    %v1457 = vadd.s32 %v967, 32
    %v1458 = vadd.s32 %v974, 32
    %v1459 = vadd.s32 %v981, 32
    %v1460 = vadd.s32 %v988, 32
    %v1461 = vadd.s32 %v995, 32
    %v1462 = vadd.s32 %v1002, 32
    %v1463 = vadd.s32 %v1009, 32
    %v1464 = vadd.s32 %v1016, 32
    %v1465 = vadd.s32 %v1023, 32
    %v1466 = vadd.s32 %v1030, 32
    %v1467 = vadd.s32 %v1037, 32
    %v1468 = vadd.s32 %v1044, 32
    %v1469 = vadd.s32 %v1051, 32
    %v1470 = vadd.s32 %v1058, 32
    %v1471 = vadd.s32 %v1065, 32
    %v1472 = vadd.s32 %v1072, 32
    %v1473 = vadd.s32 %v1079, 32
    %v1474 = vadd.s32 %v1086, 32
    %v1475 = vadd.s32 %v1093, 32
    %v1476 = vadd.s32 %v1100, 32
    %v1477 = vadd.s32 %v1107, 32
    %v1478 = vadd.s32 %v1114, 32
    %v1479 = vadd.s32 %v1121, 32
    %v1480 = vadd.s32 %v1128, 32
    %v1481 = vadd.s32 %v1135, 32
    %v1482 = vadd.s32 %v1142, 32
    %v1483 = vadd.s32 %v1149, 32
    %v1484 = vadd.s32 %v1156, 32
    %v1485 = vadd.s32 %v1163, 32
    %v1486 = vadd.s32 %v1170, 32
    %v1487 = vadd.s32 %v1177, 32
    %v1488 = vadd.s32 %v1184, 32
    %v1489 = vadd.s32 %v1191, 32
    %v1490 = vadd.s32 %v1198, 32
    %v1491 = vadd.s32 %v1205, 32
    %v1492 = vadd.s32 %v1212, 32
    %v1493 = vadd.s32 %v1219, 32
    %v1494 = vadd.s32 %v1226, 32
    %v1495 = vadd.s32 %v1233, 32
    %v1496 = vadd.s32 %v1240, 32
    %v1497 = vsel %vm1369, %v1433, %v799
    %v1498 = vsel %vm1370, %v1434, %v806
    %v1499 = vsel %vm1371, %v1435, %v813
    %v1500 = vsel %vm1372, %v1436, %v820
    %v1501 = vsel %vm1373, %v1437, %v827
    %v1502 = vsel %vm1374, %v1438, %v834
    %v1503 = vsel %vm1375, %v1439, %v841
    %v1504 = vsel %vm1376, %v1440, %v848
    %v1505 = vsel %vm1377, %v1441, %v855
    %v1506 = vsel %vm1378, %v1442, %v862
    %v1507 = vsel %vm1379, %v1443, %v869
    %v1508 = vsel %vm1380, %v1444, %v876
    %v1509 = vsel %vm1381, %v1445, %v883
    %v1510 = vsel %vm1382, %v1446, %v890
    %v1511 = vsel %vm1383, %v1447, %v897
    %v1512 = vsel %vm1384, %v1448, %v904
    %v1513 = vsel %vm1385, %v1449, %v911
    %v1514 = vsel %vm1386, %v1450, %v918
    %v1515 = vsel %vm1387, %v1451, %v925
    %v1516 = vsel %vm1388, %v1452, %v932
    %v1517 = vsel %vm1389, %v1453, %v939
    %v1518 = vsel %vm1390, %v1454, %v946
    %v1519 = vsel %vm1391, %v1455, %v953
    %v1520 = vsel %vm1392, %v1456, %v960
    %v1521 = vsel %vm1393, %v1457, %v967
    %v1522 = vsel %vm1394, %v1458, %v974
    %v1523 = vsel %vm1395, %v1459, %v981
    %v1524 = vsel %vm1396, %v1460, %v988
    %v1525 = vsel %vm1397, %v1461, %v995
    %v1526 = vsel %vm1398, %v1462, %v1002
    %v1527 = vsel %vm1399, %v1463, %v1009
    %v1528 = vsel %vm1400, %v1464, %v1016
    %v1529 = vsel %vm1401, %v1465, %v1023
    %v1530 = vsel %vm1402, %v1466, %v1030
    %v1531 = vsel %vm1403, %v1467, %v1037
    %v1532 = vsel %vm1404, %v1468, %v1044
    %v1533 = vsel %vm1405, %v1469, %v1051
    %v1534 = vsel %vm1406, %v1470, %v1058
    %v1535 = vsel %vm1407, %v1471, %v1065
    %v1536 = vsel %vm1408, %v1472, %v1072
    %v1537 = vsel %vm1409, %v1473, %v1079
    %v1538 = vsel %vm1410, %v1474, %v1086
    %v1539 = vsel %vm1411, %v1475, %v1093
    %v1540 = vsel %vm1412, %v1476, %v1100
    %v1541 = vsel %vm1413, %v1477, %v1107
    %v1542 = vsel %vm1414, %v1478, %v1114
    %v1543 = vsel %vm1415, %v1479, %v1121
    %v1544 = vsel %vm1416, %v1480, %v1128
    %v1545 = vsel %vm1417, %v1481, %v1135
    %v1546 = vsel %vm1418, %v1482, %v1142
    %v1547 = vsel %vm1419, %v1483, %v1149
    %v1548 = vsel %vm1420, %v1484, %v1156
    %v1549 = vsel %vm1421, %v1485, %v1163
    %v1550 = vsel %vm1422, %v1486, %v1170
    %v1551 = vsel %vm1423, %v1487, %v1177
    %v1552 = vsel %vm1424, %v1488, %v1184
    %v1553 = vsel %vm1425, %v1489, %v1191
    %v1554 = vsel %vm1426, %v1490, %v1198
    %v1555 = vsel %vm1427, %v1491, %v1205
    %v1556 = vsel %vm1428, %v1492, %v1212
    %v1557 = vsel %vm1429, %v1493, %v1219
    %v1558 = vsel %vm1430, %v1494, %v1226
    %v1559 = vsel %vm1431, %v1495, %v1233
    %v1560 = vsel %vm1432, %v1496, %v1240
    %vm1561 = vcmp.eq.s32.totalorder %v1497, 0
    %vm1562 = vcmp.eq.s32.totalorder %v1498, 0
    %vm1563 = vcmp.eq.s32.totalorder %v1499, 0
    %vm1564 = vcmp.eq.s32.totalorder %v1500, 0
    %vm1565 = vcmp.eq.s32.totalorder %v1501, 0
    %vm1566 = vcmp.eq.s32.totalorder %v1502, 0
    %vm1567 = vcmp.eq.s32.totalorder %v1503, 0
    %vm1568 = vcmp.eq.s32.totalorder %v1504, 0
    %vm1569 = vcmp.eq.s32.totalorder %v1505, 0
    %vm1570 = vcmp.eq.s32.totalorder %v1506, 0
    %vm1571 = vcmp.eq.s32.totalorder %v1507, 0
    %vm1572 = vcmp.eq.s32.totalorder %v1508, 0
    %vm1573 = vcmp.eq.s32.totalorder %v1509, 0
    %vm1574 = vcmp.eq.s32.totalorder %v1510, 0
    %vm1575 = vcmp.eq.s32.totalorder %v1511, 0
    %vm1576 = vcmp.eq.s32.totalorder %v1512, 0
    %vm1577 = vcmp.eq.s32.totalorder %v1513, 0
    %vm1578 = vcmp.eq.s32.totalorder %v1514, 0
    %vm1579 = vcmp.eq.s32.totalorder %v1515, 0
    %vm1580 = vcmp.eq.s32.totalorder %v1516, 0
    %vm1581 = vcmp.eq.s32.totalorder %v1517, 0
    %vm1582 = vcmp.eq.s32.totalorder %v1518, 0
    %vm1583 = vcmp.eq.s32.totalorder %v1519, 0
    %vm1584 = vcmp.eq.s32.totalorder %v1520, 0
    %vm1585 = vcmp.eq.s32.totalorder %v1521, 0
    %vm1586 = vcmp.eq.s32.totalorder %v1522, 0
    %vm1587 = vcmp.eq.s32.totalorder %v1523, 0
    %vm1588 = vcmp.eq.s32.totalorder %v1524, 0
    %vm1589 = vcmp.eq.s32.totalorder %v1525, 0
    %vm1590 = vcmp.eq.s32.totalorder %v1526, 0
    %vm1591 = vcmp.eq.s32.totalorder %v1527, 0
    %vm1592 = vcmp.eq.s32.totalorder %v1528, 0
    %vm1593 = vcmp.eq.s32.totalorder %v1529, 0
    %vm1594 = vcmp.eq.s32.totalorder %v1530, 0
    %vm1595 = vcmp.eq.s32.totalorder %v1531, 0
    %vm1596 = vcmp.eq.s32.totalorder %v1532, 0
    %vm1597 = vcmp.eq.s32.totalorder %v1533, 0
    %vm1598 = vcmp.eq.s32.totalorder %v1534, 0
    %vm1599 = vcmp.eq.s32.totalorder %v1535, 0
    %vm1600 = vcmp.eq.s32.totalorder %v1536, 0
    %vm1601 = vcmp.eq.s32.totalorder %v1537, 0
    %vm1602 = vcmp.eq.s32.totalorder %v1538, 0
    %vm1603 = vcmp.eq.s32.totalorder %v1539, 0
    %vm1604 = vcmp.eq.s32.totalorder %v1540, 0
    %vm1605 = vcmp.eq.s32.totalorder %v1541, 0
    %vm1606 = vcmp.eq.s32.totalorder %v1542, 0
    %vm1607 = vcmp.eq.s32.totalorder %v1543, 0
    %vm1608 = vcmp.eq.s32.totalorder %v1544, 0
    %vm1609 = vcmp.eq.s32.totalorder %v1545, 0
    %vm1610 = vcmp.eq.s32.totalorder %v1546, 0
    %vm1611 = vcmp.eq.s32.totalorder %v1547, 0
    %vm1612 = vcmp.eq.s32.totalorder %v1548, 0
    %vm1613 = vcmp.eq.s32.totalorder %v1549, 0
    %vm1614 = vcmp.eq.s32.totalorder %v1550, 0
    %vm1615 = vcmp.eq.s32.totalorder %v1551, 0
    %vm1616 = vcmp.eq.s32.totalorder %v1552, 0
    %vm1617 = vcmp.eq.s32.totalorder %v1553, 0
    %vm1618 = vcmp.eq.s32.totalorder %v1554, 0
    %vm1619 = vcmp.eq.s32.totalorder %v1555, 0
    %vm1620 = vcmp.eq.s32.totalorder %v1556, 0
    %vm1621 = vcmp.eq.s32.totalorder %v1557, 0
    %vm1622 = vcmp.eq.s32.totalorder %v1558, 0
    %vm1623 = vcmp.eq.s32.totalorder %v1559, 0
    %vm1624 = vcmp.eq.s32.totalorder %v1560, 0
    %vm1625 = vcmp.eq.s32.totalorder %v1497, 31
    %vm1626 = vcmp.eq.s32.totalorder %v1498, 31
    %vm1627 = vcmp.eq.s32.totalorder %v1499, 31
    %vm1628 = vcmp.eq.s32.totalorder %v1500, 31
    %vm1629 = vcmp.eq.s32.totalorder %v1501, 31
    %vm1630 = vcmp.eq.s32.totalorder %v1502, 31
    %vm1631 = vcmp.eq.s32.totalorder %v1503, 31
    %vm1632 = vcmp.eq.s32.totalorder %v1504, 31
    %vm1633 = vcmp.eq.s32.totalorder %v1505, 31
    %vm1634 = vcmp.eq.s32.totalorder %v1506, 31
    %vm1635 = vcmp.eq.s32.totalorder %v1507, 31
    %vm1636 = vcmp.eq.s32.totalorder %v1508, 31
    %vm1637 = vcmp.eq.s32.totalorder %v1509, 31
    %vm1638 = vcmp.eq.s32.totalorder %v1510, 31
    %vm1639 = vcmp.eq.s32.totalorder %v1511, 31
    %vm1640 = vcmp.eq.s32.totalorder %v1512, 31
    %vm1641 = vcmp.eq.s32.totalorder %v1513, 31
    %vm1642 = vcmp.eq.s32.totalorder %v1514, 31
    %vm1643 = vcmp.eq.s32.totalorder %v1515, 31
    %vm1644 = vcmp.eq.s32.totalorder %v1516, 31
    %vm1645 = vcmp.eq.s32.totalorder %v1517, 31
    %vm1646 = vcmp.eq.s32.totalorder %v1518, 31
    %vm1647 = vcmp.eq.s32.totalorder %v1519, 31
    %vm1648 = vcmp.eq.s32.totalorder %v1520, 31
    %vm1649 = vcmp.eq.s32.totalorder %v1521, 31
    %vm1650 = vcmp.eq.s32.totalorder %v1522, 31
    %vm1651 = vcmp.eq.s32.totalorder %v1523, 31
    %vm1652 = vcmp.eq.s32.totalorder %v1524, 31
    %vm1653 = vcmp.eq.s32.totalorder %v1525, 31
    %vm1654 = vcmp.eq.s32.totalorder %v1526, 31
    %vm1655 = vcmp.eq.s32.totalorder %v1527, 31
    %vm1656 = vcmp.eq.s32.totalorder %v1528, 31
    %vm1657 = vcmp.eq.s32.totalorder %v1529, 31
    %vm1658 = vcmp.eq.s32.totalorder %v1530, 31
    %vm1659 = vcmp.eq.s32.totalorder %v1531, 31
    %vm1660 = vcmp.eq.s32.totalorder %v1532, 31
    %vm1661 = vcmp.eq.s32.totalorder %v1533, 31
    %vm1662 = vcmp.eq.s32.totalorder %v1534, 31
    %vm1663 = vcmp.eq.s32.totalorder %v1535, 31
    %vm1664 = vcmp.eq.s32.totalorder %v1536, 31
    %vm1665 = vcmp.eq.s32.totalorder %v1537, 31
    %vm1666 = vcmp.eq.s32.totalorder %v1538, 31
    %vm1667 = vcmp.eq.s32.totalorder %v1539, 31
    %vm1668 = vcmp.eq.s32.totalorder %v1540, 31
    %vm1669 = vcmp.eq.s32.totalorder %v1541, 31
    %vm1670 = vcmp.eq.s32.totalorder %v1542, 31
    %vm1671 = vcmp.eq.s32.totalorder %v1543, 31
    %vm1672 = vcmp.eq.s32.totalorder %v1544, 31
    %vm1673 = vcmp.eq.s32.totalorder %v1545, 31
    %vm1674 = vcmp.eq.s32.totalorder %v1546, 31
    %vm1675 = vcmp.eq.s32.totalorder %v1547, 31
    %vm1676 = vcmp.eq.s32.totalorder %v1548, 31
    %vm1677 = vcmp.eq.s32.totalorder %v1549, 31
    %vm1678 = vcmp.eq.s32.totalorder %v1550, 31
    %vm1679 = vcmp.eq.s32.totalorder %v1551, 31
    %vm1680 = vcmp.eq.s32.totalorder %v1552, 31
    %vm1681 = vcmp.eq.s32.totalorder %v1553, 31
    %vm1682 = vcmp.eq.s32.totalorder %v1554, 31
    %vm1683 = vcmp.eq.s32.totalorder %v1555, 31
    %vm1684 = vcmp.eq.s32.totalorder %v1556, 31
    %vm1685 = vcmp.eq.s32.totalorder %v1557, 31
    %vm1686 = vcmp.eq.s32.totalorder %v1558, 31
    %vm1687 = vcmp.eq.s32.totalorder %v1559, 31
    %vm1688 = vcmp.eq.s32.totalorder %v1560, 31
    %v1689 = vrot.slane %v664, 7
    %v1690 = vrot.slane %v665, 7
    %v1691 = vrot.slane %v666, 7
    %v1692 = vrot.slane %v667, 7
    %v1693 = vrot.slane %v668, 7
    %v1694 = vrot.slane %v669, 7
    %v1695 = vrot.slane %v670, 7
    %v1696 = vrot.slane %v671, 7
    %v1697 = vrot.slane %v672, 7
    %v1698 = vrot.slane %v673, 7
    %v1699 = vrot.slane %v674, 7
    %v1700 = vrot.slane %v675, 7
    %v1701 = vrot.slane %v676, 7
    %v1702 = vrot.slane %v677, 7
    %v1703 = vrot.slane %v678, 7
    %v1704 = vrot.slane %v679, 7
    %v1705 = vrot.slane %v680, 7
    %v1706 = vrot.slane %v681, 7
    %v1707 = vrot.slane %v682, 7
    %v1708 = vrot.slane %v683, 7
    %v1709 = vrot.slane %v684, 7
    %v1710 = vrot.slane %v685, 7
    %v1711 = vrot.slane %v686, 7
    %v1712 = vrot.slane %v687, 7
    %v1713 = vrot.slane %v688, 7
    %v1714 = vrot.slane %v689, 7
    %v1715 = vrot.slane %v690, 7
    %v1716 = vrot.slane %v691, 7
    %v1717 = vrot.slane %v692, 7
    %v1718 = vrot.slane %v693, 7
    %v1719 = vrot.slane %v694, 7
    %v1720 = vrot.slane %v695, 7
    %v1721 = vrot.slane %v696, 7
    %v1722 = vrot.slane %v697, 7
    %v1723 = vrot.slane %v698, 7
    %v1724 = vrot.slane %v699, 7
    %v1725 = vrot.slane %v700, 7
    %v1726 = vrot.slane %v701, 7
    %v1727 = vrot.slane %v702, 7
    %v1728 = vrot.slane %v703, 7
    %v1729 = vrot.slane %v704, 7
    %v1730 = vrot.slane %v705, 7
    %v1731 = vrot.slane %v706, 7
    %v1732 = vrot.slane %v707, 7
    %v1733 = vrot.slane %v708, 7
    %v1734 = vrot.slane %v709, 7
    %v1735 = vrot.slane %v710, 7
    %v1736 = vrot.slane %v711, 7
    %v1737 = vrot.slane %v712, 7
    %v1738 = vrot.slane %v713, 7
    %v1739 = vrot.slane %v714, 7
    %v1740 = vrot.slane %v715, 7
    %v1741 = vrot.slane %v716, 7
    %v1742 = vrot.slane %v717, 7
    %v1743 = vrot.slane %v718, 7
    %v1744 = vrot.slane %v719, 7
    %v1745 = vrot.slane %v720, 7
    %v1746 = vrot.slane %v721, 7
    %v1747 = vrot.slane %v722, 7
    %v1748 = vrot.slane %v723, 7
    %v1749 = vrot.slane %v724, 7
    %v1750 = vrot.slane %v725, 7
    %v1751 = vrot.slane %v726, 7
    %v1752 = vrot.slane %v727, 7
    %vm1753 = vcmp.lt.s32.totalorder %v729, 1
    %v1754 = vsel %vm1753, %v1751, %v1752
    %v1755 = vsel %vm1753, %v1750, %v1751
    %v1756 = vsel %vm1753, %v1749, %v1750
    %v1757 = vsel %vm1753, %v1748, %v1749
    %v1758 = vsel %vm1753, %v1747, %v1748
    %v1759 = vsel %vm1753, %v1746, %v1747
    %v1760 = vsel %vm1753, %v1745, %v1746
    %v1761 = vsel %vm1753, %v1744, %v1745
    %v1762 = vsel %vm1753, %v1743, %v1744
    %v1763 = vsel %vm1753, %v1742, %v1743
    %v1764 = vsel %vm1753, %v1741, %v1742
    %v1765 = vsel %vm1753, %v1740, %v1741
    %v1766 = vsel %vm1753, %v1739, %v1740
    %v1767 = vsel %vm1753, %v1738, %v1739
    %v1768 = vsel %vm1753, %v1737, %v1738
    %v1769 = vsel %vm1753, %v1736, %v1737
    %v1770 = vsel %vm1753, %v1735, %v1736
    %v1771 = vsel %vm1753, %v1734, %v1735
    %v1772 = vsel %vm1753, %v1733, %v1734
    %v1773 = vsel %vm1753, %v1732, %v1733
    %v1774 = vsel %vm1753, %v1731, %v1732
    %v1775 = vsel %vm1753, %v1730, %v1731
    %v1776 = vsel %vm1753, %v1729, %v1730
    %v1777 = vsel %vm1753, %v1728, %v1729
    %v1778 = vsel %vm1753, %v1727, %v1728
    %v1779 = vsel %vm1753, %v1726, %v1727
    %v1780 = vsel %vm1753, %v1725, %v1726
    %v1781 = vsel %vm1753, %v1724, %v1725
    %v1782 = vsel %vm1753, %v1723, %v1724
    %v1783 = vsel %vm1753, %v1722, %v1723
    %v1784 = vsel %vm1753, %v1721, %v1722
    %v1785 = vsel %vm1753, %v1720, %v1721
    %v1786 = vsel %vm1753, %v1719, %v1720
    %v1787 = vsel %vm1753, %v1718, %v1719
    %v1788 = vsel %vm1753, %v1717, %v1718
    %v1789 = vsel %vm1753, %v1716, %v1717
    %v1790 = vsel %vm1753, %v1715, %v1716
    %v1791 = vsel %vm1753, %v1714, %v1715
    %v1792 = vsel %vm1753, %v1713, %v1714
    %v1793 = vsel %vm1753, %v1712, %v1713
    %v1794 = vsel %vm1753, %v1711, %v1712
    %v1795 = vsel %vm1753, %v1710, %v1711
    %v1796 = vsel %vm1753, %v1709, %v1710
    %v1797 = vsel %vm1753, %v1708, %v1709
    %v1798 = vsel %vm1753, %v1707, %v1708
    %v1799 = vsel %vm1753, %v1706, %v1707
    %v1800 = vsel %vm1753, %v1705, %v1706
    %v1801 = vsel %vm1753, %v1704, %v1705
    %v1802 = vsel %vm1753, %v1703, %v1704
    %v1803 = vsel %vm1753, %v1702, %v1703
    %v1804 = vsel %vm1753, %v1701, %v1702
    %v1805 = vsel %vm1753, %v1700, %v1701
    %v1806 = vsel %vm1753, %v1699, %v1700
    %v1807 = vsel %vm1753, %v1698, %v1699
    %v1808 = vsel %vm1753, %v1697, %v1698
    %v1809 = vsel %vm1753, %v1696, %v1697
    %v1810 = vsel %vm1753, %v1695, %v1696
    %v1811 = vsel %vm1753, %v1694, %v1695
    %v1812 = vsel %vm1753, %v1693, %v1694
    %v1813 = vsel %vm1753, %v1692, %v1693
    %v1814 = vsel %vm1753, %v1691, %v1692
    %v1815 = vsel %vm1753, %v1690, %v1691
    %v1816 = vsel %vm1753, %v1689, %v1690
    %v1817 = vsel %vm1753, %v1752, %v1689
    %v1818 = vsel %vm1561, 1, 0
    %v1819 = vsel %vm1562, 1, 0
    %v1820 = vsel %vm1563, 1, 0
    %v1821 = vsel %vm1564, 1, 0
    %v1822 = vsel %vm1565, 1, 0
    %v1823 = vsel %vm1566, 1, 0
    %v1824 = vsel %vm1567, 1, 0
    %v1825 = vsel %vm1568, 1, 0
    %v1826 = vsel %vm1569, 1, 0
    %v1827 = vsel %vm1570, 1, 0
    %v1828 = vsel %vm1571, 1, 0
    %v1829 = vsel %vm1572, 1, 0
    %v1830 = vsel %vm1573, 1, 0
    %v1831 = vsel %vm1574, 1, 0
    %v1832 = vsel %vm1575, 1, 0
    %v1833 = vsel %vm1576, 1, 0
    %v1834 = vsel %vm1577, 1, 0
    %v1835 = vsel %vm1578, 1, 0
    %v1836 = vsel %vm1579, 1, 0
    %v1837 = vsel %vm1580, 1, 0
    %v1838 = vsel %vm1581, 1, 0
    %v1839 = vsel %vm1582, 1, 0
    %v1840 = vsel %vm1583, 1, 0
    %v1841 = vsel %vm1584, 1, 0
    %v1842 = vsel %vm1585, 1, 0
    %v1843 = vsel %vm1586, 1, 0
    %v1844 = vsel %vm1587, 1, 0
    %v1845 = vsel %vm1588, 1, 0
    %v1846 = vsel %vm1589, 1, 0
    %v1847 = vsel %vm1590, 1, 0
    %v1848 = vsel %vm1591, 1, 0
    %v1849 = vsel %vm1592, 1, 0
    %v1850 = vsel %vm1593, 1, 0
    %v1851 = vsel %vm1594, 1, 0
    %v1852 = vsel %vm1595, 1, 0
    %v1853 = vsel %vm1596, 1, 0
    %v1854 = vsel %vm1597, 1, 0
    %v1855 = vsel %vm1598, 1, 0
    %v1856 = vsel %vm1599, 1, 0
    %v1857 = vsel %vm1600, 1, 0
    %v1858 = vsel %vm1601, 1, 0
    %v1859 = vsel %vm1602, 1, 0
    %v1860 = vsel %vm1603, 1, 0
    %v1861 = vsel %vm1604, 1, 0
    %v1862 = vsel %vm1605, 1, 0
    %v1863 = vsel %vm1606, 1, 0
    %v1864 = vsel %vm1607, 1, 0
    %v1865 = vsel %vm1608, 1, 0
    %v1866 = vsel %vm1609, 1, 0
    %v1867 = vsel %vm1610, 1, 0
    %v1868 = vsel %vm1611, 1, 0
    %v1869 = vsel %vm1612, 1, 0
    %v1870 = vsel %vm1613, 1, 0
    %v1871 = vsel %vm1614, 1, 0
    %v1872 = vsel %vm1615, 1, 0
    %v1873 = vsel %vm1616, 1, 0
    %v1874 = vsel %vm1617, 1, 0
    %v1875 = vsel %vm1618, 1, 0
    %v1876 = vsel %vm1619, 1, 0
    %v1877 = vsel %vm1620, 1, 0
    %v1878 = vsel %vm1621, 1, 0
    %v1879 = vsel %vm1622, 1, 0
    %v1880 = vsel %vm1623, 1, 0
    %v1881 = vsel %vm1624, 1, 0
    %vm1882 = vcmp.eq.s32.totalorder %v1818, 1
    %vm1883 = vcmp.eq.s32.totalorder %v1819, 1
    %vm1884 = vcmp.eq.s32.totalorder %v1820, 1
    %vm1885 = vcmp.eq.s32.totalorder %v1821, 1
    %vm1886 = vcmp.eq.s32.totalorder %v1822, 1
    %vm1887 = vcmp.eq.s32.totalorder %v1823, 1
    %vm1888 = vcmp.eq.s32.totalorder %v1824, 1
    %vm1889 = vcmp.eq.s32.totalorder %v1825, 1
    %vm1890 = vcmp.eq.s32.totalorder %v1826, 1
    %vm1891 = vcmp.eq.s32.totalorder %v1827, 1
    %vm1892 = vcmp.eq.s32.totalorder %v1828, 1
    %vm1893 = vcmp.eq.s32.totalorder %v1829, 1
    %vm1894 = vcmp.eq.s32.totalorder %v1830, 1
    %vm1895 = vcmp.eq.s32.totalorder %v1831, 1
    %vm1896 = vcmp.eq.s32.totalorder %v1832, 1
    %vm1897 = vcmp.eq.s32.totalorder %v1833, 1
    %vm1898 = vcmp.eq.s32.totalorder %v1834, 1
    %vm1899 = vcmp.eq.s32.totalorder %v1835, 1
    %vm1900 = vcmp.eq.s32.totalorder %v1836, 1
    %vm1901 = vcmp.eq.s32.totalorder %v1837, 1
    %vm1902 = vcmp.eq.s32.totalorder %v1838, 1
    %vm1903 = vcmp.eq.s32.totalorder %v1839, 1
    %vm1904 = vcmp.eq.s32.totalorder %v1840, 1
    %vm1905 = vcmp.eq.s32.totalorder %v1841, 1
    %vm1906 = vcmp.eq.s32.totalorder %v1842, 1
    %vm1907 = vcmp.eq.s32.totalorder %v1843, 1
    %vm1908 = vcmp.eq.s32.totalorder %v1844, 1
    %vm1909 = vcmp.eq.s32.totalorder %v1845, 1
    %vm1910 = vcmp.eq.s32.totalorder %v1846, 1
    %vm1911 = vcmp.eq.s32.totalorder %v1847, 1
    %vm1912 = vcmp.eq.s32.totalorder %v1848, 1
    %vm1913 = vcmp.eq.s32.totalorder %v1849, 1
    %vm1914 = vcmp.eq.s32.totalorder %v1850, 1
    %vm1915 = vcmp.eq.s32.totalorder %v1851, 1
    %vm1916 = vcmp.eq.s32.totalorder %v1852, 1
    %vm1917 = vcmp.eq.s32.totalorder %v1853, 1
    %vm1918 = vcmp.eq.s32.totalorder %v1854, 1
    %vm1919 = vcmp.eq.s32.totalorder %v1855, 1
    %vm1920 = vcmp.eq.s32.totalorder %v1856, 1
    %vm1921 = vcmp.eq.s32.totalorder %v1857, 1
    %vm1922 = vcmp.eq.s32.totalorder %v1858, 1
    %vm1923 = vcmp.eq.s32.totalorder %v1859, 1
    %vm1924 = vcmp.eq.s32.totalorder %v1860, 1
    %vm1925 = vcmp.eq.s32.totalorder %v1861, 1
    %vm1926 = vcmp.eq.s32.totalorder %v1862, 1
    %vm1927 = vcmp.eq.s32.totalorder %v1863, 1
    %vm1928 = vcmp.eq.s32.totalorder %v1864, 1
    %vm1929 = vcmp.eq.s32.totalorder %v1865, 1
    %vm1930 = vcmp.eq.s32.totalorder %v1866, 1
    %vm1931 = vcmp.eq.s32.totalorder %v1867, 1
    %vm1932 = vcmp.eq.s32.totalorder %v1868, 1
    %vm1933 = vcmp.eq.s32.totalorder %v1869, 1
    %vm1934 = vcmp.eq.s32.totalorder %v1870, 1
    %vm1935 = vcmp.eq.s32.totalorder %v1871, 1
    %vm1936 = vcmp.eq.s32.totalorder %v1872, 1
    %vm1937 = vcmp.eq.s32.totalorder %v1873, 1
    %vm1938 = vcmp.eq.s32.totalorder %v1874, 1
    %vm1939 = vcmp.eq.s32.totalorder %v1875, 1
    %vm1940 = vcmp.eq.s32.totalorder %v1876, 1
    %vm1941 = vcmp.eq.s32.totalorder %v1877, 1
    %vm1942 = vcmp.eq.s32.totalorder %v1878, 1
    %vm1943 = vcmp.eq.s32.totalorder %v1879, 1
    %vm1944 = vcmp.eq.s32.totalorder %v1880, 1
    %vm1945 = vcmp.eq.s32.totalorder %v1881, 1
    %v1946 = vsel %vm1882, 0.0, %v1817
    %v1947 = vsel %vm1883, 0.0, %v1816
    %v1948 = vsel %vm1884, 0.0, %v1815
    %v1949 = vsel %vm1885, 0.0, %v1814
    %v1950 = vsel %vm1886, 0.0, %v1813
    %v1951 = vsel %vm1887, 0.0, %v1812
    %v1952 = vsel %vm1888, 0.0, %v1811
    %v1953 = vsel %vm1889, 0.0, %v1810
    %v1954 = vsel %vm1890, 0.0, %v1809
    %v1955 = vsel %vm1891, 0.0, %v1808
    %v1956 = vsel %vm1892, 0.0, %v1807
    %v1957 = vsel %vm1893, 0.0, %v1806
    %v1958 = vsel %vm1894, 0.0, %v1805
    %v1959 = vsel %vm1895, 0.0, %v1804
    %v1960 = vsel %vm1896, 0.0, %v1803
    %v1961 = vsel %vm1897, 0.0, %v1802
    %v1962 = vsel %vm1898, 0.0, %v1801
    %v1963 = vsel %vm1899, 0.0, %v1800
    %v1964 = vsel %vm1900, 0.0, %v1799
    %v1965 = vsel %vm1901, 0.0, %v1798
    %v1966 = vsel %vm1902, 0.0, %v1797
    %v1967 = vsel %vm1903, 0.0, %v1796
    %v1968 = vsel %vm1904, 0.0, %v1795
    %v1969 = vsel %vm1905, 0.0, %v1794
    %v1970 = vsel %vm1906, 0.0, %v1793
    %v1971 = vsel %vm1907, 0.0, %v1792
    %v1972 = vsel %vm1908, 0.0, %v1791
    %v1973 = vsel %vm1909, 0.0, %v1790
    %v1974 = vsel %vm1910, 0.0, %v1789
    %v1975 = vsel %vm1911, 0.0, %v1788
    %v1976 = vsel %vm1912, 0.0, %v1787
    %v1977 = vsel %vm1913, 0.0, %v1786
    %v1978 = vsel %vm1914, 0.0, %v1785
    %v1979 = vsel %vm1915, 0.0, %v1784
    %v1980 = vsel %vm1916, 0.0, %v1783
    %v1981 = vsel %vm1917, 0.0, %v1782
    %v1982 = vsel %vm1918, 0.0, %v1781
    %v1983 = vsel %vm1919, 0.0, %v1780
    %v1984 = vsel %vm1920, 0.0, %v1779
    %v1985 = vsel %vm1921, 0.0, %v1778
    %v1986 = vsel %vm1922, 0.0, %v1777
    %v1987 = vsel %vm1923, 0.0, %v1776
    %v1988 = vsel %vm1924, 0.0, %v1775
    %v1989 = vsel %vm1925, 0.0, %v1774
    %v1990 = vsel %vm1926, 0.0, %v1773
    %v1991 = vsel %vm1927, 0.0, %v1772
    %v1992 = vsel %vm1928, 0.0, %v1771
    %v1993 = vsel %vm1929, 0.0, %v1770
    %v1994 = vsel %vm1930, 0.0, %v1769
    %v1995 = vsel %vm1931, 0.0, %v1768
    %v1996 = vsel %vm1932, 0.0, %v1767
    %v1997 = vsel %vm1933, 0.0, %v1766
    %v1998 = vsel %vm1934, 0.0, %v1765
    %v1999 = vsel %vm1935, 0.0, %v1764
    %v2000 = vsel %vm1936, 0.0, %v1763
    %v2001 = vsel %vm1937, 0.0, %v1762
    %v2002 = vsel %vm1938, 0.0, %v1761
    %v2003 = vsel %vm1939, 0.0, %v1760
    %v2004 = vsel %vm1940, 0.0, %v1759
    %v2005 = vsel %vm1941, 0.0, %v1758
    %v2006 = vsel %vm1942, 0.0, %v1757
    %v2007 = vsel %vm1943, 0.0, %v1756
    %v2008 = vsel %vm1944, 0.0, %v1755
    %v2009 = vsel %vm1945, 0.0, %v1754
    %v2010 = vrot.slane %v664, 1
    %v2011 = vrot.slane %v665, 1
    %v2012 = vrot.slane %v666, 1
    %v2013 = vrot.slane %v667, 1
    %v2014 = vrot.slane %v668, 1
    %v2015 = vrot.slane %v669, 1
    %v2016 = vrot.slane %v670, 1
    %v2017 = vrot.slane %v671, 1
    %v2018 = vrot.slane %v672, 1
    %v2019 = vrot.slane %v673, 1
    %v2020 = vrot.slane %v674, 1
    %v2021 = vrot.slane %v675, 1
    %v2022 = vrot.slane %v676, 1
    %v2023 = vrot.slane %v677, 1
    %v2024 = vrot.slane %v678, 1
    %v2025 = vrot.slane %v679, 1
    %v2026 = vrot.slane %v680, 1
    %v2027 = vrot.slane %v681, 1
    %v2028 = vrot.slane %v682, 1
    %v2029 = vrot.slane %v683, 1
    %v2030 = vrot.slane %v684, 1
    %v2031 = vrot.slane %v685, 1
    %v2032 = vrot.slane %v686, 1
    %v2033 = vrot.slane %v687, 1
    %v2034 = vrot.slane %v688, 1
    %v2035 = vrot.slane %v689, 1
    %v2036 = vrot.slane %v690, 1
    %v2037 = vrot.slane %v691, 1
    %v2038 = vrot.slane %v692, 1
    %v2039 = vrot.slane %v693, 1
    %v2040 = vrot.slane %v694, 1
    %v2041 = vrot.slane %v695, 1
    %v2042 = vrot.slane %v696, 1
    %v2043 = vrot.slane %v697, 1
    %v2044 = vrot.slane %v698, 1
    %v2045 = vrot.slane %v699, 1
    %v2046 = vrot.slane %v700, 1
    %v2047 = vrot.slane %v701, 1
    %v2048 = vrot.slane %v702, 1
    %v2049 = vrot.slane %v703, 1
    %v2050 = vrot.slane %v704, 1
    %v2051 = vrot.slane %v705, 1
    %v2052 = vrot.slane %v706, 1
    %v2053 = vrot.slane %v707, 1
    %v2054 = vrot.slane %v708, 1
    %v2055 = vrot.slane %v709, 1
    %v2056 = vrot.slane %v710, 1
    %v2057 = vrot.slane %v711, 1
    %v2058 = vrot.slane %v712, 1
    %v2059 = vrot.slane %v713, 1
    %v2060 = vrot.slane %v714, 1
    %v2061 = vrot.slane %v715, 1
    %v2062 = vrot.slane %v716, 1
    %v2063 = vrot.slane %v717, 1
    %v2064 = vrot.slane %v718, 1
    %v2065 = vrot.slane %v719, 1
    %v2066 = vrot.slane %v720, 1
    %v2067 = vrot.slane %v721, 1
    %v2068 = vrot.slane %v722, 1
    %v2069 = vrot.slane %v723, 1
    %v2070 = vrot.slane %v724, 1
    %v2071 = vrot.slane %v725, 1
    %v2072 = vrot.slane %v726, 1
    %v2073 = vrot.slane %v727, 1
    %vm2074 = vcmp.lt.s32.totalorder %v729, 7
    %v2075 = vsel %vm2074, %v2072, %v2073
    %v2076 = vsel %vm2074, %v2071, %v2072
    %v2077 = vsel %vm2074, %v2070, %v2071
    %v2078 = vsel %vm2074, %v2069, %v2070
    %v2079 = vsel %vm2074, %v2068, %v2069
    %v2080 = vsel %vm2074, %v2067, %v2068
    %v2081 = vsel %vm2074, %v2066, %v2067
    %v2082 = vsel %vm2074, %v2065, %v2066
    %v2083 = vsel %vm2074, %v2064, %v2065
    %v2084 = vsel %vm2074, %v2063, %v2064
    %v2085 = vsel %vm2074, %v2062, %v2063
    %v2086 = vsel %vm2074, %v2061, %v2062
    %v2087 = vsel %vm2074, %v2060, %v2061
    %v2088 = vsel %vm2074, %v2059, %v2060
    %v2089 = vsel %vm2074, %v2058, %v2059
    %v2090 = vsel %vm2074, %v2057, %v2058
    %v2091 = vsel %vm2074, %v2056, %v2057
    %v2092 = vsel %vm2074, %v2055, %v2056
    %v2093 = vsel %vm2074, %v2054, %v2055
    %v2094 = vsel %vm2074, %v2053, %v2054
    %v2095 = vsel %vm2074, %v2052, %v2053
    %v2096 = vsel %vm2074, %v2051, %v2052
    %v2097 = vsel %vm2074, %v2050, %v2051
    %v2098 = vsel %vm2074, %v2049, %v2050
    %v2099 = vsel %vm2074, %v2048, %v2049
    %v2100 = vsel %vm2074, %v2047, %v2048
    %v2101 = vsel %vm2074, %v2046, %v2047
    %v2102 = vsel %vm2074, %v2045, %v2046
    %v2103 = vsel %vm2074, %v2044, %v2045
    %v2104 = vsel %vm2074, %v2043, %v2044
    %v2105 = vsel %vm2074, %v2042, %v2043
    %v2106 = vsel %vm2074, %v2041, %v2042
    %v2107 = vsel %vm2074, %v2040, %v2041
    %v2108 = vsel %vm2074, %v2039, %v2040
    %v2109 = vsel %vm2074, %v2038, %v2039
    %v2110 = vsel %vm2074, %v2037, %v2038
    %v2111 = vsel %vm2074, %v2036, %v2037
    %v2112 = vsel %vm2074, %v2035, %v2036
    %v2113 = vsel %vm2074, %v2034, %v2035
    %v2114 = vsel %vm2074, %v2033, %v2034
    %v2115 = vsel %vm2074, %v2032, %v2033
    %v2116 = vsel %vm2074, %v2031, %v2032
    %v2117 = vsel %vm2074, %v2030, %v2031
    %v2118 = vsel %vm2074, %v2029, %v2030
    %v2119 = vsel %vm2074, %v2028, %v2029
    %v2120 = vsel %vm2074, %v2027, %v2028
    %v2121 = vsel %vm2074, %v2026, %v2027
    %v2122 = vsel %vm2074, %v2025, %v2026
    %v2123 = vsel %vm2074, %v2024, %v2025
    %v2124 = vsel %vm2074, %v2023, %v2024
    %v2125 = vsel %vm2074, %v2022, %v2023
    %v2126 = vsel %vm2074, %v2021, %v2022
    %v2127 = vsel %vm2074, %v2020, %v2021
    %v2128 = vsel %vm2074, %v2019, %v2020
    %v2129 = vsel %vm2074, %v2018, %v2019
    %v2130 = vsel %vm2074, %v2017, %v2018
    %v2131 = vsel %vm2074, %v2016, %v2017
    %v2132 = vsel %vm2074, %v2015, %v2016
    %v2133 = vsel %vm2074, %v2014, %v2015
    %v2134 = vsel %vm2074, %v2013, %v2014
    %v2135 = vsel %vm2074, %v2012, %v2013
    %v2136 = vsel %vm2074, %v2011, %v2012
    %v2137 = vsel %vm2074, %v2010, %v2011
    %v2138 = vsel %vm2074, %v2073, %v2010
    %v2139 = vsel %vm1625, 1, 0
    %v2140 = vsel %vm1626, 1, 0
    %v2141 = vsel %vm1627, 1, 0
    %v2142 = vsel %vm1628, 1, 0
    %v2143 = vsel %vm1629, 1, 0
    %v2144 = vsel %vm1630, 1, 0
    %v2145 = vsel %vm1631, 1, 0
    %v2146 = vsel %vm1632, 1, 0
    %v2147 = vsel %vm1633, 1, 0
    %v2148 = vsel %vm1634, 1, 0
    %v2149 = vsel %vm1635, 1, 0
    %v2150 = vsel %vm1636, 1, 0
    %v2151 = vsel %vm1637, 1, 0
    %v2152 = vsel %vm1638, 1, 0
    %v2153 = vsel %vm1639, 1, 0
    %v2154 = vsel %vm1640, 1, 0
    %v2155 = vsel %vm1641, 1, 0
    %v2156 = vsel %vm1642, 1, 0
    %v2157 = vsel %vm1643, 1, 0
    %v2158 = vsel %vm1644, 1, 0
    %v2159 = vsel %vm1645, 1, 0
    %v2160 = vsel %vm1646, 1, 0
    %v2161 = vsel %vm1647, 1, 0
    %v2162 = vsel %vm1648, 1, 0
    %v2163 = vsel %vm1649, 1, 0
    %v2164 = vsel %vm1650, 1, 0
    %v2165 = vsel %vm1651, 1, 0
    %v2166 = vsel %vm1652, 1, 0
    %v2167 = vsel %vm1653, 1, 0
    %v2168 = vsel %vm1654, 1, 0
    %v2169 = vsel %vm1655, 1, 0
    %v2170 = vsel %vm1656, 1, 0
    %v2171 = vsel %vm1657, 1, 0
    %v2172 = vsel %vm1658, 1, 0
    %v2173 = vsel %vm1659, 1, 0
    %v2174 = vsel %vm1660, 1, 0
    %v2175 = vsel %vm1661, 1, 0
    %v2176 = vsel %vm1662, 1, 0
    %v2177 = vsel %vm1663, 1, 0
    %v2178 = vsel %vm1664, 1, 0
    %v2179 = vsel %vm1665, 1, 0
    %v2180 = vsel %vm1666, 1, 0
    %v2181 = vsel %vm1667, 1, 0
    %v2182 = vsel %vm1668, 1, 0
    %v2183 = vsel %vm1669, 1, 0
    %v2184 = vsel %vm1670, 1, 0
    %v2185 = vsel %vm1671, 1, 0
    %v2186 = vsel %vm1672, 1, 0
    %v2187 = vsel %vm1673, 1, 0
    %v2188 = vsel %vm1674, 1, 0
    %v2189 = vsel %vm1675, 1, 0
    %v2190 = vsel %vm1676, 1, 0
    %v2191 = vsel %vm1677, 1, 0
    %v2192 = vsel %vm1678, 1, 0
    %v2193 = vsel %vm1679, 1, 0
    %v2194 = vsel %vm1680, 1, 0
    %v2195 = vsel %vm1681, 1, 0
    %v2196 = vsel %vm1682, 1, 0
    %v2197 = vsel %vm1683, 1, 0
    %v2198 = vsel %vm1684, 1, 0
    %v2199 = vsel %vm1685, 1, 0
    %v2200 = vsel %vm1686, 1, 0
    %v2201 = vsel %vm1687, 1, 0
    %v2202 = vsel %vm1688, 1, 0
    %vm2203 = vcmp.eq.s32.totalorder %v2139, 1
    %vm2204 = vcmp.eq.s32.totalorder %v2140, 1
    %vm2205 = vcmp.eq.s32.totalorder %v2141, 1
    %vm2206 = vcmp.eq.s32.totalorder %v2142, 1
    %vm2207 = vcmp.eq.s32.totalorder %v2143, 1
    %vm2208 = vcmp.eq.s32.totalorder %v2144, 1
    %vm2209 = vcmp.eq.s32.totalorder %v2145, 1
    %vm2210 = vcmp.eq.s32.totalorder %v2146, 1
    %vm2211 = vcmp.eq.s32.totalorder %v2147, 1
    %vm2212 = vcmp.eq.s32.totalorder %v2148, 1
    %vm2213 = vcmp.eq.s32.totalorder %v2149, 1
    %vm2214 = vcmp.eq.s32.totalorder %v2150, 1
    %vm2215 = vcmp.eq.s32.totalorder %v2151, 1
    %vm2216 = vcmp.eq.s32.totalorder %v2152, 1
    %vm2217 = vcmp.eq.s32.totalorder %v2153, 1
    %vm2218 = vcmp.eq.s32.totalorder %v2154, 1
    %vm2219 = vcmp.eq.s32.totalorder %v2155, 1
    %vm2220 = vcmp.eq.s32.totalorder %v2156, 1
    %vm2221 = vcmp.eq.s32.totalorder %v2157, 1
    %vm2222 = vcmp.eq.s32.totalorder %v2158, 1
    %vm2223 = vcmp.eq.s32.totalorder %v2159, 1
    %vm2224 = vcmp.eq.s32.totalorder %v2160, 1
    %vm2225 = vcmp.eq.s32.totalorder %v2161, 1
    %vm2226 = vcmp.eq.s32.totalorder %v2162, 1
    %vm2227 = vcmp.eq.s32.totalorder %v2163, 1
    %vm2228 = vcmp.eq.s32.totalorder %v2164, 1
    %vm2229 = vcmp.eq.s32.totalorder %v2165, 1
    %vm2230 = vcmp.eq.s32.totalorder %v2166, 1
    %vm2231 = vcmp.eq.s32.totalorder %v2167, 1
    %vm2232 = vcmp.eq.s32.totalorder %v2168, 1
    %vm2233 = vcmp.eq.s32.totalorder %v2169, 1
    %vm2234 = vcmp.eq.s32.totalorder %v2170, 1
    %vm2235 = vcmp.eq.s32.totalorder %v2171, 1
    %vm2236 = vcmp.eq.s32.totalorder %v2172, 1
    %vm2237 = vcmp.eq.s32.totalorder %v2173, 1
    %vm2238 = vcmp.eq.s32.totalorder %v2174, 1
    %vm2239 = vcmp.eq.s32.totalorder %v2175, 1
    %vm2240 = vcmp.eq.s32.totalorder %v2176, 1
    %vm2241 = vcmp.eq.s32.totalorder %v2177, 1
    %vm2242 = vcmp.eq.s32.totalorder %v2178, 1
    %vm2243 = vcmp.eq.s32.totalorder %v2179, 1
    %vm2244 = vcmp.eq.s32.totalorder %v2180, 1
    %vm2245 = vcmp.eq.s32.totalorder %v2181, 1
    %vm2246 = vcmp.eq.s32.totalorder %v2182, 1
    %vm2247 = vcmp.eq.s32.totalorder %v2183, 1
    %vm2248 = vcmp.eq.s32.totalorder %v2184, 1
    %vm2249 = vcmp.eq.s32.totalorder %v2185, 1
    %vm2250 = vcmp.eq.s32.totalorder %v2186, 1
    %vm2251 = vcmp.eq.s32.totalorder %v2187, 1
    %vm2252 = vcmp.eq.s32.totalorder %v2188, 1
    %vm2253 = vcmp.eq.s32.totalorder %v2189, 1
    %vm2254 = vcmp.eq.s32.totalorder %v2190, 1
    %vm2255 = vcmp.eq.s32.totalorder %v2191, 1
    %vm2256 = vcmp.eq.s32.totalorder %v2192, 1
    %vm2257 = vcmp.eq.s32.totalorder %v2193, 1
    %vm2258 = vcmp.eq.s32.totalorder %v2194, 1
    %vm2259 = vcmp.eq.s32.totalorder %v2195, 1
    %vm2260 = vcmp.eq.s32.totalorder %v2196, 1
    %vm2261 = vcmp.eq.s32.totalorder %v2197, 1
    %vm2262 = vcmp.eq.s32.totalorder %v2198, 1
    %vm2263 = vcmp.eq.s32.totalorder %v2199, 1
    %vm2264 = vcmp.eq.s32.totalorder %v2200, 1
    %vm2265 = vcmp.eq.s32.totalorder %v2201, 1
    %vm2266 = vcmp.eq.s32.totalorder %v2202, 1
    %v2267 = vsel %vm2203, 0.0, %v2137
    %v2268 = vsel %vm2204, 0.0, %v2136
    %v2269 = vsel %vm2205, 0.0, %v2135
    %v2270 = vsel %vm2206, 0.0, %v2134
    %v2271 = vsel %vm2207, 0.0, %v2133
    %v2272 = vsel %vm2208, 0.0, %v2132
    %v2273 = vsel %vm2209, 0.0, %v2131
    %v2274 = vsel %vm2210, 0.0, %v2130
    %v2275 = vsel %vm2211, 0.0, %v2129
    %v2276 = vsel %vm2212, 0.0, %v2128
    %v2277 = vsel %vm2213, 0.0, %v2127
    %v2278 = vsel %vm2214, 0.0, %v2126
    %v2279 = vsel %vm2215, 0.0, %v2125
    %v2280 = vsel %vm2216, 0.0, %v2124
    %v2281 = vsel %vm2217, 0.0, %v2123
    %v2282 = vsel %vm2218, 0.0, %v2122
    %v2283 = vsel %vm2219, 0.0, %v2121
    %v2284 = vsel %vm2220, 0.0, %v2120
    %v2285 = vsel %vm2221, 0.0, %v2119
    %v2286 = vsel %vm2222, 0.0, %v2118
    %v2287 = vsel %vm2223, 0.0, %v2117
    %v2288 = vsel %vm2224, 0.0, %v2116
    %v2289 = vsel %vm2225, 0.0, %v2115
    %v2290 = vsel %vm2226, 0.0, %v2114
    %v2291 = vsel %vm2227, 0.0, %v2113
    %v2292 = vsel %vm2228, 0.0, %v2112
    %v2293 = vsel %vm2229, 0.0, %v2111
    %v2294 = vsel %vm2230, 0.0, %v2110
    %v2295 = vsel %vm2231, 0.0, %v2109
    %v2296 = vsel %vm2232, 0.0, %v2108
    %v2297 = vsel %vm2233, 0.0, %v2107
    %v2298 = vsel %vm2234, 0.0, %v2106
    %v2299 = vsel %vm2235, 0.0, %v2105
    %v2300 = vsel %vm2236, 0.0, %v2104
    %v2301 = vsel %vm2237, 0.0, %v2103
    %v2302 = vsel %vm2238, 0.0, %v2102
    %v2303 = vsel %vm2239, 0.0, %v2101
    %v2304 = vsel %vm2240, 0.0, %v2100
    %v2305 = vsel %vm2241, 0.0, %v2099
    %v2306 = vsel %vm2242, 0.0, %v2098
    %v2307 = vsel %vm2243, 0.0, %v2097
    %v2308 = vsel %vm2244, 0.0, %v2096
    %v2309 = vsel %vm2245, 0.0, %v2095
    %v2310 = vsel %vm2246, 0.0, %v2094
    %v2311 = vsel %vm2247, 0.0, %v2093
    %v2312 = vsel %vm2248, 0.0, %v2092
    %v2313 = vsel %vm2249, 0.0, %v2091
    %v2314 = vsel %vm2250, 0.0, %v2090
    %v2315 = vsel %vm2251, 0.0, %v2089
    %v2316 = vsel %vm2252, 0.0, %v2088
    %v2317 = vsel %vm2253, 0.0, %v2087
    %v2318 = vsel %vm2254, 0.0, %v2086
    %v2319 = vsel %vm2255, 0.0, %v2085
    %v2320 = vsel %vm2256, 0.0, %v2084
    %v2321 = vsel %vm2257, 0.0, %v2083
    %v2322 = vsel %vm2258, 0.0, %v2082
    %v2323 = vsel %vm2259, 0.0, %v2081
    %v2324 = vsel %vm2260, 0.0, %v2080
    %v2325 = vsel %vm2261, 0.0, %v2079
    %v2326 = vsel %vm2262, 0.0, %v2078
    %v2327 = vsel %vm2263, 0.0, %v2077
    %v2328 = vsel %vm2264, 0.0, %v2076
    %v2329 = vsel %vm2265, 0.0, %v2075
    %v2330 = vsel %vm2266, 0.0, %v2138
    %v2331 = vpack.c.bf16 %v665, %v664
    %v2332 = vpack.c.bf16 %v667, %v666
    %v2333 = vpack.c.bf16 %v669, %v668
    %v2334 = vpack.c.bf16 %v671, %v670
    %v2335 = vpack.c.bf16 %v673, %v672
    %v2336 = vpack.c.bf16 %v675, %v674
    %v2337 = vpack.c.bf16 %v677, %v676
    %v2338 = vpack.c.bf16 %v679, %v678
    %v2339 = vpack.c.bf16 %v681, %v680
    %v2340 = vpack.c.bf16 %v683, %v682
    %v2341 = vpack.c.bf16 %v685, %v684
    %v2342 = vpack.c.bf16 %v687, %v686
    %v2343 = vpack.c.bf16 %v689, %v688
    %v2344 = vpack.c.bf16 %v691, %v690
    %v2345 = vpack.c.bf16 %v693, %v692
    %v2346 = vpack.c.bf16 %v695, %v694
    %v2347 = vpack.c.bf16 %v697, %v696
    %v2348 = vpack.c.bf16 %v699, %v698
    %v2349 = vpack.c.bf16 %v701, %v700
    %v2350 = vpack.c.bf16 %v703, %v702
    %v2351 = vpack.c.bf16 %v705, %v704
    %v2352 = vpack.c.bf16 %v707, %v706
    %v2353 = vpack.c.bf16 %v709, %v708
    %v2354 = vpack.c.bf16 %v711, %v710
    %v2355 = vpack.c.bf16 %v713, %v712
    %v2356 = vpack.c.bf16 %v715, %v714
    %v2357 = vpack.c.bf16 %v717, %v716
    %v2358 = vpack.c.bf16 %v719, %v718
    %v2359 = vpack.c.bf16 %v721, %v720
    %v2360 = vpack.c.bf16 %v723, %v722
    %v2361 = vpack.c.bf16 %v725, %v724
    %v2362 = vpack.c.bf16 %v727, %v726
    %s2363 = scalar_lea.vmem %s5, 32
    %v2364 = vld [vmem:[%s2363] sm:$0xf]
    %v2365 = vld [vmem:[%s2363 + $0x4] sm:$0xf]
    %v2366 = vld [vmem:[%s2363 + $0x8] sm:$0xf]
    %v2367 = vld [vmem:[%s2363 + $0xc] sm:$0xf]
    %v2368 = vld [vmem:[%s2363 + $0x10] sm:$0xf]
    %v2369 = vld [vmem:[%s2363 + $0x14] sm:$0xf]
    %v2370 = vld [vmem:[%s2363 + $0x18] sm:$0xf]
    %v2371 = vld [vmem:[%s2363 + $0x1c] sm:$0xf]
    %v2372 = vpack.c.bf16 %v1947, %v1946
    %v2373 = vpack.c.bf16 %v1949, %v1948
    %v2374 = vpack.c.bf16 %v1951, %v1950
    %v2375 = vpack.c.bf16 %v1953, %v1952
    %v2376 = vpack.c.bf16 %v1955, %v1954
    %v2377 = vpack.c.bf16 %v1957, %v1956
    %v2378 = vpack.c.bf16 %v1959, %v1958
    %v2379 = vpack.c.bf16 %v1961, %v1960
    %v2380 = vpack.c.bf16 %v1963, %v1962
    %v2381 = vpack.c.bf16 %v1965, %v1964
    %v2382 = vpack.c.bf16 %v1967, %v1966
    %v2383 = vpack.c.bf16 %v1969, %v1968
    %v2384 = vpack.c.bf16 %v1971, %v1970
    %v2385 = vpack.c.bf16 %v1973, %v1972
    %v2386 = vpack.c.bf16 %v1975, %v1974
    %v2387 = vpack.c.bf16 %v1977, %v1976
    %v2388 = vpack.c.bf16 %v1979, %v1978
    %v2389 = vpack.c.bf16 %v1981, %v1980
    %v2390 = vpack.c.bf16 %v1983, %v1982
    %v2391 = vpack.c.bf16 %v1985, %v1984
    %v2392 = vpack.c.bf16 %v1987, %v1986
    %v2393 = vpack.c.bf16 %v1989, %v1988
    %v2394 = vpack.c.bf16 %v1991, %v1990
    %v2395 = vpack.c.bf16 %v1993, %v1992
    %v2396 = vpack.c.bf16 %v1995, %v1994
    %v2397 = vpack.c.bf16 %v1997, %v1996
    %v2398 = vpack.c.bf16 %v1999, %v1998
    %v2399 = vpack.c.bf16 %v2001, %v2000
    %v2400 = vpack.c.bf16 %v2003, %v2002
    %v2401 = vpack.c.bf16 %v2005, %v2004
    %v2402 = vpack.c.bf16 %v2007, %v2006
    %v2403 = vpack.c.bf16 %v2009, %v2008
    %v2404 = vld [vmem:[%s5] sm:$0xf]
    %v2405 = vld [vmem:[%s5 + $0x4] sm:$0xf]
    %v2406 = vld [vmem:[%s5 + $0x8] sm:$0xf]
    %v2407 = vld [vmem:[%s5 + $0xc] sm:$0xf]
    %v2408 = vld [vmem:[%s5 + $0x10] sm:$0xf]
    %v2409 = vld [vmem:[%s5 + $0x14] sm:$0xf]
    %v2410 = vld [vmem:[%s5 + $0x18] sm:$0xf]
    %v2411 = vld [vmem:[%s5 + $0x1c] sm:$0xf]
    %v2420 = vunpack.c.l.b16 %v2404
    %v2421 = vunpack.c.l.b16 %v2405
    %v2422 = vunpack.c.l.b16 %v2406
    %v2423 = vunpack.c.l.b16 %v2407
    %v2424 = vunpack.c.l.b16 %v2408
    %v2425 = vunpack.c.l.b16 %v2409
    %v2426 = vunpack.c.l.b16 %v2410
    %v2427 = vunpack.c.l.b16 %v2411
    %v2428 = vpack.c.b16 %v2421, %v2420
    %v2429 = vpack.c.b16 %v2423, %v2422
    %v2430 = vpack.c.b16 %v2425, %v2424
    %v2431 = vpack.c.b16 %v2427, %v2426
    %vm2436 = vcmask 523264
    %v2438 = vsel %vm2436, %v2372, 0
    %v2441 = vsel %vm2436, %v2373, 0
    %v2444 = vsel %vm2436, %v2374, 0
    %v2447 = vsel %vm2436, %v2375, 0
    %v2450 = vsel %vm2436, %v2376, 0
    %v2453 = vsel %vm2436, %v2377, 0
    %v2456 = vsel %vm2436, %v2378, 0
    %v2459 = vsel %vm2436, %v2379, 0
    %v2462 = vsel %vm2436, %v2380, 0
    %v2465 = vsel %vm2436, %v2381, 0
    %v2468 = vsel %vm2436, %v2382, 0
    %v2471 = vsel %vm2436, %v2383, 0
    %v2474 = vsel %vm2436, %v2384, 0
    %v2477 = vsel %vm2436, %v2385, 0
    %v2480 = vsel %vm2436, %v2386, 0
    %v2483 = vsel %vm2436, %v2387, 0
    %v2486 = vsel %vm2436, %v2388, 0
    %v2489 = vsel %vm2436, %v2389, 0
    %v2492 = vsel %vm2436, %v2390, 0
    %v2495 = vsel %vm2436, %v2391, 0
    %v2498 = vsel %vm2436, %v2392, 0
    %v2501 = vsel %vm2436, %v2393, 0
    %v2504 = vsel %vm2436, %v2394, 0
    %v2507 = vsel %vm2436, %v2395, 0
    %v2510 = vsel %vm2436, %v2396, 0
    %v2513 = vsel %vm2436, %v2397, 0
    %v2516 = vsel %vm2436, %v2398, 0
    %v2519 = vsel %vm2436, %v2399, 0
    %v2522 = vsel %vm2436, %v2400, 0
    %v2525 = vsel %vm2436, %v2401, 0
    %v2528 = vsel %vm2436, %v2402, 0
    %v2531 = vsel %vm2436, %v2403, 0
    %2533 = vmatpush.bf16.msra.mxu0 0
    %2534 = vmatpush.bf16.msra.mxu0 0
    %2535 = vmatpush.bf16.msra.mxu0 0
    %2536 = vmatpush.bf16.msra.mxu0 0
    %2537 = vmatpush.bf16.msra.mxu0 %v2431
    %2538 = vmatpush.bf16.msra.mxu0 %v2430
    %2539 = vmatpush.bf16.msra.mxu0 %v2429
    %2540 = vmatpush.bf16.msra.mxu0 %v2428
    %2541 = vmatmul.bf16.gmra.mxu0 %v2438
    %v2542 = vpop.f32.mrf.mxu0
    %v2543 = vadd.f32 0.0, %v2542
    %v2544 = vpop.f32.mrf.mxu0
    %v2545 = vadd.f32 0.0, %v2544
    %2546 = vmatmul.bf16.gmra.mxu0 %v2441
    %v2547 = vpop.f32.mrf.mxu0
    %v2548 = vadd.f32 0.0, %v2547
    %v2549 = vpop.f32.mrf.mxu0
    %v2550 = vadd.f32 0.0, %v2549
    %2551 = vmatmul.bf16.gmra.mxu0 %v2444
    %v2552 = vpop.f32.mrf.mxu0
    %v2553 = vadd.f32 0.0, %v2552
    %v2554 = vpop.f32.mrf.mxu0
    %v2555 = vadd.f32 0.0, %v2554
    %2556 = vmatmul.bf16.gmra.mxu0 %v2447
    %v2557 = vpop.f32.mrf.mxu0
    %v2558 = vadd.f32 0.0, %v2557
    %v2559 = vpop.f32.mrf.mxu0
    %v2560 = vadd.f32 0.0, %v2559
    %2561 = vmatmul.bf16.gmra.mxu0 %v2450
    %v2562 = vpop.f32.mrf.mxu0
    %v2563 = vadd.f32 0.0, %v2562
    %v2564 = vpop.f32.mrf.mxu0
    %v2565 = vadd.f32 0.0, %v2564
    %2566 = vmatmul.bf16.gmra.mxu0 %v2453
    %v2567 = vpop.f32.mrf.mxu0
    %v2568 = vadd.f32 0.0, %v2567
    %v2569 = vpop.f32.mrf.mxu0
    %v2570 = vadd.f32 0.0, %v2569
    %2571 = vmatmul.bf16.gmra.mxu0 %v2456
    %v2572 = vpop.f32.mrf.mxu0
    %v2573 = vadd.f32 0.0, %v2572
    %v2574 = vpop.f32.mrf.mxu0
    %v2575 = vadd.f32 0.0, %v2574
    %2576 = vmatmul.bf16.gmra.mxu0 %v2459
    %v2577 = vpop.f32.mrf.mxu0
    %v2578 = vadd.f32 0.0, %v2577
    %v2579 = vpop.f32.mrf.mxu0
    %v2580 = vadd.f32 0.0, %v2579
    %2581 = vmatmul.bf16.gmra.mxu0 %v2462
    %v2582 = vpop.f32.mrf.mxu0
    %v2583 = vadd.f32 0.0, %v2582
    %v2584 = vpop.f32.mrf.mxu0
    %v2585 = vadd.f32 0.0, %v2584
    %2586 = vmatmul.bf16.gmra.mxu0 %v2465
    %v2587 = vpop.f32.mrf.mxu0
    %v2588 = vadd.f32 0.0, %v2587
    %v2589 = vpop.f32.mrf.mxu0
    %v2590 = vadd.f32 0.0, %v2589
    %2591 = vmatmul.bf16.gmra.mxu0 %v2468
    %v2592 = vpop.f32.mrf.mxu0
    %v2593 = vadd.f32 0.0, %v2592
    %v2594 = vpop.f32.mrf.mxu0
    %v2595 = vadd.f32 0.0, %v2594
    %2596 = vmatmul.bf16.gmra.mxu0 %v2471
    %v2597 = vpop.f32.mrf.mxu0
    %v2598 = vadd.f32 0.0, %v2597
    %v2599 = vpop.f32.mrf.mxu0
    %v2600 = vadd.f32 0.0, %v2599
    %2601 = vmatmul.bf16.gmra.mxu0 %v2474
    %v2602 = vpop.f32.mrf.mxu0
    %v2603 = vadd.f32 0.0, %v2602
    %v2604 = vpop.f32.mrf.mxu0
    %v2605 = vadd.f32 0.0, %v2604
    %2606 = vmatmul.bf16.gmra.mxu0 %v2477
    %v2607 = vpop.f32.mrf.mxu0
    %v2608 = vadd.f32 0.0, %v2607
    %v2609 = vpop.f32.mrf.mxu0
    %v2610 = vadd.f32 0.0, %v2609
    %2611 = vmatmul.bf16.gmra.mxu0 %v2480
    %v2612 = vpop.f32.mrf.mxu0
    %v2613 = vadd.f32 0.0, %v2612
    %v2614 = vpop.f32.mrf.mxu0
    %v2615 = vadd.f32 0.0, %v2614
    %2616 = vmatmul.bf16.gmra.mxu0 %v2483
    %v2617 = vpop.f32.mrf.mxu0
    %v2618 = vadd.f32 0.0, %v2617
    %v2619 = vpop.f32.mrf.mxu0
    %v2620 = vadd.f32 0.0, %v2619
    %2621 = vmatmul.bf16.gmra.mxu0 %v2486
    %v2622 = vpop.f32.mrf.mxu0
    %v2623 = vadd.f32 0.0, %v2622
    %v2624 = vpop.f32.mrf.mxu0
    %v2625 = vadd.f32 0.0, %v2624
    %2626 = vmatmul.bf16.gmra.mxu0 %v2489
    %v2627 = vpop.f32.mrf.mxu0
    %v2628 = vadd.f32 0.0, %v2627
    %v2629 = vpop.f32.mrf.mxu0
    %v2630 = vadd.f32 0.0, %v2629
    %2631 = vmatmul.bf16.gmra.mxu0 %v2492
    %v2632 = vpop.f32.mrf.mxu0
    %v2633 = vadd.f32 0.0, %v2632
    %v2634 = vpop.f32.mrf.mxu0
    %v2635 = vadd.f32 0.0, %v2634
    %2636 = vmatmul.bf16.gmra.mxu0 %v2495
    %v2637 = vpop.f32.mrf.mxu0
    %v2638 = vadd.f32 0.0, %v2637
    %v2639 = vpop.f32.mrf.mxu0
    %v2640 = vadd.f32 0.0, %v2639
    %2641 = vmatmul.bf16.gmra.mxu0 %v2498
    %v2642 = vpop.f32.mrf.mxu0
    %v2643 = vadd.f32 0.0, %v2642
    %v2644 = vpop.f32.mrf.mxu0
    %v2645 = vadd.f32 0.0, %v2644
    %2646 = vmatmul.bf16.gmra.mxu0 %v2501
    %v2647 = vpop.f32.mrf.mxu0
    %v2648 = vadd.f32 0.0, %v2647
    %v2649 = vpop.f32.mrf.mxu0
    %v2650 = vadd.f32 0.0, %v2649
    %2651 = vmatmul.bf16.gmra.mxu0 %v2504
    %v2652 = vpop.f32.mrf.mxu0
    %v2653 = vadd.f32 0.0, %v2652
    %v2654 = vpop.f32.mrf.mxu0
    %v2655 = vadd.f32 0.0, %v2654
    %2656 = vmatmul.bf16.gmra.mxu0 %v2507
    %v2657 = vpop.f32.mrf.mxu0
    %v2658 = vadd.f32 0.0, %v2657
    %v2659 = vpop.f32.mrf.mxu0
    %v2660 = vadd.f32 0.0, %v2659
    %2661 = vmatmul.bf16.gmra.mxu0 %v2510
    %v2662 = vpop.f32.mrf.mxu0
    %v2663 = vadd.f32 0.0, %v2662
    %v2664 = vpop.f32.mrf.mxu0
    %v2665 = vadd.f32 0.0, %v2664
    %2666 = vmatmul.bf16.gmra.mxu0 %v2513
    %v2667 = vpop.f32.mrf.mxu0
    %v2668 = vadd.f32 0.0, %v2667
    %v2669 = vpop.f32.mrf.mxu0
    %v2670 = vadd.f32 0.0, %v2669
    %2671 = vmatmul.bf16.gmra.mxu0 %v2516
    %v2672 = vpop.f32.mrf.mxu0
    %v2673 = vadd.f32 0.0, %v2672
    %v2674 = vpop.f32.mrf.mxu0
    %v2675 = vadd.f32 0.0, %v2674
    %2676 = vmatmul.bf16.gmra.mxu0 %v2519
    %v2677 = vpop.f32.mrf.mxu0
    %v2678 = vadd.f32 0.0, %v2677
    %v2679 = vpop.f32.mrf.mxu0
    %v2680 = vadd.f32 0.0, %v2679
    %2681 = vmatmul.bf16.gmra.mxu0 %v2522
    %v2682 = vpop.f32.mrf.mxu0
    %v2683 = vadd.f32 0.0, %v2682
    %v2684 = vpop.f32.mrf.mxu0
    %v2685 = vadd.f32 0.0, %v2684
    %2686 = vmatmul.bf16.gmra.mxu0 %v2525
    %v2687 = vpop.f32.mrf.mxu0
    %v2688 = vadd.f32 0.0, %v2687
    %v2689 = vpop.f32.mrf.mxu0
    %v2690 = vadd.f32 0.0, %v2689
    %2691 = vmatmul.bf16.gmra.mxu0 %v2528
    %v2692 = vpop.f32.mrf.mxu0
    %v2693 = vadd.f32 0.0, %v2692
    %v2694 = vpop.f32.mrf.mxu0
    %v2695 = vadd.f32 0.0, %v2694
    %2696 = vmatmul.bf16.gmra.mxu0 %v2531
    %v2697 = vpop.f32.mrf.mxu0
    %v2698 = vadd.f32 0.0, %v2697
    %v2699 = vpop.f32.mrf.mxu0
    %v2700 = vadd.f32 0.0, %v2699
    %2701 = vdwg.mxu0
    %v2710 = vunpack.c.l.b16 %v2364
    %v2711 = vunpack.c.l.b16 %v2365
    %v2712 = vunpack.c.l.b16 %v2366
    %v2713 = vunpack.c.l.b16 %v2367
    %v2714 = vunpack.c.l.b16 %v2368
    %v2715 = vunpack.c.l.b16 %v2369
    %v2716 = vunpack.c.l.b16 %v2370
    %v2717 = vunpack.c.l.b16 %v2371
    %v2718 = vpack.c.b16 %v2711, %v2710
    %v2719 = vpack.c.b16 %v2713, %v2712
    %v2720 = vpack.c.b16 %v2715, %v2714
    %v2721 = vpack.c.b16 %v2717, %v2716
    %v2727 = vsel %vm2436, %v2331, 0
    %v2730 = vsel %vm2436, %v2332, 0
    %v2733 = vsel %vm2436, %v2333, 0
    %v2736 = vsel %vm2436, %v2334, 0
    %v2739 = vsel %vm2436, %v2335, 0
    %v2742 = vsel %vm2436, %v2336, 0
    %v2745 = vsel %vm2436, %v2337, 0
    %v2748 = vsel %vm2436, %v2338, 0
    %v2751 = vsel %vm2436, %v2339, 0
    %v2754 = vsel %vm2436, %v2340, 0
    %v2757 = vsel %vm2436, %v2341, 0
    %v2760 = vsel %vm2436, %v2342, 0
    %v2763 = vsel %vm2436, %v2343, 0
    %v2766 = vsel %vm2436, %v2344, 0
    %v2769 = vsel %vm2436, %v2345, 0
    %v2772 = vsel %vm2436, %v2346, 0
    %v2775 = vsel %vm2436, %v2347, 0
    %v2778 = vsel %vm2436, %v2348, 0
    %v2781 = vsel %vm2436, %v2349, 0
    %v2784 = vsel %vm2436, %v2350, 0
    %v2787 = vsel %vm2436, %v2351, 0
    %v2790 = vsel %vm2436, %v2352, 0
    %v2793 = vsel %vm2436, %v2353, 0
    %v2796 = vsel %vm2436, %v2354, 0
    %v2799 = vsel %vm2436, %v2355, 0
    %v2802 = vsel %vm2436, %v2356, 0
    %v2805 = vsel %vm2436, %v2357, 0
    %v2808 = vsel %vm2436, %v2358, 0
    %v2811 = vsel %vm2436, %v2359, 0
    %v2814 = vsel %vm2436, %v2360, 0
    %v2817 = vsel %vm2436, %v2361, 0
    %v2820 = vsel %vm2436, %v2362, 0
    %2822 = vmatpush.bf16.msra.mxu0 0
    %2823 = vmatpush.bf16.msra.mxu0 0
    %2824 = vmatpush.bf16.msra.mxu0 0
    %2825 = vmatpush.bf16.msra.mxu0 0
    %2826 = vmatpush.bf16.msra.mxu0 %v2721
    %2827 = vmatpush.bf16.msra.mxu0 %v2720
    %2828 = vmatpush.bf16.msra.mxu0 %v2719
    %2829 = vmatpush.bf16.msra.mxu0 %v2718
    %2830 = vmatmul.bf16.gmra.mxu0 %v2727
    %v2831 = vpop.f32.mrf.mxu0
    %v2832 = vadd.f32 %v2543, %v2831
    %v2833 = vpop.f32.mrf.mxu0
    %v2834 = vadd.f32 %v2545, %v2833
    %2835 = vmatmul.bf16.gmra.mxu0 %v2730
    %v2836 = vpop.f32.mrf.mxu0
    %v2837 = vadd.f32 %v2548, %v2836
    %v2838 = vpop.f32.mrf.mxu0
    %v2839 = vadd.f32 %v2550, %v2838
    %2840 = vmatmul.bf16.gmra.mxu0 %v2733
    %v2841 = vpop.f32.mrf.mxu0
    %v2842 = vadd.f32 %v2553, %v2841
    %v2843 = vpop.f32.mrf.mxu0
    %v2844 = vadd.f32 %v2555, %v2843
    %2845 = vmatmul.bf16.gmra.mxu0 %v2736
    %v2846 = vpop.f32.mrf.mxu0
    %v2847 = vadd.f32 %v2558, %v2846
    %v2848 = vpop.f32.mrf.mxu0
    %v2849 = vadd.f32 %v2560, %v2848
    %2850 = vmatmul.bf16.gmra.mxu0 %v2739
    %v2851 = vpop.f32.mrf.mxu0
    %v2852 = vadd.f32 %v2563, %v2851
    %v2853 = vpop.f32.mrf.mxu0
    %v2854 = vadd.f32 %v2565, %v2853
    %2855 = vmatmul.bf16.gmra.mxu0 %v2742
    %v2856 = vpop.f32.mrf.mxu0
    %v2857 = vadd.f32 %v2568, %v2856
    %v2858 = vpop.f32.mrf.mxu0
    %v2859 = vadd.f32 %v2570, %v2858
    %2860 = vmatmul.bf16.gmra.mxu0 %v2745
    %v2861 = vpop.f32.mrf.mxu0
    %v2862 = vadd.f32 %v2573, %v2861
    %v2863 = vpop.f32.mrf.mxu0
    %v2864 = vadd.f32 %v2575, %v2863
    %2865 = vmatmul.bf16.gmra.mxu0 %v2748
    %v2866 = vpop.f32.mrf.mxu0
    %v2867 = vadd.f32 %v2578, %v2866
    %v2868 = vpop.f32.mrf.mxu0
    %v2869 = vadd.f32 %v2580, %v2868
    %2870 = vmatmul.bf16.gmra.mxu0 %v2751
    %v2871 = vpop.f32.mrf.mxu0
    %v2872 = vadd.f32 %v2583, %v2871
    %v2873 = vpop.f32.mrf.mxu0
    %v2874 = vadd.f32 %v2585, %v2873
    %2875 = vmatmul.bf16.gmra.mxu0 %v2754
    %v2876 = vpop.f32.mrf.mxu0
    %v2877 = vadd.f32 %v2588, %v2876
    %v2878 = vpop.f32.mrf.mxu0
    %v2879 = vadd.f32 %v2590, %v2878
    %2880 = vmatmul.bf16.gmra.mxu0 %v2757
    %v2881 = vpop.f32.mrf.mxu0
    %v2882 = vadd.f32 %v2593, %v2881
    %v2883 = vpop.f32.mrf.mxu0
    %v2884 = vadd.f32 %v2595, %v2883
    %2885 = vmatmul.bf16.gmra.mxu0 %v2760
    %v2886 = vpop.f32.mrf.mxu0
    %v2887 = vadd.f32 %v2598, %v2886
    %v2888 = vpop.f32.mrf.mxu0
    %v2889 = vadd.f32 %v2600, %v2888
    %2890 = vmatmul.bf16.gmra.mxu0 %v2763
    %v2891 = vpop.f32.mrf.mxu0
    %v2892 = vadd.f32 %v2603, %v2891
    %v2893 = vpop.f32.mrf.mxu0
    %v2894 = vadd.f32 %v2605, %v2893
    %2895 = vmatmul.bf16.gmra.mxu0 %v2766
    %v2896 = vpop.f32.mrf.mxu0
    %v2897 = vadd.f32 %v2608, %v2896
    %v2898 = vpop.f32.mrf.mxu0
    %v2899 = vadd.f32 %v2610, %v2898
    %2900 = vmatmul.bf16.gmra.mxu0 %v2769
    %v2901 = vpop.f32.mrf.mxu0
    %v2902 = vadd.f32 %v2613, %v2901
    %v2903 = vpop.f32.mrf.mxu0
    %v2904 = vadd.f32 %v2615, %v2903
    %2905 = vmatmul.bf16.gmra.mxu0 %v2772
    %v2906 = vpop.f32.mrf.mxu0
    %v2907 = vadd.f32 %v2618, %v2906
    %v2908 = vpop.f32.mrf.mxu0
    %v2909 = vadd.f32 %v2620, %v2908
    %2910 = vmatmul.bf16.gmra.mxu0 %v2775
    %v2911 = vpop.f32.mrf.mxu0
    %v2912 = vadd.f32 %v2623, %v2911
    %v2913 = vpop.f32.mrf.mxu0
    %v2914 = vadd.f32 %v2625, %v2913
    %2915 = vmatmul.bf16.gmra.mxu0 %v2778
    %v2916 = vpop.f32.mrf.mxu0
    %v2917 = vadd.f32 %v2628, %v2916
    %v2918 = vpop.f32.mrf.mxu0
    %v2919 = vadd.f32 %v2630, %v2918
    %2920 = vmatmul.bf16.gmra.mxu0 %v2781
    %v2921 = vpop.f32.mrf.mxu0
    %v2922 = vadd.f32 %v2633, %v2921
    %v2923 = vpop.f32.mrf.mxu0
    %v2924 = vadd.f32 %v2635, %v2923
    %2925 = vmatmul.bf16.gmra.mxu0 %v2784
    %v2926 = vpop.f32.mrf.mxu0
    %v2927 = vadd.f32 %v2638, %v2926
    %v2928 = vpop.f32.mrf.mxu0
    %v2929 = vadd.f32 %v2640, %v2928
    %2930 = vmatmul.bf16.gmra.mxu0 %v2787
    %v2931 = vpop.f32.mrf.mxu0
    %v2932 = vadd.f32 %v2643, %v2931
    %v2933 = vpop.f32.mrf.mxu0
    %v2934 = vadd.f32 %v2645, %v2933
    %2935 = vmatmul.bf16.gmra.mxu0 %v2790
    %v2936 = vpop.f32.mrf.mxu0
    %v2937 = vadd.f32 %v2648, %v2936
    %v2938 = vpop.f32.mrf.mxu0
    %v2939 = vadd.f32 %v2650, %v2938
    %2940 = vmatmul.bf16.gmra.mxu0 %v2793
    %v2941 = vpop.f32.mrf.mxu0
    %v2942 = vadd.f32 %v2653, %v2941
    %v2943 = vpop.f32.mrf.mxu0
    %v2944 = vadd.f32 %v2655, %v2943
    %2945 = vmatmul.bf16.gmra.mxu0 %v2796
    %v2946 = vpop.f32.mrf.mxu0
    %v2947 = vadd.f32 %v2658, %v2946
    %v2948 = vpop.f32.mrf.mxu0
    %v2949 = vadd.f32 %v2660, %v2948
    %2950 = vmatmul.bf16.gmra.mxu0 %v2799
    %v2951 = vpop.f32.mrf.mxu0
    %v2952 = vadd.f32 %v2663, %v2951
    %v2953 = vpop.f32.mrf.mxu0
    %v2954 = vadd.f32 %v2665, %v2953
    %2955 = vmatmul.bf16.gmra.mxu0 %v2802
    %v2956 = vpop.f32.mrf.mxu0
    %v2957 = vadd.f32 %v2668, %v2956
    %v2958 = vpop.f32.mrf.mxu0
    %v2959 = vadd.f32 %v2670, %v2958
    %2960 = vmatmul.bf16.gmra.mxu0 %v2805
    %v2961 = vpop.f32.mrf.mxu0
    %v2962 = vadd.f32 %v2673, %v2961
    %v2963 = vpop.f32.mrf.mxu0
    %v2964 = vadd.f32 %v2675, %v2963
    %2965 = vmatmul.bf16.gmra.mxu0 %v2808
    %v2966 = vpop.f32.mrf.mxu0
    %v2967 = vadd.f32 %v2678, %v2966
    %v2968 = vpop.f32.mrf.mxu0
    %v2969 = vadd.f32 %v2680, %v2968
    %2970 = vmatmul.bf16.gmra.mxu0 %v2811
    %v2971 = vpop.f32.mrf.mxu0
    %v2972 = vadd.f32 %v2683, %v2971
    %v2973 = vpop.f32.mrf.mxu0
    %v2974 = vadd.f32 %v2685, %v2973
    %2975 = vmatmul.bf16.gmra.mxu0 %v2814
    %v2976 = vpop.f32.mrf.mxu0
    %v2977 = vadd.f32 %v2688, %v2976
    %v2978 = vpop.f32.mrf.mxu0
    %v2979 = vadd.f32 %v2690, %v2978
    %2980 = vmatmul.bf16.gmra.mxu0 %v2817
    %v2981 = vpop.f32.mrf.mxu0
    %v2982 = vadd.f32 %v2693, %v2981
    %v2983 = vpop.f32.mrf.mxu0
    %v2984 = vadd.f32 %v2695, %v2983
    %2985 = vmatmul.bf16.gmra.mxu0 %v2820
    %v2986 = vpop.f32.mrf.mxu0
    %v2987 = vadd.f32 %v2698, %v2986
    %v2988 = vpop.f32.mrf.mxu0
    %v2989 = vadd.f32 %v2700, %v2988
    %2990 = vdwg.mxu0
    %v2991 = vpack.c.bf16 %v2268, %v2267
    %v2992 = vpack.c.bf16 %v2270, %v2269
    %v2993 = vpack.c.bf16 %v2272, %v2271
    %v2994 = vpack.c.bf16 %v2274, %v2273
    %v2995 = vpack.c.bf16 %v2276, %v2275
    %v2996 = vpack.c.bf16 %v2278, %v2277
    %v2997 = vpack.c.bf16 %v2280, %v2279
    %v2998 = vpack.c.bf16 %v2282, %v2281
    %v2999 = vpack.c.bf16 %v2284, %v2283
    %v3000 = vpack.c.bf16 %v2286, %v2285
    %v3001 = vpack.c.bf16 %v2288, %v2287
    %v3002 = vpack.c.bf16 %v2290, %v2289
    %v3003 = vpack.c.bf16 %v2292, %v2291
    %v3004 = vpack.c.bf16 %v2294, %v2293
    %v3005 = vpack.c.bf16 %v2296, %v2295
    %v3006 = vpack.c.bf16 %v2298, %v2297
    %v3007 = vpack.c.bf16 %v2300, %v2299
    %v3008 = vpack.c.bf16 %v2302, %v2301
    %v3009 = vpack.c.bf16 %v2304, %v2303
    %v3010 = vpack.c.bf16 %v2306, %v2305
    %v3011 = vpack.c.bf16 %v2308, %v2307
    %v3012 = vpack.c.bf16 %v2310, %v2309
    %v3013 = vpack.c.bf16 %v2312, %v2311
    %v3014 = vpack.c.bf16 %v2314, %v2313
    %v3015 = vpack.c.bf16 %v2316, %v2315
    %v3016 = vpack.c.bf16 %v2318, %v2317
    %v3017 = vpack.c.bf16 %v2320, %v2319
    %v3018 = vpack.c.bf16 %v2322, %v2321
    %v3019 = vpack.c.bf16 %v2324, %v2323
    %v3020 = vpack.c.bf16 %v2326, %v2325
    %v3021 = vpack.c.bf16 %v2328, %v2327
    %v3022 = vpack.c.bf16 %v2330, %v2329
    %s3023 = scalar_lea.vmem %s5, 64
    %v3024 = vld [vmem:[%s3023] sm:$0xf]
    %v3025 = vld [vmem:[%s3023 + $0x4] sm:$0xf]
    %v3026 = vld [vmem:[%s3023 + $0x8] sm:$0xf]
    %v3027 = vld [vmem:[%s3023 + $0xc] sm:$0xf]
    %v3028 = vld [vmem:[%s3023 + $0x10] sm:$0xf]
    %v3029 = vld [vmem:[%s3023 + $0x14] sm:$0xf]
    %v3030 = vld [vmem:[%s3023 + $0x18] sm:$0xf]
    %v3031 = vld [vmem:[%s3023 + $0x1c] sm:$0xf]
    %v3040 = vunpack.c.l.b16 %v3024
    %v3041 = vunpack.c.l.b16 %v3025
    %v3042 = vunpack.c.l.b16 %v3026
    %v3043 = vunpack.c.l.b16 %v3027
    %v3044 = vunpack.c.l.b16 %v3028
    %v3045 = vunpack.c.l.b16 %v3029
    %v3046 = vunpack.c.l.b16 %v3030
    %v3047 = vunpack.c.l.b16 %v3031
    %v3048 = vpack.c.b16 %v3041, %v3040
    %v3049 = vpack.c.b16 %v3043, %v3042
    %v3050 = vpack.c.b16 %v3045, %v3044
    %v3051 = vpack.c.b16 %v3047, %v3046
    %v3057 = vsel %vm2436, %v2991, 0
    %v3060 = vsel %vm2436, %v2992, 0
    %v3063 = vsel %vm2436, %v2993, 0
    %v3066 = vsel %vm2436, %v2994, 0
    %v3069 = vsel %vm2436, %v2995, 0
    %v3072 = vsel %vm2436, %v2996, 0
    %v3075 = vsel %vm2436, %v2997, 0
    %v3078 = vsel %vm2436, %v2998, 0
    %v3081 = vsel %vm2436, %v2999, 0
    %v3084 = vsel %vm2436, %v3000, 0
    %v3087 = vsel %vm2436, %v3001, 0
    %v3090 = vsel %vm2436, %v3002, 0
    %v3093 = vsel %vm2436, %v3003, 0
    %v3096 = vsel %vm2436, %v3004, 0
    %v3099 = vsel %vm2436, %v3005, 0
    %v3102 = vsel %vm2436, %v3006, 0
    %v3105 = vsel %vm2436, %v3007, 0
    %v3108 = vsel %vm2436, %v3008, 0
    %v3111 = vsel %vm2436, %v3009, 0
    %v3114 = vsel %vm2436, %v3010, 0
    %v3117 = vsel %vm2436, %v3011, 0
    %v3120 = vsel %vm2436, %v3012, 0
    %v3123 = vsel %vm2436, %v3013, 0
    %v3126 = vsel %vm2436, %v3014, 0
    %v3129 = vsel %vm2436, %v3015, 0
    %v3132 = vsel %vm2436, %v3016, 0
    %v3135 = vsel %vm2436, %v3017, 0
    %v3138 = vsel %vm2436, %v3018, 0
    %v3141 = vsel %vm2436, %v3019, 0
    %v3144 = vsel %vm2436, %v3020, 0
    %v3147 = vsel %vm2436, %v3021, 0
    %v3150 = vsel %vm2436, %v3022, 0
    %3152 = vmatpush.bf16.msra.mxu0 0
    %3153 = vmatpush.bf16.msra.mxu0 0
    %3154 = vmatpush.bf16.msra.mxu0 0
    %3155 = vmatpush.bf16.msra.mxu0 0
    %3156 = vmatpush.bf16.msra.mxu0 %v3051
    %3157 = vmatpush.bf16.msra.mxu0 %v3050
    %3158 = vmatpush.bf16.msra.mxu0 %v3049
    %3159 = vmatpush.bf16.msra.mxu0 %v3048
    %3160 = vmatmul.bf16.gmra.mxu0 %v3057
    %v3161 = vpop.f32.mrf.mxu0
    %v3162 = vadd.f32 0.0, %v3161
    %v3163 = vpop.f32.mrf.mxu0
    %v3164 = vadd.f32 0.0, %v3163
    %3165 = vmatmul.bf16.gmra.mxu0 %v3060
    %v3166 = vpop.f32.mrf.mxu0
    %v3167 = vadd.f32 0.0, %v3166
    %v3168 = vpop.f32.mrf.mxu0
    %v3169 = vadd.f32 0.0, %v3168
    %3170 = vmatmul.bf16.gmra.mxu0 %v3063
    %v3171 = vpop.f32.mrf.mxu0
    %v3172 = vadd.f32 0.0, %v3171
    %v3173 = vpop.f32.mrf.mxu0
    %v3174 = vadd.f32 0.0, %v3173
    %3175 = vmatmul.bf16.gmra.mxu0 %v3066
    %v3176 = vpop.f32.mrf.mxu0
    %v3177 = vadd.f32 0.0, %v3176
    %v3178 = vpop.f32.mrf.mxu0
    %v3179 = vadd.f32 0.0, %v3178
    %3180 = vmatmul.bf16.gmra.mxu0 %v3069
    %v3181 = vpop.f32.mrf.mxu0
    %v3182 = vadd.f32 0.0, %v3181
    %v3183 = vpop.f32.mrf.mxu0
    %v3184 = vadd.f32 0.0, %v3183
    %3185 = vmatmul.bf16.gmra.mxu0 %v3072
    %v3186 = vpop.f32.mrf.mxu0
    %v3187 = vadd.f32 0.0, %v3186
    %v3188 = vpop.f32.mrf.mxu0
    %v3189 = vadd.f32 0.0, %v3188
    %3190 = vmatmul.bf16.gmra.mxu0 %v3075
    %v3191 = vpop.f32.mrf.mxu0
    %v3192 = vadd.f32 0.0, %v3191
    %v3193 = vpop.f32.mrf.mxu0
    %v3194 = vadd.f32 0.0, %v3193
    %3195 = vmatmul.bf16.gmra.mxu0 %v3078
    %v3196 = vpop.f32.mrf.mxu0
    %v3197 = vadd.f32 0.0, %v3196
    %v3198 = vpop.f32.mrf.mxu0
    %v3199 = vadd.f32 0.0, %v3198
    %3200 = vmatmul.bf16.gmra.mxu0 %v3081
    %v3201 = vpop.f32.mrf.mxu0
    %v3202 = vadd.f32 0.0, %v3201
    %v3203 = vpop.f32.mrf.mxu0
    %v3204 = vadd.f32 0.0, %v3203
    %3205 = vmatmul.bf16.gmra.mxu0 %v3084
    %v3206 = vpop.f32.mrf.mxu0
    %v3207 = vadd.f32 0.0, %v3206
    %v3208 = vpop.f32.mrf.mxu0
    %v3209 = vadd.f32 0.0, %v3208
    %3210 = vmatmul.bf16.gmra.mxu0 %v3087
    %v3211 = vpop.f32.mrf.mxu0
    %v3212 = vadd.f32 0.0, %v3211
    %v3213 = vpop.f32.mrf.mxu0
    %v3214 = vadd.f32 0.0, %v3213
    %3215 = vmatmul.bf16.gmra.mxu0 %v3090
    %v3216 = vpop.f32.mrf.mxu0
    %v3217 = vadd.f32 0.0, %v3216
    %v3218 = vpop.f32.mrf.mxu0
    %v3219 = vadd.f32 0.0, %v3218
    %3220 = vmatmul.bf16.gmra.mxu0 %v3093
    %v3221 = vpop.f32.mrf.mxu0
    %v3222 = vadd.f32 0.0, %v3221
    %v3223 = vpop.f32.mrf.mxu0
    %v3224 = vadd.f32 0.0, %v3223
    %3225 = vmatmul.bf16.gmra.mxu0 %v3096
    %v3226 = vpop.f32.mrf.mxu0
    %v3227 = vadd.f32 0.0, %v3226
    %v3228 = vpop.f32.mrf.mxu0
    %v3229 = vadd.f32 0.0, %v3228
    %3230 = vmatmul.bf16.gmra.mxu0 %v3099
    %v3231 = vpop.f32.mrf.mxu0
    %v3232 = vadd.f32 0.0, %v3231
    %v3233 = vpop.f32.mrf.mxu0
    %v3234 = vadd.f32 0.0, %v3233
    %3235 = vmatmul.bf16.gmra.mxu0 %v3102
    %v3236 = vpop.f32.mrf.mxu0
    %v3237 = vadd.f32 0.0, %v3236
    %v3238 = vpop.f32.mrf.mxu0
    %v3239 = vadd.f32 0.0, %v3238
    %3240 = vmatmul.bf16.gmra.mxu0 %v3105
    %v3241 = vpop.f32.mrf.mxu0
    %v3242 = vadd.f32 0.0, %v3241
    %v3243 = vpop.f32.mrf.mxu0
    %v3244 = vadd.f32 0.0, %v3243
    %3245 = vmatmul.bf16.gmra.mxu0 %v3108
    %v3246 = vpop.f32.mrf.mxu0
    %v3247 = vadd.f32 0.0, %v3246
    %v3248 = vpop.f32.mrf.mxu0
    %v3249 = vadd.f32 0.0, %v3248
    %3250 = vmatmul.bf16.gmra.mxu0 %v3111
    %v3251 = vpop.f32.mrf.mxu0
    %v3252 = vadd.f32 0.0, %v3251
    %v3253 = vpop.f32.mrf.mxu0
    %v3254 = vadd.f32 0.0, %v3253
    %3255 = vmatmul.bf16.gmra.mxu0 %v3114
    %v3256 = vpop.f32.mrf.mxu0
    %v3257 = vadd.f32 0.0, %v3256
    %v3258 = vpop.f32.mrf.mxu0
    %v3259 = vadd.f32 0.0, %v3258
    %3260 = vmatmul.bf16.gmra.mxu0 %v3117
    %v3261 = vpop.f32.mrf.mxu0
    %v3262 = vadd.f32 0.0, %v3261
    %v3263 = vpop.f32.mrf.mxu0
    %v3264 = vadd.f32 0.0, %v3263
    %3265 = vmatmul.bf16.gmra.mxu0 %v3120
    %v3266 = vpop.f32.mrf.mxu0
    %v3267 = vadd.f32 0.0, %v3266
    %v3268 = vpop.f32.mrf.mxu0
    %v3269 = vadd.f32 0.0, %v3268
    %3270 = vmatmul.bf16.gmra.mxu0 %v3123
    %v3271 = vpop.f32.mrf.mxu0
    %v3272 = vadd.f32 0.0, %v3271
    %v3273 = vpop.f32.mrf.mxu0
    %v3274 = vadd.f32 0.0, %v3273
    %3275 = vmatmul.bf16.gmra.mxu0 %v3126
    %v3276 = vpop.f32.mrf.mxu0
    %v3277 = vadd.f32 0.0, %v3276
    %v3278 = vpop.f32.mrf.mxu0
    %v3279 = vadd.f32 0.0, %v3278
    %3280 = vmatmul.bf16.gmra.mxu0 %v3129
    %v3281 = vpop.f32.mrf.mxu0
    %v3282 = vadd.f32 0.0, %v3281
    %v3283 = vpop.f32.mrf.mxu0
    %v3284 = vadd.f32 0.0, %v3283
    %3285 = vmatmul.bf16.gmra.mxu0 %v3132
    %v3286 = vpop.f32.mrf.mxu0
    %v3287 = vadd.f32 0.0, %v3286
    %v3288 = vpop.f32.mrf.mxu0
    %v3289 = vadd.f32 0.0, %v3288
    %3290 = vmatmul.bf16.gmra.mxu0 %v3135
    %v3291 = vpop.f32.mrf.mxu0
    %v3292 = vadd.f32 0.0, %v3291
    %v3293 = vpop.f32.mrf.mxu0
    %v3294 = vadd.f32 0.0, %v3293
    %3295 = vmatmul.bf16.gmra.mxu0 %v3138
    %v3296 = vpop.f32.mrf.mxu0
    %v3297 = vadd.f32 0.0, %v3296
    %v3298 = vpop.f32.mrf.mxu0
    %v3299 = vadd.f32 0.0, %v3298
    %3300 = vmatmul.bf16.gmra.mxu0 %v3141
    %v3301 = vpop.f32.mrf.mxu0
    %v3302 = vadd.f32 0.0, %v3301
    %v3303 = vpop.f32.mrf.mxu0
    %v3304 = vadd.f32 0.0, %v3303
    %3305 = vmatmul.bf16.gmra.mxu0 %v3144
    %v3306 = vpop.f32.mrf.mxu0
    %v3307 = vadd.f32 0.0, %v3306
    %v3308 = vpop.f32.mrf.mxu0
    %v3309 = vadd.f32 0.0, %v3308
    %3310 = vmatmul.bf16.gmra.mxu0 %v3147
    %v3311 = vpop.f32.mrf.mxu0
    %v3312 = vadd.f32 0.0, %v3311
    %v3313 = vpop.f32.mrf.mxu0
    %v3314 = vadd.f32 0.0, %v3313
    %3315 = vmatmul.bf16.gmra.mxu0 %v3150
    %v3316 = vpop.f32.mrf.mxu0
    %v3317 = vadd.f32 0.0, %v3316
    %v3318 = vpop.f32.mrf.mxu0
    %v3319 = vadd.f32 0.0, %v3318
    %3320 = vdwg.mxu0
    %v3321 = vadd.f32 %v2832, %v3162
    %v3322 = vadd.f32 %v2834, %v3164
    %v3323 = vadd.f32 %v2837, %v3167
    %v3324 = vadd.f32 %v2839, %v3169
    %v3325 = vadd.f32 %v2842, %v3172
    %v3326 = vadd.f32 %v2844, %v3174
    %v3327 = vadd.f32 %v2847, %v3177
    %v3328 = vadd.f32 %v2849, %v3179
    %v3329 = vadd.f32 %v2852, %v3182
    %v3330 = vadd.f32 %v2854, %v3184
    %v3331 = vadd.f32 %v2857, %v3187
    %v3332 = vadd.f32 %v2859, %v3189
    %v3333 = vadd.f32 %v2862, %v3192
    %v3334 = vadd.f32 %v2864, %v3194
    %v3335 = vadd.f32 %v2867, %v3197
    %v3336 = vadd.f32 %v2869, %v3199
    %v3337 = vadd.f32 %v2872, %v3202
    %v3338 = vadd.f32 %v2874, %v3204
    %v3339 = vadd.f32 %v2877, %v3207
    %v3340 = vadd.f32 %v2879, %v3209
    %v3341 = vadd.f32 %v2882, %v3212
    %v3342 = vadd.f32 %v2884, %v3214
    %v3343 = vadd.f32 %v2887, %v3217
    %v3344 = vadd.f32 %v2889, %v3219
    %v3345 = vadd.f32 %v2892, %v3222
    %v3346 = vadd.f32 %v2894, %v3224
    %v3347 = vadd.f32 %v2897, %v3227
    %v3348 = vadd.f32 %v2899, %v3229
    %v3349 = vadd.f32 %v2902, %v3232
    %v3350 = vadd.f32 %v2904, %v3234
    %v3351 = vadd.f32 %v2907, %v3237
    %v3352 = vadd.f32 %v2909, %v3239
    %v3353 = vadd.f32 %v2912, %v3242
    %v3354 = vadd.f32 %v2914, %v3244
    %v3355 = vadd.f32 %v2917, %v3247
    %v3356 = vadd.f32 %v2919, %v3249
    %v3357 = vadd.f32 %v2922, %v3252
    %v3358 = vadd.f32 %v2924, %v3254
    %v3359 = vadd.f32 %v2927, %v3257
    %v3360 = vadd.f32 %v2929, %v3259
    %v3361 = vadd.f32 %v2932, %v3262
    %v3362 = vadd.f32 %v2934, %v3264
    %v3363 = vadd.f32 %v2937, %v3267
    %v3364 = vadd.f32 %v2939, %v3269
    %v3365 = vadd.f32 %v2942, %v3272
    %v3366 = vadd.f32 %v2944, %v3274
    %v3367 = vadd.f32 %v2947, %v3277
    %v3368 = vadd.f32 %v2949, %v3279
    %v3369 = vadd.f32 %v2952, %v3282
    %v3370 = vadd.f32 %v2954, %v3284
    %v3371 = vadd.f32 %v2957, %v3287
    %v3372 = vadd.f32 %v2959, %v3289
    %v3373 = vadd.f32 %v2962, %v3292
    %v3374 = vadd.f32 %v2964, %v3294
    %v3375 = vadd.f32 %v2967, %v3297
    %v3376 = vadd.f32 %v2969, %v3299
    %v3377 = vadd.f32 %v2972, %v3302
    %v3378 = vadd.f32 %v2974, %v3304
    %v3379 = vadd.f32 %v2977, %v3307
    %v3380 = vadd.f32 %v2979, %v3309
    %v3381 = vadd.f32 %v2982, %v3312
    %v3382 = vadd.f32 %v2984, %v3314
    %v3383 = vadd.f32 %v2987, %v3317
    %v3384 = vadd.f32 %v2989, %v3319
    %v3385 = vld [vmem:[%s6] sm:$0x1]
    %v3387 = vperm.slane %v3385, 0
    %v3389 = vadd.f32 %v3321, %v3387
    %v3390 = vadd.f32 %v3322, %v3387
    %v3391 = vadd.f32 %v3323, %v3387
    %v3392 = vadd.f32 %v3324, %v3387
    %v3393 = vadd.f32 %v3325, %v3387
    %v3394 = vadd.f32 %v3326, %v3387
    %v3395 = vadd.f32 %v3327, %v3387
    %v3396 = vadd.f32 %v3328, %v3387
    %v3397 = vadd.f32 %v3329, %v3387
    %v3398 = vadd.f32 %v3330, %v3387
    %v3399 = vadd.f32 %v3331, %v3387
    %v3400 = vadd.f32 %v3332, %v3387
    %v3401 = vadd.f32 %v3333, %v3387
    %v3402 = vadd.f32 %v3334, %v3387
    %v3403 = vadd.f32 %v3335, %v3387
    %v3404 = vadd.f32 %v3336, %v3387
    %v3405 = vadd.f32 %v3337, %v3387
    %v3406 = vadd.f32 %v3338, %v3387
    %v3407 = vadd.f32 %v3339, %v3387
    %v3408 = vadd.f32 %v3340, %v3387
    %v3409 = vadd.f32 %v3341, %v3387
    %v3410 = vadd.f32 %v3342, %v3387
    %v3411 = vadd.f32 %v3343, %v3387
    %v3412 = vadd.f32 %v3344, %v3387
    %v3413 = vadd.f32 %v3345, %v3387
    %v3414 = vadd.f32 %v3346, %v3387
    %v3415 = vadd.f32 %v3347, %v3387
    %v3416 = vadd.f32 %v3348, %v3387
    %v3417 = vadd.f32 %v3349, %v3387
    %v3418 = vadd.f32 %v3350, %v3387
    %v3419 = vadd.f32 %v3351, %v3387
    %v3420 = vadd.f32 %v3352, %v3387
    %v3421 = vadd.f32 %v3353, %v3387
    %v3422 = vadd.f32 %v3354, %v3387
    %v3423 = vadd.f32 %v3355, %v3387
    %v3424 = vadd.f32 %v3356, %v3387
    %v3425 = vadd.f32 %v3357, %v3387
    %v3426 = vadd.f32 %v3358, %v3387
    %v3427 = vadd.f32 %v3359, %v3387
    %v3428 = vadd.f32 %v3360, %v3387
    %v3429 = vadd.f32 %v3361, %v3387
    %v3430 = vadd.f32 %v3362, %v3387
    %v3431 = vadd.f32 %v3363, %v3387
    %v3432 = vadd.f32 %v3364, %v3387
    %v3433 = vadd.f32 %v3365, %v3387
    %v3434 = vadd.f32 %v3366, %v3387
    %v3435 = vadd.f32 %v3367, %v3387
    %v3436 = vadd.f32 %v3368, %v3387
    %v3437 = vadd.f32 %v3369, %v3387
    %v3438 = vadd.f32 %v3370, %v3387
    %v3439 = vadd.f32 %v3371, %v3387
    %v3440 = vadd.f32 %v3372, %v3387
    %v3441 = vadd.f32 %v3373, %v3387
    %v3442 = vadd.f32 %v3374, %v3387
    %v3443 = vadd.f32 %v3375, %v3387
    %v3444 = vadd.f32 %v3376, %v3387
    %v3445 = vadd.f32 %v3377, %v3387
    %v3446 = vadd.f32 %v3378, %v3387
    %v3447 = vadd.f32 %v3379, %v3387
    %v3448 = vadd.f32 %v3380, %v3387
    %v3449 = vadd.f32 %v3381, %v3387
    %v3450 = vadd.f32 %v3382, %v3387
    %v3451 = vadd.f32 %v3383, %v3387
    %v3452 = vadd.f32 %v3384, %v3387
    %v3453 = vmax.f32 %v3389, 0.0
    %v3454 = vmax.f32 %v3390, 0.0
    %v3455 = vmax.f32 %v3391, 0.0
    %v3456 = vmax.f32 %v3392, 0.0
    %v3457 = vmax.f32 %v3393, 0.0
    %v3458 = vmax.f32 %v3394, 0.0
    %v3459 = vmax.f32 %v3395, 0.0
    %v3460 = vmax.f32 %v3396, 0.0
    %v3461 = vmax.f32 %v3397, 0.0
    %v3462 = vmax.f32 %v3398, 0.0
    %v3463 = vmax.f32 %v3399, 0.0
    %v3464 = vmax.f32 %v3400, 0.0
    %v3465 = vmax.f32 %v3401, 0.0
    %v3466 = vmax.f32 %v3402, 0.0
    %v3467 = vmax.f32 %v3403, 0.0
    %v3468 = vmax.f32 %v3404, 0.0
    %v3469 = vmax.f32 %v3405, 0.0
    %v3470 = vmax.f32 %v3406, 0.0
    %v3471 = vmax.f32 %v3407, 0.0
    %v3472 = vmax.f32 %v3408, 0.0
    %v3473 = vmax.f32 %v3409, 0.0
    %v3474 = vmax.f32 %v3410, 0.0
    %v3475 = vmax.f32 %v3411, 0.0
    %v3476 = vmax.f32 %v3412, 0.0
    %v3477 = vmax.f32 %v3413, 0.0
    %v3478 = vmax.f32 %v3414, 0.0
    %v3479 = vmax.f32 %v3415, 0.0
    %v3480 = vmax.f32 %v3416, 0.0
    %v3481 = vmax.f32 %v3417, 0.0
    %v3482 = vmax.f32 %v3418, 0.0
    %v3483 = vmax.f32 %v3419, 0.0
    %v3484 = vmax.f32 %v3420, 0.0
    %v3485 = vmax.f32 %v3421, 0.0
    %v3486 = vmax.f32 %v3422, 0.0
    %v3487 = vmax.f32 %v3423, 0.0
    %v3488 = vmax.f32 %v3424, 0.0
    %v3489 = vmax.f32 %v3425, 0.0
    %v3490 = vmax.f32 %v3426, 0.0
    %v3491 = vmax.f32 %v3427, 0.0
    %v3492 = vmax.f32 %v3428, 0.0
    %v3493 = vmax.f32 %v3429, 0.0
    %v3494 = vmax.f32 %v3430, 0.0
    %v3495 = vmax.f32 %v3431, 0.0
    %v3496 = vmax.f32 %v3432, 0.0
    %v3497 = vmax.f32 %v3433, 0.0
    %v3498 = vmax.f32 %v3434, 0.0
    %v3499 = vmax.f32 %v3435, 0.0
    %v3500 = vmax.f32 %v3436, 0.0
    %v3501 = vmax.f32 %v3437, 0.0
    %v3502 = vmax.f32 %v3438, 0.0
    %v3503 = vmax.f32 %v3439, 0.0
    %v3504 = vmax.f32 %v3440, 0.0
    %v3505 = vmax.f32 %v3441, 0.0
    %v3506 = vmax.f32 %v3442, 0.0
    %v3507 = vmax.f32 %v3443, 0.0
    %v3508 = vmax.f32 %v3444, 0.0
    %v3509 = vmax.f32 %v3445, 0.0
    %v3510 = vmax.f32 %v3446, 0.0
    %v3511 = vmax.f32 %v3447, 0.0
    %v3512 = vmax.f32 %v3448, 0.0
    %v3513 = vmax.f32 %v3449, 0.0
    %v3514 = vmax.f32 %v3450, 0.0
    %v3515 = vmax.f32 %v3451, 0.0
    %v3516 = vmax.f32 %v3452, 0.0
    %v3517 = vld [vmem:[%s7] sm:$0x1]
    %v3519 = vperm.slane %v3517, 0
    %v3521 = vmul.f32 %v3453, %v3519
    %v3522 = vmul.f32 %v3454, %v3519
    %v3523 = vmul.f32 %v3455, %v3519
    %v3524 = vmul.f32 %v3456, %v3519
    %v3525 = vmul.f32 %v3457, %v3519
    %v3526 = vmul.f32 %v3458, %v3519
    %v3527 = vmul.f32 %v3459, %v3519
    %v3528 = vmul.f32 %v3460, %v3519
    %v3529 = vmul.f32 %v3461, %v3519
    %v3530 = vmul.f32 %v3462, %v3519
    %v3531 = vmul.f32 %v3463, %v3519
    %v3532 = vmul.f32 %v3464, %v3519
    %v3533 = vmul.f32 %v3465, %v3519
    %v3534 = vmul.f32 %v3466, %v3519
    %v3535 = vmul.f32 %v3467, %v3519
    %v3536 = vmul.f32 %v3468, %v3519
    %v3537 = vmul.f32 %v3469, %v3519
    %v3538 = vmul.f32 %v3470, %v3519
    %v3539 = vmul.f32 %v3471, %v3519
    %v3540 = vmul.f32 %v3472, %v3519
    %v3541 = vmul.f32 %v3473, %v3519
    %v3542 = vmul.f32 %v3474, %v3519
    %v3543 = vmul.f32 %v3475, %v3519
    %v3544 = vmul.f32 %v3476, %v3519
    %v3545 = vmul.f32 %v3477, %v3519
    %v3546 = vmul.f32 %v3478, %v3519
    %v3547 = vmul.f32 %v3479, %v3519
    %v3548 = vmul.f32 %v3480, %v3519
    %v3549 = vmul.f32 %v3481, %v3519
    %v3550 = vmul.f32 %v3482, %v3519
    %v3551 = vmul.f32 %v3483, %v3519
    %v3552 = vmul.f32 %v3484, %v3519
    %v3553 = vmul.f32 %v3485, %v3519
    %v3554 = vmul.f32 %v3486, %v3519
    %v3555 = vmul.f32 %v3487, %v3519
    %v3556 = vmul.f32 %v3488, %v3519
    %v3557 = vmul.f32 %v3489, %v3519
    %v3558 = vmul.f32 %v3490, %v3519
    %v3559 = vmul.f32 %v3491, %v3519
    %v3560 = vmul.f32 %v3492, %v3519
    %v3561 = vmul.f32 %v3493, %v3519
    %v3562 = vmul.f32 %v3494, %v3519
    %v3563 = vmul.f32 %v3495, %v3519
    %v3564 = vmul.f32 %v3496, %v3519
    %v3565 = vmul.f32 %v3497, %v3519
    %v3566 = vmul.f32 %v3498, %v3519
    %v3567 = vmul.f32 %v3499, %v3519
    %v3568 = vmul.f32 %v3500, %v3519
    %v3569 = vmul.f32 %v3501, %v3519
    %v3570 = vmul.f32 %v3502, %v3519
    %v3571 = vmul.f32 %v3503, %v3519
    %v3572 = vmul.f32 %v3504, %v3519
    %v3573 = vmul.f32 %v3505, %v3519
    %v3574 = vmul.f32 %v3506, %v3519
    %v3575 = vmul.f32 %v3507, %v3519
    %v3576 = vmul.f32 %v3508, %v3519
    %v3577 = vmul.f32 %v3509, %v3519
    %v3578 = vmul.f32 %v3510, %v3519
    %v3579 = vmul.f32 %v3511, %v3519
    %v3580 = vmul.f32 %v3512, %v3519
    %v3581 = vmul.f32 %v3513, %v3519
    %v3582 = vmul.f32 %v3514, %v3519
    %v3583 = vmul.f32 %v3515, %v3519
    %v3584 = vmul.f32 %v3516, %v3519
    %v3585 = vld [vmem:[%s8] sm:$0x1]
    %v3587 = vperm.slane %v3585, 0
    %v3589 = vadd.f32 %v3521, %v3587
    %v3590 = vadd.f32 %v3522, %v3587
    %v3591 = vadd.f32 %v3523, %v3587
    %v3592 = vadd.f32 %v3524, %v3587
    %v3593 = vadd.f32 %v3525, %v3587
    %v3594 = vadd.f32 %v3526, %v3587
    %v3595 = vadd.f32 %v3527, %v3587
    %v3596 = vadd.f32 %v3528, %v3587
    %v3597 = vadd.f32 %v3529, %v3587
    %v3598 = vadd.f32 %v3530, %v3587
    %v3599 = vadd.f32 %v3531, %v3587
    %v3600 = vadd.f32 %v3532, %v3587
    %v3601 = vadd.f32 %v3533, %v3587
    %v3602 = vadd.f32 %v3534, %v3587
    %v3603 = vadd.f32 %v3535, %v3587
    %v3604 = vadd.f32 %v3536, %v3587
    %v3605 = vadd.f32 %v3537, %v3587
    %v3606 = vadd.f32 %v3538, %v3587
    %v3607 = vadd.f32 %v3539, %v3587
    %v3608 = vadd.f32 %v3540, %v3587
    %v3609 = vadd.f32 %v3541, %v3587
    %v3610 = vadd.f32 %v3542, %v3587
    %v3611 = vadd.f32 %v3543, %v3587
    %v3612 = vadd.f32 %v3544, %v3587
    %v3613 = vadd.f32 %v3545, %v3587
    %v3614 = vadd.f32 %v3546, %v3587
    %v3615 = vadd.f32 %v3547, %v3587
    %v3616 = vadd.f32 %v3548, %v3587
    %v3617 = vadd.f32 %v3549, %v3587
    %v3618 = vadd.f32 %v3550, %v3587
    %v3619 = vadd.f32 %v3551, %v3587
    %v3620 = vadd.f32 %v3552, %v3587
    %v3621 = vadd.f32 %v3553, %v3587
    %v3622 = vadd.f32 %v3554, %v3587
    %v3623 = vadd.f32 %v3555, %v3587
    %v3624 = vadd.f32 %v3556, %v3587
    %v3625 = vadd.f32 %v3557, %v3587
    %v3626 = vadd.f32 %v3558, %v3587
    %v3627 = vadd.f32 %v3559, %v3587
    %v3628 = vadd.f32 %v3560, %v3587
    %v3629 = vadd.f32 %v3561, %v3587
    %v3630 = vadd.f32 %v3562, %v3587
    %v3631 = vadd.f32 %v3563, %v3587
    %v3632 = vadd.f32 %v3564, %v3587
    %v3633 = vadd.f32 %v3565, %v3587
    %v3634 = vadd.f32 %v3566, %v3587
    %v3635 = vadd.f32 %v3567, %v3587
    %v3636 = vadd.f32 %v3568, %v3587
    %v3637 = vadd.f32 %v3569, %v3587
    %v3638 = vadd.f32 %v3570, %v3587
    %v3639 = vadd.f32 %v3571, %v3587
    %v3640 = vadd.f32 %v3572, %v3587
    %v3641 = vadd.f32 %v3573, %v3587
    %v3642 = vadd.f32 %v3574, %v3587
    %v3643 = vadd.f32 %v3575, %v3587
    %v3644 = vadd.f32 %v3576, %v3587
    %v3645 = vadd.f32 %v3577, %v3587
    %v3646 = vadd.f32 %v3578, %v3587
    %v3647 = vadd.f32 %v3579, %v3587
    %v3648 = vadd.f32 %v3580, %v3587
    %v3649 = vadd.f32 %v3581, %v3587
    %v3650 = vadd.f32 %v3582, %v3587
    %v3651 = vadd.f32 %v3583, %v3587
    %v3652 = vadd.f32 %v3584, %v3587
    %v3653 = vrot.slane %v3589, 7
    %v3654 = vrot.slane %v3590, 7
    %v3655 = vrot.slane %v3591, 7
    %v3656 = vrot.slane %v3592, 7
    %v3657 = vrot.slane %v3593, 7
    %v3658 = vrot.slane %v3594, 7
    %v3659 = vrot.slane %v3595, 7
    %v3660 = vrot.slane %v3596, 7
    %v3661 = vrot.slane %v3597, 7
    %v3662 = vrot.slane %v3598, 7
    %v3663 = vrot.slane %v3599, 7
    %v3664 = vrot.slane %v3600, 7
    %v3665 = vrot.slane %v3601, 7
    %v3666 = vrot.slane %v3602, 7
    %v3667 = vrot.slane %v3603, 7
    %v3668 = vrot.slane %v3604, 7
    %v3669 = vrot.slane %v3605, 7
    %v3670 = vrot.slane %v3606, 7
    %v3671 = vrot.slane %v3607, 7
    %v3672 = vrot.slane %v3608, 7
    %v3673 = vrot.slane %v3609, 7
    %v3674 = vrot.slane %v3610, 7
    %v3675 = vrot.slane %v3611, 7
    %v3676 = vrot.slane %v3612, 7
    %v3677 = vrot.slane %v3613, 7
    %v3678 = vrot.slane %v3614, 7
    %v3679 = vrot.slane %v3615, 7
    %v3680 = vrot.slane %v3616, 7
    %v3681 = vrot.slane %v3617, 7
    %v3682 = vrot.slane %v3618, 7
    %v3683 = vrot.slane %v3619, 7
    %v3684 = vrot.slane %v3620, 7
    %v3685 = vrot.slane %v3621, 7
    %v3686 = vrot.slane %v3622, 7
    %v3687 = vrot.slane %v3623, 7
    %v3688 = vrot.slane %v3624, 7
    %v3689 = vrot.slane %v3625, 7
    %v3690 = vrot.slane %v3626, 7
    %v3691 = vrot.slane %v3627, 7
    %v3692 = vrot.slane %v3628, 7
    %v3693 = vrot.slane %v3629, 7
    %v3694 = vrot.slane %v3630, 7
    %v3695 = vrot.slane %v3631, 7
    %v3696 = vrot.slane %v3632, 7
    %v3697 = vrot.slane %v3633, 7
    %v3698 = vrot.slane %v3634, 7
    %v3699 = vrot.slane %v3635, 7
    %v3700 = vrot.slane %v3636, 7
    %v3701 = vrot.slane %v3637, 7
    %v3702 = vrot.slane %v3638, 7
    %v3703 = vrot.slane %v3639, 7
    %v3704 = vrot.slane %v3640, 7
    %v3705 = vrot.slane %v3641, 7
    %v3706 = vrot.slane %v3642, 7
    %v3707 = vrot.slane %v3643, 7
    %v3708 = vrot.slane %v3644, 7
    %v3709 = vrot.slane %v3645, 7
    %v3710 = vrot.slane %v3646, 7
    %v3711 = vrot.slane %v3647, 7
    %v3712 = vrot.slane %v3648, 7
    %v3713 = vrot.slane %v3649, 7
    %v3714 = vrot.slane %v3650, 7
    %v3715 = vrot.slane %v3651, 7
    %v3716 = vrot.slane %v3652, 7
    %v3717 = vsel %vm1753, %v3715, %v3716
    %v3718 = vsel %vm1753, %v3714, %v3715
    %v3719 = vsel %vm1753, %v3713, %v3714
    %v3720 = vsel %vm1753, %v3712, %v3713
    %v3721 = vsel %vm1753, %v3711, %v3712
    %v3722 = vsel %vm1753, %v3710, %v3711
    %v3723 = vsel %vm1753, %v3709, %v3710
    %v3724 = vsel %vm1753, %v3708, %v3709
    %v3725 = vsel %vm1753, %v3707, %v3708
    %v3726 = vsel %vm1753, %v3706, %v3707
    %v3727 = vsel %vm1753, %v3705, %v3706
    %v3728 = vsel %vm1753, %v3704, %v3705
    %v3729 = vsel %vm1753, %v3703, %v3704
    %v3730 = vsel %vm1753, %v3702, %v3703
    %v3731 = vsel %vm1753, %v3701, %v3702
    %v3732 = vsel %vm1753, %v3700, %v3701
    %v3733 = vsel %vm1753, %v3699, %v3700
    %v3734 = vsel %vm1753, %v3698, %v3699
    %v3735 = vsel %vm1753, %v3697, %v3698
    %v3736 = vsel %vm1753, %v3696, %v3697
    %v3737 = vsel %vm1753, %v3695, %v3696
    %v3738 = vsel %vm1753, %v3694, %v3695
    %v3739 = vsel %vm1753, %v3693, %v3694
    %v3740 = vsel %vm1753, %v3692, %v3693
    %v3741 = vsel %vm1753, %v3691, %v3692
    %v3742 = vsel %vm1753, %v3690, %v3691
    %v3743 = vsel %vm1753, %v3689, %v3690
    %v3744 = vsel %vm1753, %v3688, %v3689
    %v3745 = vsel %vm1753, %v3687, %v3688
    %v3746 = vsel %vm1753, %v3686, %v3687
    %v3747 = vsel %vm1753, %v3685, %v3686
    %v3748 = vsel %vm1753, %v3684, %v3685
    %v3749 = vsel %vm1753, %v3683, %v3684
    %v3750 = vsel %vm1753, %v3682, %v3683
    %v3751 = vsel %vm1753, %v3681, %v3682
    %v3752 = vsel %vm1753, %v3680, %v3681
    %v3753 = vsel %vm1753, %v3679, %v3680
    %v3754 = vsel %vm1753, %v3678, %v3679
    %v3755 = vsel %vm1753, %v3677, %v3678
    %v3756 = vsel %vm1753, %v3676, %v3677
    %v3757 = vsel %vm1753, %v3675, %v3676
    %v3758 = vsel %vm1753, %v3674, %v3675
    %v3759 = vsel %vm1753, %v3673, %v3674
    %v3760 = vsel %vm1753, %v3672, %v3673
    %v3761 = vsel %vm1753, %v3671, %v3672
    %v3762 = vsel %vm1753, %v3670, %v3671
    %v3763 = vsel %vm1753, %v3669, %v3670
    %v3764 = vsel %vm1753, %v3668, %v3669
    %v3765 = vsel %vm1753, %v3667, %v3668
    %v3766 = vsel %vm1753, %v3666, %v3667
    %v3767 = vsel %vm1753, %v3665, %v3666
    %v3768 = vsel %vm1753, %v3664, %v3665
    %v3769 = vsel %vm1753, %v3663, %v3664
    %v3770 = vsel %vm1753, %v3662, %v3663
    %v3771 = vsel %vm1753, %v3661, %v3662
    %v3772 = vsel %vm1753, %v3660, %v3661
    %v3773 = vsel %vm1753, %v3659, %v3660
    %v3774 = vsel %vm1753, %v3658, %v3659
    %v3775 = vsel %vm1753, %v3657, %v3658
    %v3776 = vsel %vm1753, %v3656, %v3657
    %v3777 = vsel %vm1753, %v3655, %v3656
    %v3778 = vsel %vm1753, %v3654, %v3655
    %v3779 = vsel %vm1753, %v3653, %v3654
    %v3780 = vsel %vm1753, %v3716, %v3653
    %v3781 = vsel %vm1882, 0.0, %v3780
    %v3782 = vsel %vm1883, 0.0, %v3779
    %v3783 = vsel %vm1884, 0.0, %v3778
    %v3784 = vsel %vm1885, 0.0, %v3777
    %v3785 = vsel %vm1886, 0.0, %v3776
    %v3786 = vsel %vm1887, 0.0, %v3775
    %v3787 = vsel %vm1888, 0.0, %v3774
    %v3788 = vsel %vm1889, 0.0, %v3773
    %v3789 = vsel %vm1890, 0.0, %v3772
    %v3790 = vsel %vm1891, 0.0, %v3771
    %v3791 = vsel %vm1892, 0.0, %v3770
    %v3792 = vsel %vm1893, 0.0, %v3769
    %v3793 = vsel %vm1894, 0.0, %v3768
    %v3794 = vsel %vm1895, 0.0, %v3767
    %v3795 = vsel %vm1896, 0.0, %v3766
    %v3796 = vsel %vm1897, 0.0, %v3765
    %v3797 = vsel %vm1898, 0.0, %v3764
    %v3798 = vsel %vm1899, 0.0, %v3763
    %v3799 = vsel %vm1900, 0.0, %v3762
    %v3800 = vsel %vm1901, 0.0, %v3761
    %v3801 = vsel %vm1902, 0.0, %v3760
    %v3802 = vsel %vm1903, 0.0, %v3759
    %v3803 = vsel %vm1904, 0.0, %v3758
    %v3804 = vsel %vm1905, 0.0, %v3757
    %v3805 = vsel %vm1906, 0.0, %v3756
    %v3806 = vsel %vm1907, 0.0, %v3755
    %v3807 = vsel %vm1908, 0.0, %v3754
    %v3808 = vsel %vm1909, 0.0, %v3753
    %v3809 = vsel %vm1910, 0.0, %v3752
    %v3810 = vsel %vm1911, 0.0, %v3751
    %v3811 = vsel %vm1912, 0.0, %v3750
    %v3812 = vsel %vm1913, 0.0, %v3749
    %v3813 = vsel %vm1914, 0.0, %v3748
    %v3814 = vsel %vm1915, 0.0, %v3747
    %v3815 = vsel %vm1916, 0.0, %v3746
    %v3816 = vsel %vm1917, 0.0, %v3745
    %v3817 = vsel %vm1918, 0.0, %v3744
    %v3818 = vsel %vm1919, 0.0, %v3743
    %v3819 = vsel %vm1920, 0.0, %v3742
    %v3820 = vsel %vm1921, 0.0, %v3741
    %v3821 = vsel %vm1922, 0.0, %v3740
    %v3822 = vsel %vm1923, 0.0, %v3739
    %v3823 = vsel %vm1924, 0.0, %v3738
    %v3824 = vsel %vm1925, 0.0, %v3737
    %v3825 = vsel %vm1926, 0.0, %v3736
    %v3826 = vsel %vm1927, 0.0, %v3735
    %v3827 = vsel %vm1928, 0.0, %v3734
    %v3828 = vsel %vm1929, 0.0, %v3733
    %v3829 = vsel %vm1930, 0.0, %v3732
    %v3830 = vsel %vm1931, 0.0, %v3731
    %v3831 = vsel %vm1932, 0.0, %v3730
    %v3832 = vsel %vm1933, 0.0, %v3729
    %v3833 = vsel %vm1934, 0.0, %v3728
    %v3834 = vsel %vm1935, 0.0, %v3727
    %v3835 = vsel %vm1936, 0.0, %v3726
    %v3836 = vsel %vm1937, 0.0, %v3725
    %v3837 = vsel %vm1938, 0.0, %v3724
    %v3838 = vsel %vm1939, 0.0, %v3723
    %v3839 = vsel %vm1940, 0.0, %v3722
    %v3840 = vsel %vm1941, 0.0, %v3721
    %v3841 = vsel %vm1942, 0.0, %v3720
    %v3842 = vsel %vm1943, 0.0, %v3719
    %v3843 = vsel %vm1944, 0.0, %v3718
    %v3844 = vsel %vm1945, 0.0, %v3717
    %v3845 = vrot.slane %v3589, 1
    %v3846 = vrot.slane %v3590, 1
    %v3847 = vrot.slane %v3591, 1
    %v3848 = vrot.slane %v3592, 1
    %v3849 = vrot.slane %v3593, 1
    %v3850 = vrot.slane %v3594, 1
    %v3851 = vrot.slane %v3595, 1
    %v3852 = vrot.slane %v3596, 1
    %v3853 = vrot.slane %v3597, 1
    %v3854 = vrot.slane %v3598, 1
    %v3855 = vrot.slane %v3599, 1
    %v3856 = vrot.slane %v3600, 1
    %v3857 = vrot.slane %v3601, 1
    %v3858 = vrot.slane %v3602, 1
    %v3859 = vrot.slane %v3603, 1
    %v3860 = vrot.slane %v3604, 1
    %v3861 = vrot.slane %v3605, 1
    %v3862 = vrot.slane %v3606, 1
    %v3863 = vrot.slane %v3607, 1
    %v3864 = vrot.slane %v3608, 1
    %v3865 = vrot.slane %v3609, 1
    %v3866 = vrot.slane %v3610, 1
    %v3867 = vrot.slane %v3611, 1
    %v3868 = vrot.slane %v3612, 1
    %v3869 = vrot.slane %v3613, 1
    %v3870 = vrot.slane %v3614, 1
    %v3871 = vrot.slane %v3615, 1
    %v3872 = vrot.slane %v3616, 1
    %v3873 = vrot.slane %v3617, 1
    %v3874 = vrot.slane %v3618, 1
    %v3875 = vrot.slane %v3619, 1
    %v3876 = vrot.slane %v3620, 1
    %v3877 = vrot.slane %v3621, 1
    %v3878 = vrot.slane %v3622, 1
    %v3879 = vrot.slane %v3623, 1
    %v3880 = vrot.slane %v3624, 1
    %v3881 = vrot.slane %v3625, 1
    %v3882 = vrot.slane %v3626, 1
    %v3883 = vrot.slane %v3627, 1
    %v3884 = vrot.slane %v3628, 1
    %v3885 = vrot.slane %v3629, 1
    %v3886 = vrot.slane %v3630, 1
    %v3887 = vrot.slane %v3631, 1
    %v3888 = vrot.slane %v3632, 1
    %v3889 = vrot.slane %v3633, 1
    %v3890 = vrot.slane %v3634, 1
    %v3891 = vrot.slane %v3635, 1
    %v3892 = vrot.slane %v3636, 1
    %v3893 = vrot.slane %v3637, 1
    %v3894 = vrot.slane %v3638, 1
    %v3895 = vrot.slane %v3639, 1
    %v3896 = vrot.slane %v3640, 1
    %v3897 = vrot.slane %v3641, 1
    %v3898 = vrot.slane %v3642, 1
    %v3899 = vrot.slane %v3643, 1
    %v3900 = vrot.slane %v3644, 1
    %v3901 = vrot.slane %v3645, 1
    %v3902 = vrot.slane %v3646, 1
    %v3903 = vrot.slane %v3647, 1
    %v3904 = vrot.slane %v3648, 1
    %v3905 = vrot.slane %v3649, 1
    %v3906 = vrot.slane %v3650, 1
    %v3907 = vrot.slane %v3651, 1
    %v3908 = vrot.slane %v3652, 1
    %v3909 = vsel %vm2074, %v3907, %v3908
    %v3910 = vsel %vm2074, %v3906, %v3907
    %v3911 = vsel %vm2074, %v3905, %v3906
    %v3912 = vsel %vm2074, %v3904, %v3905
    %v3913 = vsel %vm2074, %v3903, %v3904
    %v3914 = vsel %vm2074, %v3902, %v3903
    %v3915 = vsel %vm2074, %v3901, %v3902
    %v3916 = vsel %vm2074, %v3900, %v3901
    %v3917 = vsel %vm2074, %v3899, %v3900
    %v3918 = vsel %vm2074, %v3898, %v3899
    %v3919 = vsel %vm2074, %v3897, %v3898
    %v3920 = vsel %vm2074, %v3896, %v3897
    %v3921 = vsel %vm2074, %v3895, %v3896
    %v3922 = vsel %vm2074, %v3894, %v3895
    %v3923 = vsel %vm2074, %v3893, %v3894
    %v3924 = vsel %vm2074, %v3892, %v3893
    %v3925 = vsel %vm2074, %v3891, %v3892
    %v3926 = vsel %vm2074, %v3890, %v3891
    %v3927 = vsel %vm2074, %v3889, %v3890
    %v3928 = vsel %vm2074, %v3888, %v3889
    %v3929 = vsel %vm2074, %v3887, %v3888
    %v3930 = vsel %vm2074, %v3886, %v3887
    %v3931 = vsel %vm2074, %v3885, %v3886
    %v3932 = vsel %vm2074, %v3884, %v3885
    %v3933 = vsel %vm2074, %v3883, %v3884
    %v3934 = vsel %vm2074, %v3882, %v3883
    %v3935 = vsel %vm2074, %v3881, %v3882
    %v3936 = vsel %vm2074, %v3880, %v3881
    %v3937 = vsel %vm2074, %v3879, %v3880
    %v3938 = vsel %vm2074, %v3878, %v3879
    %v3939 = vsel %vm2074, %v3877, %v3878
    %v3940 = vsel %vm2074, %v3876, %v3877
    %v3941 = vsel %vm2074, %v3875, %v3876
    %v3942 = vsel %vm2074, %v3874, %v3875
    %v3943 = vsel %vm2074, %v3873, %v3874
    %v3944 = vsel %vm2074, %v3872, %v3873
    %v3945 = vsel %vm2074, %v3871, %v3872
    %v3946 = vsel %vm2074, %v3870, %v3871
    %v3947 = vsel %vm2074, %v3869, %v3870
    %v3948 = vsel %vm2074, %v3868, %v3869
    %v3949 = vsel %vm2074, %v3867, %v3868
    %v3950 = vsel %vm2074, %v3866, %v3867
    %v3951 = vsel %vm2074, %v3865, %v3866
    %v3952 = vsel %vm2074, %v3864, %v3865
    %v3953 = vsel %vm2074, %v3863, %v3864
    %v3954 = vsel %vm2074, %v3862, %v3863
    %v3955 = vsel %vm2074, %v3861, %v3862
    %v3956 = vsel %vm2074, %v3860, %v3861
    %v3957 = vsel %vm2074, %v3859, %v3860
    %v3958 = vsel %vm2074, %v3858, %v3859
    %v3959 = vsel %vm2074, %v3857, %v3858
    %v3960 = vsel %vm2074, %v3856, %v3857
    %v3961 = vsel %vm2074, %v3855, %v3856
    %v3962 = vsel %vm2074, %v3854, %v3855
    %v3963 = vsel %vm2074, %v3853, %v3854
    %v3964 = vsel %vm2074, %v3852, %v3853
    %v3965 = vsel %vm2074, %v3851, %v3852
    %v3966 = vsel %vm2074, %v3850, %v3851
    %v3967 = vsel %vm2074, %v3849, %v3850
    %v3968 = vsel %vm2074, %v3848, %v3849
    %v3969 = vsel %vm2074, %v3847, %v3848
    %v3970 = vsel %vm2074, %v3846, %v3847
    %v3971 = vsel %vm2074, %v3845, %v3846
    %v3972 = vsel %vm2074, %v3908, %v3845
    %v3973 = vsel %vm2203, 0.0, %v3971
    %v3974 = vsel %vm2204, 0.0, %v3970
    %v3975 = vsel %vm2205, 0.0, %v3969
    %v3976 = vsel %vm2206, 0.0, %v3968
    %v3977 = vsel %vm2207, 0.0, %v3967
    %v3978 = vsel %vm2208, 0.0, %v3966
    %v3979 = vsel %vm2209, 0.0, %v3965
    %v3980 = vsel %vm2210, 0.0, %v3964
    %v3981 = vsel %vm2211, 0.0, %v3963
    %v3982 = vsel %vm2212, 0.0, %v3962
    %v3983 = vsel %vm2213, 0.0, %v3961
    %v3984 = vsel %vm2214, 0.0, %v3960
    %v3985 = vsel %vm2215, 0.0, %v3959
    %v3986 = vsel %vm2216, 0.0, %v3958
    %v3987 = vsel %vm2217, 0.0, %v3957
    %v3988 = vsel %vm2218, 0.0, %v3956
    %v3989 = vsel %vm2219, 0.0, %v3955
    %v3990 = vsel %vm2220, 0.0, %v3954
    %v3991 = vsel %vm2221, 0.0, %v3953
    %v3992 = vsel %vm2222, 0.0, %v3952
    %v3993 = vsel %vm2223, 0.0, %v3951
    %v3994 = vsel %vm2224, 0.0, %v3950
    %v3995 = vsel %vm2225, 0.0, %v3949
    %v3996 = vsel %vm2226, 0.0, %v3948
    %v3997 = vsel %vm2227, 0.0, %v3947
    %v3998 = vsel %vm2228, 0.0, %v3946
    %v3999 = vsel %vm2229, 0.0, %v3945
    %v4000 = vsel %vm2230, 0.0, %v3944
    %v4001 = vsel %vm2231, 0.0, %v3943
    %v4002 = vsel %vm2232, 0.0, %v3942
    %v4003 = vsel %vm2233, 0.0, %v3941
    %v4004 = vsel %vm2234, 0.0, %v3940
    %v4005 = vsel %vm2235, 0.0, %v3939
    %v4006 = vsel %vm2236, 0.0, %v3938
    %v4007 = vsel %vm2237, 0.0, %v3937
    %v4008 = vsel %vm2238, 0.0, %v3936
    %v4009 = vsel %vm2239, 0.0, %v3935
    %v4010 = vsel %vm2240, 0.0, %v3934
    %v4011 = vsel %vm2241, 0.0, %v3933
    %v4012 = vsel %vm2242, 0.0, %v3932
    %v4013 = vsel %vm2243, 0.0, %v3931
    %v4014 = vsel %vm2244, 0.0, %v3930
    %v4015 = vsel %vm2245, 0.0, %v3929
    %v4016 = vsel %vm2246, 0.0, %v3928
    %v4017 = vsel %vm2247, 0.0, %v3927
    %v4018 = vsel %vm2248, 0.0, %v3926
    %v4019 = vsel %vm2249, 0.0, %v3925
    %v4020 = vsel %vm2250, 0.0, %v3924
    %v4021 = vsel %vm2251, 0.0, %v3923
    %v4022 = vsel %vm2252, 0.0, %v3922
    %v4023 = vsel %vm2253, 0.0, %v3921
    %v4024 = vsel %vm2254, 0.0, %v3920
    %v4025 = vsel %vm2255, 0.0, %v3919
    %v4026 = vsel %vm2256, 0.0, %v3918
    %v4027 = vsel %vm2257, 0.0, %v3917
    %v4028 = vsel %vm2258, 0.0, %v3916
    %v4029 = vsel %vm2259, 0.0, %v3915
    %v4030 = vsel %vm2260, 0.0, %v3914
    %v4031 = vsel %vm2261, 0.0, %v3913
    %v4032 = vsel %vm2262, 0.0, %v3912
    %v4033 = vsel %vm2263, 0.0, %v3911
    %v4034 = vsel %vm2264, 0.0, %v3910
    %v4035 = vsel %vm2265, 0.0, %v3909
    %v4036 = vsel %vm2266, 0.0, %v3972
    %v4037 = vpack.c.bf16 %v3590, %v3589
    %v4038 = vpack.c.bf16 %v3592, %v3591
    %v4039 = vpack.c.bf16 %v3594, %v3593
    %v4040 = vpack.c.bf16 %v3596, %v3595
    %v4041 = vpack.c.bf16 %v3598, %v3597
    %v4042 = vpack.c.bf16 %v3600, %v3599
    %v4043 = vpack.c.bf16 %v3602, %v3601
    %v4044 = vpack.c.bf16 %v3604, %v3603
    %v4045 = vpack.c.bf16 %v3606, %v3605
    %v4046 = vpack.c.bf16 %v3608, %v3607
    %v4047 = vpack.c.bf16 %v3610, %v3609
    %v4048 = vpack.c.bf16 %v3612, %v3611
    %v4049 = vpack.c.bf16 %v3614, %v3613
    %v4050 = vpack.c.bf16 %v3616, %v3615
    %v4051 = vpack.c.bf16 %v3618, %v3617
    %v4052 = vpack.c.bf16 %v3620, %v3619
    %v4053 = vpack.c.bf16 %v3622, %v3621
    %v4054 = vpack.c.bf16 %v3624, %v3623
    %v4055 = vpack.c.bf16 %v3626, %v3625
    %v4056 = vpack.c.bf16 %v3628, %v3627
    %v4057 = vpack.c.bf16 %v3630, %v3629
    %v4058 = vpack.c.bf16 %v3632, %v3631
    %v4059 = vpack.c.bf16 %v3634, %v3633
    %v4060 = vpack.c.bf16 %v3636, %v3635
    %v4061 = vpack.c.bf16 %v3638, %v3637
    %v4062 = vpack.c.bf16 %v3640, %v3639
    %v4063 = vpack.c.bf16 %v3642, %v3641
    %v4064 = vpack.c.bf16 %v3644, %v3643
    %v4065 = vpack.c.bf16 %v3646, %v3645
    %v4066 = vpack.c.bf16 %v3648, %v3647
    %v4067 = vpack.c.bf16 %v3650, %v3649
    %v4068 = vpack.c.bf16 %v3652, %v3651
    %s4069 = scalar_lea.vmem %s9, 32
    %v4070 = vld [vmem:[%s4069] sm:$0xf]
    %v4071 = vld [vmem:[%s4069 + $0x4] sm:$0xf]
    %v4072 = vld [vmem:[%s4069 + $0x8] sm:$0xf]
    %v4073 = vld [vmem:[%s4069 + $0xc] sm:$0xf]
    %v4074 = vld [vmem:[%s4069 + $0x10] sm:$0xf]
    %v4075 = vld [vmem:[%s4069 + $0x14] sm:$0xf]
    %v4076 = vld [vmem:[%s4069 + $0x18] sm:$0xf]
    %v4077 = vld [vmem:[%s4069 + $0x1c] sm:$0xf]
    %v4078 = vpack.c.bf16 %v3782, %v3781
    %v4079 = vpack.c.bf16 %v3784, %v3783
    %v4080 = vpack.c.bf16 %v3786, %v3785
    %v4081 = vpack.c.bf16 %v3788, %v3787
    %v4082 = vpack.c.bf16 %v3790, %v3789
    %v4083 = vpack.c.bf16 %v3792, %v3791
    %v4084 = vpack.c.bf16 %v3794, %v3793
    %v4085 = vpack.c.bf16 %v3796, %v3795
    %v4086 = vpack.c.bf16 %v3798, %v3797
    %v4087 = vpack.c.bf16 %v3800, %v3799
    %v4088 = vpack.c.bf16 %v3802, %v3801
    %v4089 = vpack.c.bf16 %v3804, %v3803
    %v4090 = vpack.c.bf16 %v3806, %v3805
    %v4091 = vpack.c.bf16 %v3808, %v3807
    %v4092 = vpack.c.bf16 %v3810, %v3809
    %v4093 = vpack.c.bf16 %v3812, %v3811
    %v4094 = vpack.c.bf16 %v3814, %v3813
    %v4095 = vpack.c.bf16 %v3816, %v3815
    %v4096 = vpack.c.bf16 %v3818, %v3817
    %v4097 = vpack.c.bf16 %v3820, %v3819
    %v4098 = vpack.c.bf16 %v3822, %v3821
    %v4099 = vpack.c.bf16 %v3824, %v3823
    %v4100 = vpack.c.bf16 %v3826, %v3825
    %v4101 = vpack.c.bf16 %v3828, %v3827
    %v4102 = vpack.c.bf16 %v3830, %v3829
    %v4103 = vpack.c.bf16 %v3832, %v3831
    %v4104 = vpack.c.bf16 %v3834, %v3833
    %v4105 = vpack.c.bf16 %v3836, %v3835
    %v4106 = vpack.c.bf16 %v3838, %v3837
    %v4107 = vpack.c.bf16 %v3840, %v3839
    %v4108 = vpack.c.bf16 %v3842, %v3841
    %v4109 = vpack.c.bf16 %v3844, %v3843
    %v4110 = vld [vmem:[%s9] sm:$0xf]
    %v4111 = vld [vmem:[%s9 + $0x4] sm:$0xf]
    %v4112 = vld [vmem:[%s9 + $0x8] sm:$0xf]
    %v4113 = vld [vmem:[%s9 + $0xc] sm:$0xf]
    %v4114 = vld [vmem:[%s9 + $0x10] sm:$0xf]
    %v4115 = vld [vmem:[%s9 + $0x14] sm:$0xf]
    %v4116 = vld [vmem:[%s9 + $0x18] sm:$0xf]
    %v4117 = vld [vmem:[%s9 + $0x1c] sm:$0xf]
    %v4126 = vunpack.c.l.b16 %v4110
    %v4127 = vunpack.c.l.b16 %v4111
    %v4128 = vunpack.c.l.b16 %v4112
    %v4129 = vunpack.c.l.b16 %v4113
    %v4130 = vunpack.c.l.b16 %v4114
    %v4131 = vunpack.c.l.b16 %v4115
    %v4132 = vunpack.c.l.b16 %v4116
    %v4133 = vunpack.c.l.b16 %v4117
    %v4134 = vpack.c.b16 %v4127, %v4126
    %v4135 = vpack.c.b16 %v4129, %v4128
    %v4136 = vpack.c.b16 %v4131, %v4130
    %v4137 = vpack.c.b16 %v4133, %v4132
    %v4143 = vsel %vm2436, %v4078, 0
    %v4146 = vsel %vm2436, %v4079, 0
    %v4149 = vsel %vm2436, %v4080, 0
    %v4152 = vsel %vm2436, %v4081, 0
    %v4155 = vsel %vm2436, %v4082, 0
    %v4158 = vsel %vm2436, %v4083, 0
    %v4161 = vsel %vm2436, %v4084, 0
    %v4164 = vsel %vm2436, %v4085, 0
    %v4167 = vsel %vm2436, %v4086, 0
    %v4170 = vsel %vm2436, %v4087, 0
    %v4173 = vsel %vm2436, %v4088, 0
    %v4176 = vsel %vm2436, %v4089, 0
    %v4179 = vsel %vm2436, %v4090, 0
    %v4182 = vsel %vm2436, %v4091, 0
    %v4185 = vsel %vm2436, %v4092, 0
    %v4188 = vsel %vm2436, %v4093, 0
    %v4191 = vsel %vm2436, %v4094, 0
    %v4194 = vsel %vm2436, %v4095, 0
    %v4197 = vsel %vm2436, %v4096, 0
    %v4200 = vsel %vm2436, %v4097, 0
    %v4203 = vsel %vm2436, %v4098, 0
    %v4206 = vsel %vm2436, %v4099, 0
    %v4209 = vsel %vm2436, %v4100, 0
    %v4212 = vsel %vm2436, %v4101, 0
    %v4215 = vsel %vm2436, %v4102, 0
    %v4218 = vsel %vm2436, %v4103, 0
    %v4221 = vsel %vm2436, %v4104, 0
    %v4224 = vsel %vm2436, %v4105, 0
    %v4227 = vsel %vm2436, %v4106, 0
    %v4230 = vsel %vm2436, %v4107, 0
    %v4233 = vsel %vm2436, %v4108, 0
    %v4236 = vsel %vm2436, %v4109, 0
    %4238 = vmatpush.bf16.msra.mxu0 0
    %4239 = vmatpush.bf16.msra.mxu0 0
    %4240 = vmatpush.bf16.msra.mxu0 0
    %4241 = vmatpush.bf16.msra.mxu0 0
    %4242 = vmatpush.bf16.msra.mxu0 %v4137
    %4243 = vmatpush.bf16.msra.mxu0 %v4136
    %4244 = vmatpush.bf16.msra.mxu0 %v4135
    %4245 = vmatpush.bf16.msra.mxu0 %v4134
    %4246 = vmatmul.bf16.gmra.mxu0 %v4143
    %v4247 = vpop.f32.mrf.mxu0
    %v4248 = vadd.f32 0.0, %v4247
    %v4249 = vpop.f32.mrf.mxu0
    %v4250 = vadd.f32 0.0, %v4249
    %4251 = vmatmul.bf16.gmra.mxu0 %v4146
    %v4252 = vpop.f32.mrf.mxu0
    %v4253 = vadd.f32 0.0, %v4252
    %v4254 = vpop.f32.mrf.mxu0
    %v4255 = vadd.f32 0.0, %v4254
    %4256 = vmatmul.bf16.gmra.mxu0 %v4149
    %v4257 = vpop.f32.mrf.mxu0
    %v4258 = vadd.f32 0.0, %v4257
    %v4259 = vpop.f32.mrf.mxu0
    %v4260 = vadd.f32 0.0, %v4259
    %4261 = vmatmul.bf16.gmra.mxu0 %v4152
    %v4262 = vpop.f32.mrf.mxu0
    %v4263 = vadd.f32 0.0, %v4262
    %v4264 = vpop.f32.mrf.mxu0
    %v4265 = vadd.f32 0.0, %v4264
    %4266 = vmatmul.bf16.gmra.mxu0 %v4155
    %v4267 = vpop.f32.mrf.mxu0
    %v4268 = vadd.f32 0.0, %v4267
    %v4269 = vpop.f32.mrf.mxu0
    %v4270 = vadd.f32 0.0, %v4269
    %4271 = vmatmul.bf16.gmra.mxu0 %v4158
    %v4272 = vpop.f32.mrf.mxu0
    %v4273 = vadd.f32 0.0, %v4272
    %v4274 = vpop.f32.mrf.mxu0
    %v4275 = vadd.f32 0.0, %v4274
    %4276 = vmatmul.bf16.gmra.mxu0 %v4161
    %v4277 = vpop.f32.mrf.mxu0
    %v4278 = vadd.f32 0.0, %v4277
    %v4279 = vpop.f32.mrf.mxu0
    %v4280 = vadd.f32 0.0, %v4279
    %4281 = vmatmul.bf16.gmra.mxu0 %v4164
    %v4282 = vpop.f32.mrf.mxu0
    %v4283 = vadd.f32 0.0, %v4282
    %v4284 = vpop.f32.mrf.mxu0
    %v4285 = vadd.f32 0.0, %v4284
    %4286 = vmatmul.bf16.gmra.mxu0 %v4167
    %v4287 = vpop.f32.mrf.mxu0
    %v4288 = vadd.f32 0.0, %v4287
    %v4289 = vpop.f32.mrf.mxu0
    %v4290 = vadd.f32 0.0, %v4289
    %4291 = vmatmul.bf16.gmra.mxu0 %v4170
    %v4292 = vpop.f32.mrf.mxu0
    %v4293 = vadd.f32 0.0, %v4292
    %v4294 = vpop.f32.mrf.mxu0
    %v4295 = vadd.f32 0.0, %v4294
    %4296 = vmatmul.bf16.gmra.mxu0 %v4173
    %v4297 = vpop.f32.mrf.mxu0
    %v4298 = vadd.f32 0.0, %v4297
    %v4299 = vpop.f32.mrf.mxu0
    %v4300 = vadd.f32 0.0, %v4299
    %4301 = vmatmul.bf16.gmra.mxu0 %v4176
    %v4302 = vpop.f32.mrf.mxu0
    %v4303 = vadd.f32 0.0, %v4302
    %v4304 = vpop.f32.mrf.mxu0
    %v4305 = vadd.f32 0.0, %v4304
    %4306 = vmatmul.bf16.gmra.mxu0 %v4179
    %v4307 = vpop.f32.mrf.mxu0
    %v4308 = vadd.f32 0.0, %v4307
    %v4309 = vpop.f32.mrf.mxu0
    %v4310 = vadd.f32 0.0, %v4309
    %4311 = vmatmul.bf16.gmra.mxu0 %v4182
    %v4312 = vpop.f32.mrf.mxu0
    %v4313 = vadd.f32 0.0, %v4312
    %v4314 = vpop.f32.mrf.mxu0
    %v4315 = vadd.f32 0.0, %v4314
    %4316 = vmatmul.bf16.gmra.mxu0 %v4185
    %v4317 = vpop.f32.mrf.mxu0
    %v4318 = vadd.f32 0.0, %v4317
    %v4319 = vpop.f32.mrf.mxu0
    %v4320 = vadd.f32 0.0, %v4319
    %4321 = vmatmul.bf16.gmra.mxu0 %v4188
    %v4322 = vpop.f32.mrf.mxu0
    %v4323 = vadd.f32 0.0, %v4322
    %v4324 = vpop.f32.mrf.mxu0
    %v4325 = vadd.f32 0.0, %v4324
    %4326 = vmatmul.bf16.gmra.mxu0 %v4191
    %v4327 = vpop.f32.mrf.mxu0
    %v4328 = vadd.f32 0.0, %v4327
    %v4329 = vpop.f32.mrf.mxu0
    %v4330 = vadd.f32 0.0, %v4329
    %4331 = vmatmul.bf16.gmra.mxu0 %v4194
    %v4332 = vpop.f32.mrf.mxu0
    %v4333 = vadd.f32 0.0, %v4332
    %v4334 = vpop.f32.mrf.mxu0
    %v4335 = vadd.f32 0.0, %v4334
    %4336 = vmatmul.bf16.gmra.mxu0 %v4197
    %v4337 = vpop.f32.mrf.mxu0
    %v4338 = vadd.f32 0.0, %v4337
    %v4339 = vpop.f32.mrf.mxu0
    %v4340 = vadd.f32 0.0, %v4339
    %4341 = vmatmul.bf16.gmra.mxu0 %v4200
    %v4342 = vpop.f32.mrf.mxu0
    %v4343 = vadd.f32 0.0, %v4342
    %v4344 = vpop.f32.mrf.mxu0
    %v4345 = vadd.f32 0.0, %v4344
    %4346 = vmatmul.bf16.gmra.mxu0 %v4203
    %v4347 = vpop.f32.mrf.mxu0
    %v4348 = vadd.f32 0.0, %v4347
    %v4349 = vpop.f32.mrf.mxu0
    %v4350 = vadd.f32 0.0, %v4349
    %4351 = vmatmul.bf16.gmra.mxu0 %v4206
    %v4352 = vpop.f32.mrf.mxu0
    %v4353 = vadd.f32 0.0, %v4352
    %v4354 = vpop.f32.mrf.mxu0
    %v4355 = vadd.f32 0.0, %v4354
    %4356 = vmatmul.bf16.gmra.mxu0 %v4209
    %v4357 = vpop.f32.mrf.mxu0
    %v4358 = vadd.f32 0.0, %v4357
    %v4359 = vpop.f32.mrf.mxu0
    %v4360 = vadd.f32 0.0, %v4359
    %4361 = vmatmul.bf16.gmra.mxu0 %v4212
    %v4362 = vpop.f32.mrf.mxu0
    %v4363 = vadd.f32 0.0, %v4362
    %v4364 = vpop.f32.mrf.mxu0
    %v4365 = vadd.f32 0.0, %v4364
    %4366 = vmatmul.bf16.gmra.mxu0 %v4215
    %v4367 = vpop.f32.mrf.mxu0
    %v4368 = vadd.f32 0.0, %v4367
    %v4369 = vpop.f32.mrf.mxu0
    %v4370 = vadd.f32 0.0, %v4369
    %4371 = vmatmul.bf16.gmra.mxu0 %v4218
    %v4372 = vpop.f32.mrf.mxu0
    %v4373 = vadd.f32 0.0, %v4372
    %v4374 = vpop.f32.mrf.mxu0
    %v4375 = vadd.f32 0.0, %v4374
    %4376 = vmatmul.bf16.gmra.mxu0 %v4221
    %v4377 = vpop.f32.mrf.mxu0
    %v4378 = vadd.f32 0.0, %v4377
    %v4379 = vpop.f32.mrf.mxu0
    %v4380 = vadd.f32 0.0, %v4379
    %4381 = vmatmul.bf16.gmra.mxu0 %v4224
    %v4382 = vpop.f32.mrf.mxu0
    %v4383 = vadd.f32 0.0, %v4382
    %v4384 = vpop.f32.mrf.mxu0
    %v4385 = vadd.f32 0.0, %v4384
    %4386 = vmatmul.bf16.gmra.mxu0 %v4227
    %v4387 = vpop.f32.mrf.mxu0
    %v4388 = vadd.f32 0.0, %v4387
    %v4389 = vpop.f32.mrf.mxu0
    %v4390 = vadd.f32 0.0, %v4389
    %4391 = vmatmul.bf16.gmra.mxu0 %v4230
    %v4392 = vpop.f32.mrf.mxu0
    %v4393 = vadd.f32 0.0, %v4392
    %v4394 = vpop.f32.mrf.mxu0
    %v4395 = vadd.f32 0.0, %v4394
    %4396 = vmatmul.bf16.gmra.mxu0 %v4233
    %v4397 = vpop.f32.mrf.mxu0
    %v4398 = vadd.f32 0.0, %v4397
    %v4399 = vpop.f32.mrf.mxu0
    %v4400 = vadd.f32 0.0, %v4399
    %4401 = vmatmul.bf16.gmra.mxu0 %v4236
    %v4402 = vpop.f32.mrf.mxu0
    %v4403 = vadd.f32 0.0, %v4402
    %v4404 = vpop.f32.mrf.mxu0
    %v4405 = vadd.f32 0.0, %v4404
    %4406 = vdwg.mxu0
    %v4415 = vunpack.c.l.b16 %v4070
    %v4416 = vunpack.c.l.b16 %v4071
    %v4417 = vunpack.c.l.b16 %v4072
    %v4418 = vunpack.c.l.b16 %v4073
    %v4419 = vunpack.c.l.b16 %v4074
    %v4420 = vunpack.c.l.b16 %v4075
    %v4421 = vunpack.c.l.b16 %v4076
    %v4422 = vunpack.c.l.b16 %v4077
    %v4423 = vpack.c.b16 %v4416, %v4415
    %v4424 = vpack.c.b16 %v4418, %v4417
    %v4425 = vpack.c.b16 %v4420, %v4419
    %v4426 = vpack.c.b16 %v4422, %v4421
    %v4432 = vsel %vm2436, %v4037, 0
    %v4435 = vsel %vm2436, %v4038, 0
    %v4438 = vsel %vm2436, %v4039, 0
    %v4441 = vsel %vm2436, %v4040, 0
    %v4444 = vsel %vm2436, %v4041, 0
    %v4447 = vsel %vm2436, %v4042, 0
    %v4450 = vsel %vm2436, %v4043, 0
    %v4453 = vsel %vm2436, %v4044, 0
    %v4456 = vsel %vm2436, %v4045, 0
    %v4459 = vsel %vm2436, %v4046, 0
    %v4462 = vsel %vm2436, %v4047, 0
    %v4465 = vsel %vm2436, %v4048, 0
    %v4468 = vsel %vm2436, %v4049, 0
    %v4471 = vsel %vm2436, %v4050, 0
    %v4474 = vsel %vm2436, %v4051, 0
    %v4477 = vsel %vm2436, %v4052, 0
    %v4480 = vsel %vm2436, %v4053, 0
    %v4483 = vsel %vm2436, %v4054, 0
    %v4486 = vsel %vm2436, %v4055, 0
    %v4489 = vsel %vm2436, %v4056, 0
    %v4492 = vsel %vm2436, %v4057, 0
    %v4495 = vsel %vm2436, %v4058, 0
    %v4498 = vsel %vm2436, %v4059, 0
    %v4501 = vsel %vm2436, %v4060, 0
    %v4504 = vsel %vm2436, %v4061, 0
    %v4507 = vsel %vm2436, %v4062, 0
    %v4510 = vsel %vm2436, %v4063, 0
    %v4513 = vsel %vm2436, %v4064, 0
    %v4516 = vsel %vm2436, %v4065, 0
    %v4519 = vsel %vm2436, %v4066, 0
    %v4522 = vsel %vm2436, %v4067, 0
    %v4525 = vsel %vm2436, %v4068, 0
    %4527 = vmatpush.bf16.msra.mxu0 0
    %4528 = vmatpush.bf16.msra.mxu0 0
    %4529 = vmatpush.bf16.msra.mxu0 0
    %4530 = vmatpush.bf16.msra.mxu0 0
    %4531 = vmatpush.bf16.msra.mxu0 %v4426
    %4532 = vmatpush.bf16.msra.mxu0 %v4425
    %4533 = vmatpush.bf16.msra.mxu0 %v4424
    %4534 = vmatpush.bf16.msra.mxu0 %v4423
    %4535 = vmatmul.bf16.gmra.mxu0 %v4432
    %v4536 = vpop.f32.mrf.mxu0
    %v4537 = vadd.f32 %v4248, %v4536
    %v4538 = vpop.f32.mrf.mxu0
    %v4539 = vadd.f32 %v4250, %v4538
    %4540 = vmatmul.bf16.gmra.mxu0 %v4435
    %v4541 = vpop.f32.mrf.mxu0
    %v4542 = vadd.f32 %v4253, %v4541
    %v4543 = vpop.f32.mrf.mxu0
    %v4544 = vadd.f32 %v4255, %v4543
    %4545 = vmatmul.bf16.gmra.mxu0 %v4438
    %v4546 = vpop.f32.mrf.mxu0
    %v4547 = vadd.f32 %v4258, %v4546
    %v4548 = vpop.f32.mrf.mxu0
    %v4549 = vadd.f32 %v4260, %v4548
    %4550 = vmatmul.bf16.gmra.mxu0 %v4441
    %v4551 = vpop.f32.mrf.mxu0
    %v4552 = vadd.f32 %v4263, %v4551
    %v4553 = vpop.f32.mrf.mxu0
    %v4554 = vadd.f32 %v4265, %v4553
    %4555 = vmatmul.bf16.gmra.mxu0 %v4444
    %v4556 = vpop.f32.mrf.mxu0
    %v4557 = vadd.f32 %v4268, %v4556
    %v4558 = vpop.f32.mrf.mxu0
    %v4559 = vadd.f32 %v4270, %v4558
    %4560 = vmatmul.bf16.gmra.mxu0 %v4447
    %v4561 = vpop.f32.mrf.mxu0
    %v4562 = vadd.f32 %v4273, %v4561
    %v4563 = vpop.f32.mrf.mxu0
    %v4564 = vadd.f32 %v4275, %v4563
    %4565 = vmatmul.bf16.gmra.mxu0 %v4450
    %v4566 = vpop.f32.mrf.mxu0
    %v4567 = vadd.f32 %v4278, %v4566
    %v4568 = vpop.f32.mrf.mxu0
    %v4569 = vadd.f32 %v4280, %v4568
    %4570 = vmatmul.bf16.gmra.mxu0 %v4453
    %v4571 = vpop.f32.mrf.mxu0
    %v4572 = vadd.f32 %v4283, %v4571
    %v4573 = vpop.f32.mrf.mxu0
    %v4574 = vadd.f32 %v4285, %v4573
    %4575 = vmatmul.bf16.gmra.mxu0 %v4456
    %v4576 = vpop.f32.mrf.mxu0
    %v4577 = vadd.f32 %v4288, %v4576
    %v4578 = vpop.f32.mrf.mxu0
    %v4579 = vadd.f32 %v4290, %v4578
    %4580 = vmatmul.bf16.gmra.mxu0 %v4459
    %v4581 = vpop.f32.mrf.mxu0
    %v4582 = vadd.f32 %v4293, %v4581
    %v4583 = vpop.f32.mrf.mxu0
    %v4584 = vadd.f32 %v4295, %v4583
    %4585 = vmatmul.bf16.gmra.mxu0 %v4462
    %v4586 = vpop.f32.mrf.mxu0
    %v4587 = vadd.f32 %v4298, %v4586
    %v4588 = vpop.f32.mrf.mxu0
    %v4589 = vadd.f32 %v4300, %v4588
    %4590 = vmatmul.bf16.gmra.mxu0 %v4465
    %v4591 = vpop.f32.mrf.mxu0
    %v4592 = vadd.f32 %v4303, %v4591
    %v4593 = vpop.f32.mrf.mxu0
    %v4594 = vadd.f32 %v4305, %v4593
    %4595 = vmatmul.bf16.gmra.mxu0 %v4468
    %v4596 = vpop.f32.mrf.mxu0
    %v4597 = vadd.f32 %v4308, %v4596
    %v4598 = vpop.f32.mrf.mxu0
    %v4599 = vadd.f32 %v4310, %v4598
    %4600 = vmatmul.bf16.gmra.mxu0 %v4471
    %v4601 = vpop.f32.mrf.mxu0
    %v4602 = vadd.f32 %v4313, %v4601
    %v4603 = vpop.f32.mrf.mxu0
    %v4604 = vadd.f32 %v4315, %v4603
    %4605 = vmatmul.bf16.gmra.mxu0 %v4474
    %v4606 = vpop.f32.mrf.mxu0
    %v4607 = vadd.f32 %v4318, %v4606
    %v4608 = vpop.f32.mrf.mxu0
    %v4609 = vadd.f32 %v4320, %v4608
    %4610 = vmatmul.bf16.gmra.mxu0 %v4477
    %v4611 = vpop.f32.mrf.mxu0
    %v4612 = vadd.f32 %v4323, %v4611
    %v4613 = vpop.f32.mrf.mxu0
    %v4614 = vadd.f32 %v4325, %v4613
    %4615 = vmatmul.bf16.gmra.mxu0 %v4480
    %v4616 = vpop.f32.mrf.mxu0
    %v4617 = vadd.f32 %v4328, %v4616
    %v4618 = vpop.f32.mrf.mxu0
    %v4619 = vadd.f32 %v4330, %v4618
    %4620 = vmatmul.bf16.gmra.mxu0 %v4483
    %v4621 = vpop.f32.mrf.mxu0
    %v4622 = vadd.f32 %v4333, %v4621
    %v4623 = vpop.f32.mrf.mxu0
    %v4624 = vadd.f32 %v4335, %v4623
    %4625 = vmatmul.bf16.gmra.mxu0 %v4486
    %v4626 = vpop.f32.mrf.mxu0
    %v4627 = vadd.f32 %v4338, %v4626
    %v4628 = vpop.f32.mrf.mxu0
    %v4629 = vadd.f32 %v4340, %v4628
    %4630 = vmatmul.bf16.gmra.mxu0 %v4489
    %v4631 = vpop.f32.mrf.mxu0
    %v4632 = vadd.f32 %v4343, %v4631
    %v4633 = vpop.f32.mrf.mxu0
    %v4634 = vadd.f32 %v4345, %v4633
    %4635 = vmatmul.bf16.gmra.mxu0 %v4492
    %v4636 = vpop.f32.mrf.mxu0
    %v4637 = vadd.f32 %v4348, %v4636
    %v4638 = vpop.f32.mrf.mxu0
    %v4639 = vadd.f32 %v4350, %v4638
    %4640 = vmatmul.bf16.gmra.mxu0 %v4495
    %v4641 = vpop.f32.mrf.mxu0
    %v4642 = vadd.f32 %v4353, %v4641
    %v4643 = vpop.f32.mrf.mxu0
    %v4644 = vadd.f32 %v4355, %v4643
    %4645 = vmatmul.bf16.gmra.mxu0 %v4498
    %v4646 = vpop.f32.mrf.mxu0
    %v4647 = vadd.f32 %v4358, %v4646
    %v4648 = vpop.f32.mrf.mxu0
    %v4649 = vadd.f32 %v4360, %v4648
    %4650 = vmatmul.bf16.gmra.mxu0 %v4501
    %v4651 = vpop.f32.mrf.mxu0
    %v4652 = vadd.f32 %v4363, %v4651
    %v4653 = vpop.f32.mrf.mxu0
    %v4654 = vadd.f32 %v4365, %v4653
    %4655 = vmatmul.bf16.gmra.mxu0 %v4504
    %v4656 = vpop.f32.mrf.mxu0
    %v4657 = vadd.f32 %v4368, %v4656
    %v4658 = vpop.f32.mrf.mxu0
    %v4659 = vadd.f32 %v4370, %v4658
    %4660 = vmatmul.bf16.gmra.mxu0 %v4507
    %v4661 = vpop.f32.mrf.mxu0
    %v4662 = vadd.f32 %v4373, %v4661
    %v4663 = vpop.f32.mrf.mxu0
    %v4664 = vadd.f32 %v4375, %v4663
    %4665 = vmatmul.bf16.gmra.mxu0 %v4510
    %v4666 = vpop.f32.mrf.mxu0
    %v4667 = vadd.f32 %v4378, %v4666
    %v4668 = vpop.f32.mrf.mxu0
    %v4669 = vadd.f32 %v4380, %v4668
    %4670 = vmatmul.bf16.gmra.mxu0 %v4513
    %v4671 = vpop.f32.mrf.mxu0
    %v4672 = vadd.f32 %v4383, %v4671
    %v4673 = vpop.f32.mrf.mxu0
    %v4674 = vadd.f32 %v4385, %v4673
    %4675 = vmatmul.bf16.gmra.mxu0 %v4516
    %v4676 = vpop.f32.mrf.mxu0
    %v4677 = vadd.f32 %v4388, %v4676
    %v4678 = vpop.f32.mrf.mxu0
    %v4679 = vadd.f32 %v4390, %v4678
    %4680 = vmatmul.bf16.gmra.mxu0 %v4519
    %v4681 = vpop.f32.mrf.mxu0
    %v4682 = vadd.f32 %v4393, %v4681
    %v4683 = vpop.f32.mrf.mxu0
    %v4684 = vadd.f32 %v4395, %v4683
    %4685 = vmatmul.bf16.gmra.mxu0 %v4522
    %v4686 = vpop.f32.mrf.mxu0
    %v4687 = vadd.f32 %v4398, %v4686
    %v4688 = vpop.f32.mrf.mxu0
    %v4689 = vadd.f32 %v4400, %v4688
    %4690 = vmatmul.bf16.gmra.mxu0 %v4525
    %v4691 = vpop.f32.mrf.mxu0
    %v4692 = vadd.f32 %v4403, %v4691
    %v4693 = vpop.f32.mrf.mxu0
    %v4694 = vadd.f32 %v4405, %v4693
    %4695 = vdwg.mxu0
    %v4696 = vpack.c.bf16 %v3974, %v3973
    %v4697 = vpack.c.bf16 %v3976, %v3975
    %v4698 = vpack.c.bf16 %v3978, %v3977
    %v4699 = vpack.c.bf16 %v3980, %v3979
    %v4700 = vpack.c.bf16 %v3982, %v3981
    %v4701 = vpack.c.bf16 %v3984, %v3983
    %v4702 = vpack.c.bf16 %v3986, %v3985
    %v4703 = vpack.c.bf16 %v3988, %v3987
    %v4704 = vpack.c.bf16 %v3990, %v3989
    %v4705 = vpack.c.bf16 %v3992, %v3991
    %v4706 = vpack.c.bf16 %v3994, %v3993
    %v4707 = vpack.c.bf16 %v3996, %v3995
    %v4708 = vpack.c.bf16 %v3998, %v3997
    %v4709 = vpack.c.bf16 %v4000, %v3999
    %v4710 = vpack.c.bf16 %v4002, %v4001
    %v4711 = vpack.c.bf16 %v4004, %v4003
    %v4712 = vpack.c.bf16 %v4006, %v4005
    %v4713 = vpack.c.bf16 %v4008, %v4007
    %v4714 = vpack.c.bf16 %v4010, %v4009
    %v4715 = vpack.c.bf16 %v4012, %v4011
    %v4716 = vpack.c.bf16 %v4014, %v4013
    %v4717 = vpack.c.bf16 %v4016, %v4015
    %v4718 = vpack.c.bf16 %v4018, %v4017
    %v4719 = vpack.c.bf16 %v4020, %v4019
    %v4720 = vpack.c.bf16 %v4022, %v4021
    %v4721 = vpack.c.bf16 %v4024, %v4023
    %v4722 = vpack.c.bf16 %v4026, %v4025
    %v4723 = vpack.c.bf16 %v4028, %v4027
    %v4724 = vpack.c.bf16 %v4030, %v4029
    %v4725 = vpack.c.bf16 %v4032, %v4031
    %v4726 = vpack.c.bf16 %v4034, %v4033
    %v4727 = vpack.c.bf16 %v4036, %v4035
    %s4728 = scalar_lea.vmem %s9, 64
    %v4729 = vld [vmem:[%s4728] sm:$0xf]
    %v4730 = vld [vmem:[%s4728 + $0x4] sm:$0xf]
    %v4731 = vld [vmem:[%s4728 + $0x8] sm:$0xf]
    %v4732 = vld [vmem:[%s4728 + $0xc] sm:$0xf]
    %v4733 = vld [vmem:[%s4728 + $0x10] sm:$0xf]
    %v4734 = vld [vmem:[%s4728 + $0x14] sm:$0xf]
    %v4735 = vld [vmem:[%s4728 + $0x18] sm:$0xf]
    %v4736 = vld [vmem:[%s4728 + $0x1c] sm:$0xf]
    %v4745 = vunpack.c.l.b16 %v4729
    %v4746 = vunpack.c.l.b16 %v4730
    %v4747 = vunpack.c.l.b16 %v4731
    %v4748 = vunpack.c.l.b16 %v4732
    %v4749 = vunpack.c.l.b16 %v4733
    %v4750 = vunpack.c.l.b16 %v4734
    %v4751 = vunpack.c.l.b16 %v4735
    %v4752 = vunpack.c.l.b16 %v4736
    %v4753 = vpack.c.b16 %v4746, %v4745
    %v4754 = vpack.c.b16 %v4748, %v4747
    %v4755 = vpack.c.b16 %v4750, %v4749
    %v4756 = vpack.c.b16 %v4752, %v4751
    %v4762 = vsel %vm2436, %v4696, 0
    %v4765 = vsel %vm2436, %v4697, 0
    %v4768 = vsel %vm2436, %v4698, 0
    %v4771 = vsel %vm2436, %v4699, 0
    %v4774 = vsel %vm2436, %v4700, 0
    %v4777 = vsel %vm2436, %v4701, 0
    %v4780 = vsel %vm2436, %v4702, 0
    %v4783 = vsel %vm2436, %v4703, 0
    %v4786 = vsel %vm2436, %v4704, 0
    %v4789 = vsel %vm2436, %v4705, 0
    %v4792 = vsel %vm2436, %v4706, 0
    %v4795 = vsel %vm2436, %v4707, 0
    %v4798 = vsel %vm2436, %v4708, 0
    %v4801 = vsel %vm2436, %v4709, 0
    %v4804 = vsel %vm2436, %v4710, 0
    %v4807 = vsel %vm2436, %v4711, 0
    %v4810 = vsel %vm2436, %v4712, 0
    %v4813 = vsel %vm2436, %v4713, 0
    %v4816 = vsel %vm2436, %v4714, 0
    %v4819 = vsel %vm2436, %v4715, 0
    %v4822 = vsel %vm2436, %v4716, 0
    %v4825 = vsel %vm2436, %v4717, 0
    %v4828 = vsel %vm2436, %v4718, 0
    %v4831 = vsel %vm2436, %v4719, 0
    %v4834 = vsel %vm2436, %v4720, 0
    %v4837 = vsel %vm2436, %v4721, 0
    %v4840 = vsel %vm2436, %v4722, 0
    %v4843 = vsel %vm2436, %v4723, 0
    %v4846 = vsel %vm2436, %v4724, 0
    %v4849 = vsel %vm2436, %v4725, 0
    %v4852 = vsel %vm2436, %v4726, 0
    %v4855 = vsel %vm2436, %v4727, 0
    %4857 = vmatpush.bf16.msra.mxu0 0
    %4858 = vmatpush.bf16.msra.mxu0 0
    %4859 = vmatpush.bf16.msra.mxu0 0
    %4860 = vmatpush.bf16.msra.mxu0 0
    %4861 = vmatpush.bf16.msra.mxu0 %v4756
    %4862 = vmatpush.bf16.msra.mxu0 %v4755
    %4863 = vmatpush.bf16.msra.mxu0 %v4754
    %4864 = vmatpush.bf16.msra.mxu0 %v4753
    %4865 = vmatmul.bf16.gmra.mxu0 %v4762
    %v4866 = vpop.f32.mrf.mxu0
    %v4867 = vadd.f32 0.0, %v4866
    %v4868 = vpop.f32.mrf.mxu0
    %v4869 = vadd.f32 0.0, %v4868
    %4870 = vmatmul.bf16.gmra.mxu0 %v4765
    %v4871 = vpop.f32.mrf.mxu0
    %v4872 = vadd.f32 0.0, %v4871
    %v4873 = vpop.f32.mrf.mxu0
    %v4874 = vadd.f32 0.0, %v4873
    %4875 = vmatmul.bf16.gmra.mxu0 %v4768
    %v4876 = vpop.f32.mrf.mxu0
    %v4877 = vadd.f32 0.0, %v4876
    %v4878 = vpop.f32.mrf.mxu0
    %v4879 = vadd.f32 0.0, %v4878
    %4880 = vmatmul.bf16.gmra.mxu0 %v4771
    %v4881 = vpop.f32.mrf.mxu0
    %v4882 = vadd.f32 0.0, %v4881
    %v4883 = vpop.f32.mrf.mxu0
    %v4884 = vadd.f32 0.0, %v4883
    %4885 = vmatmul.bf16.gmra.mxu0 %v4774
    %v4886 = vpop.f32.mrf.mxu0
    %v4887 = vadd.f32 0.0, %v4886
    %v4888 = vpop.f32.mrf.mxu0
    %v4889 = vadd.f32 0.0, %v4888
    %4890 = vmatmul.bf16.gmra.mxu0 %v4777
    %v4891 = vpop.f32.mrf.mxu0
    %v4892 = vadd.f32 0.0, %v4891
    %v4893 = vpop.f32.mrf.mxu0
    %v4894 = vadd.f32 0.0, %v4893
    %4895 = vmatmul.bf16.gmra.mxu0 %v4780
    %v4896 = vpop.f32.mrf.mxu0
    %v4897 = vadd.f32 0.0, %v4896
    %v4898 = vpop.f32.mrf.mxu0
    %v4899 = vadd.f32 0.0, %v4898
    %4900 = vmatmul.bf16.gmra.mxu0 %v4783
    %v4901 = vpop.f32.mrf.mxu0
    %v4902 = vadd.f32 0.0, %v4901
    %v4903 = vpop.f32.mrf.mxu0
    %v4904 = vadd.f32 0.0, %v4903
    %4905 = vmatmul.bf16.gmra.mxu0 %v4786
    %v4906 = vpop.f32.mrf.mxu0
    %v4907 = vadd.f32 0.0, %v4906
    %v4908 = vpop.f32.mrf.mxu0
    %v4909 = vadd.f32 0.0, %v4908
    %4910 = vmatmul.bf16.gmra.mxu0 %v4789
    %v4911 = vpop.f32.mrf.mxu0
    %v4912 = vadd.f32 0.0, %v4911
    %v4913 = vpop.f32.mrf.mxu0
    %v4914 = vadd.f32 0.0, %v4913
    %4915 = vmatmul.bf16.gmra.mxu0 %v4792
    %v4916 = vpop.f32.mrf.mxu0
    %v4917 = vadd.f32 0.0, %v4916
    %v4918 = vpop.f32.mrf.mxu0
    %v4919 = vadd.f32 0.0, %v4918
    %4920 = vmatmul.bf16.gmra.mxu0 %v4795
    %v4921 = vpop.f32.mrf.mxu0
    %v4922 = vadd.f32 0.0, %v4921
    %v4923 = vpop.f32.mrf.mxu0
    %v4924 = vadd.f32 0.0, %v4923
    %4925 = vmatmul.bf16.gmra.mxu0 %v4798
    %v4926 = vpop.f32.mrf.mxu0
    %v4927 = vadd.f32 0.0, %v4926
    %v4928 = vpop.f32.mrf.mxu0
    %v4929 = vadd.f32 0.0, %v4928
    %4930 = vmatmul.bf16.gmra.mxu0 %v4801
    %v4931 = vpop.f32.mrf.mxu0
    %v4932 = vadd.f32 0.0, %v4931
    %v4933 = vpop.f32.mrf.mxu0
    %v4934 = vadd.f32 0.0, %v4933
    %4935 = vmatmul.bf16.gmra.mxu0 %v4804
    %v4936 = vpop.f32.mrf.mxu0
    %v4937 = vadd.f32 0.0, %v4936
    %v4938 = vpop.f32.mrf.mxu0
    %v4939 = vadd.f32 0.0, %v4938
    %4940 = vmatmul.bf16.gmra.mxu0 %v4807
    %v4941 = vpop.f32.mrf.mxu0
    %v4942 = vadd.f32 0.0, %v4941
    %v4943 = vpop.f32.mrf.mxu0
    %v4944 = vadd.f32 0.0, %v4943
    %4945 = vmatmul.bf16.gmra.mxu0 %v4810
    %v4946 = vpop.f32.mrf.mxu0
    %v4947 = vadd.f32 0.0, %v4946
    %v4948 = vpop.f32.mrf.mxu0
    %v4949 = vadd.f32 0.0, %v4948
    %4950 = vmatmul.bf16.gmra.mxu0 %v4813
    %v4951 = vpop.f32.mrf.mxu0
    %v4952 = vadd.f32 0.0, %v4951
    %v4953 = vpop.f32.mrf.mxu0
    %v4954 = vadd.f32 0.0, %v4953
    %4955 = vmatmul.bf16.gmra.mxu0 %v4816
    %v4956 = vpop.f32.mrf.mxu0
    %v4957 = vadd.f32 0.0, %v4956
    %v4958 = vpop.f32.mrf.mxu0
    %v4959 = vadd.f32 0.0, %v4958
    %4960 = vmatmul.bf16.gmra.mxu0 %v4819
    %v4961 = vpop.f32.mrf.mxu0
    %v4962 = vadd.f32 0.0, %v4961
    %v4963 = vpop.f32.mrf.mxu0
    %v4964 = vadd.f32 0.0, %v4963
    %4965 = vmatmul.bf16.gmra.mxu0 %v4822
    %v4966 = vpop.f32.mrf.mxu0
    %v4967 = vadd.f32 0.0, %v4966
    %v4968 = vpop.f32.mrf.mxu0
    %v4969 = vadd.f32 0.0, %v4968
    %4970 = vmatmul.bf16.gmra.mxu0 %v4825
    %v4971 = vpop.f32.mrf.mxu0
    %v4972 = vadd.f32 0.0, %v4971
    %v4973 = vpop.f32.mrf.mxu0
    %v4974 = vadd.f32 0.0, %v4973
    %4975 = vmatmul.bf16.gmra.mxu0 %v4828
    %v4976 = vpop.f32.mrf.mxu0
    %v4977 = vadd.f32 0.0, %v4976
    %v4978 = vpop.f32.mrf.mxu0
    %v4979 = vadd.f32 0.0, %v4978
    %4980 = vmatmul.bf16.gmra.mxu0 %v4831
    %v4981 = vpop.f32.mrf.mxu0
    %v4982 = vadd.f32 0.0, %v4981
    %v4983 = vpop.f32.mrf.mxu0
    %v4984 = vadd.f32 0.0, %v4983
    %4985 = vmatmul.bf16.gmra.mxu0 %v4834
    %v4986 = vpop.f32.mrf.mxu0
    %v4987 = vadd.f32 0.0, %v4986
    %v4988 = vpop.f32.mrf.mxu0
    %v4989 = vadd.f32 0.0, %v4988
    %4990 = vmatmul.bf16.gmra.mxu0 %v4837
    %v4991 = vpop.f32.mrf.mxu0
    %v4992 = vadd.f32 0.0, %v4991
    %v4993 = vpop.f32.mrf.mxu0
    %v4994 = vadd.f32 0.0, %v4993
    %4995 = vmatmul.bf16.gmra.mxu0 %v4840
    %v4996 = vpop.f32.mrf.mxu0
    %v4997 = vadd.f32 0.0, %v4996
    %v4998 = vpop.f32.mrf.mxu0
    %v4999 = vadd.f32 0.0, %v4998
    %5000 = vmatmul.bf16.gmra.mxu0 %v4843
    %v5001 = vpop.f32.mrf.mxu0
    %v5002 = vadd.f32 0.0, %v5001
    %v5003 = vpop.f32.mrf.mxu0
    %v5004 = vadd.f32 0.0, %v5003
    %5005 = vmatmul.bf16.gmra.mxu0 %v4846
    %v5006 = vpop.f32.mrf.mxu0
    %v5007 = vadd.f32 0.0, %v5006
    %v5008 = vpop.f32.mrf.mxu0
    %v5009 = vadd.f32 0.0, %v5008
    %5010 = vmatmul.bf16.gmra.mxu0 %v4849
    %v5011 = vpop.f32.mrf.mxu0
    %v5012 = vadd.f32 0.0, %v5011
    %v5013 = vpop.f32.mrf.mxu0
    %v5014 = vadd.f32 0.0, %v5013
    %5015 = vmatmul.bf16.gmra.mxu0 %v4852
    %v5016 = vpop.f32.mrf.mxu0
    %v5017 = vadd.f32 0.0, %v5016
    %v5018 = vpop.f32.mrf.mxu0
    %v5019 = vadd.f32 0.0, %v5018
    %5020 = vmatmul.bf16.gmra.mxu0 %v4855
    %v5021 = vpop.f32.mrf.mxu0
    %v5022 = vadd.f32 0.0, %v5021
    %v5023 = vpop.f32.mrf.mxu0
    %v5024 = vadd.f32 0.0, %v5023
    %5025 = vdwg.mxu0
    %v5026 = vadd.f32 %v4537, %v4867
    %v5027 = vadd.f32 %v4539, %v4869
    %v5028 = vadd.f32 %v4542, %v4872
    %v5029 = vadd.f32 %v4544, %v4874
    %v5030 = vadd.f32 %v4547, %v4877
    %v5031 = vadd.f32 %v4549, %v4879
    %v5032 = vadd.f32 %v4552, %v4882
    %v5033 = vadd.f32 %v4554, %v4884
    %v5034 = vadd.f32 %v4557, %v4887
    %v5035 = vadd.f32 %v4559, %v4889
    %v5036 = vadd.f32 %v4562, %v4892
    %v5037 = vadd.f32 %v4564, %v4894
    %v5038 = vadd.f32 %v4567, %v4897
    %v5039 = vadd.f32 %v4569, %v4899
    %v5040 = vadd.f32 %v4572, %v4902
    %v5041 = vadd.f32 %v4574, %v4904
    %v5042 = vadd.f32 %v4577, %v4907
    %v5043 = vadd.f32 %v4579, %v4909
    %v5044 = vadd.f32 %v4582, %v4912
    %v5045 = vadd.f32 %v4584, %v4914
    %v5046 = vadd.f32 %v4587, %v4917
    %v5047 = vadd.f32 %v4589, %v4919
    %v5048 = vadd.f32 %v4592, %v4922
    %v5049 = vadd.f32 %v4594, %v4924
    %v5050 = vadd.f32 %v4597, %v4927
    %v5051 = vadd.f32 %v4599, %v4929
    %v5052 = vadd.f32 %v4602, %v4932
    %v5053 = vadd.f32 %v4604, %v4934
    %v5054 = vadd.f32 %v4607, %v4937
    %v5055 = vadd.f32 %v4609, %v4939
    %v5056 = vadd.f32 %v4612, %v4942
    %v5057 = vadd.f32 %v4614, %v4944
    %v5058 = vadd.f32 %v4617, %v4947
    %v5059 = vadd.f32 %v4619, %v4949
    %v5060 = vadd.f32 %v4622, %v4952
    %v5061 = vadd.f32 %v4624, %v4954
    %v5062 = vadd.f32 %v4627, %v4957
    %v5063 = vadd.f32 %v4629, %v4959
    %v5064 = vadd.f32 %v4632, %v4962
    %v5065 = vadd.f32 %v4634, %v4964
    %v5066 = vadd.f32 %v4637, %v4967
    %v5067 = vadd.f32 %v4639, %v4969
    %v5068 = vadd.f32 %v4642, %v4972
    %v5069 = vadd.f32 %v4644, %v4974
    %v5070 = vadd.f32 %v4647, %v4977
    %v5071 = vadd.f32 %v4649, %v4979
    %v5072 = vadd.f32 %v4652, %v4982
    %v5073 = vadd.f32 %v4654, %v4984
    %v5074 = vadd.f32 %v4657, %v4987
    %v5075 = vadd.f32 %v4659, %v4989
    %v5076 = vadd.f32 %v4662, %v4992
    %v5077 = vadd.f32 %v4664, %v4994
    %v5078 = vadd.f32 %v4667, %v4997
    %v5079 = vadd.f32 %v4669, %v4999
    %v5080 = vadd.f32 %v4672, %v5002
    %v5081 = vadd.f32 %v4674, %v5004
    %v5082 = vadd.f32 %v4677, %v5007
    %v5083 = vadd.f32 %v4679, %v5009
    %v5084 = vadd.f32 %v4682, %v5012
    %v5085 = vadd.f32 %v4684, %v5014
    %v5086 = vadd.f32 %v4687, %v5017
    %v5087 = vadd.f32 %v4689, %v5019
    %v5088 = vadd.f32 %v4692, %v5022
    %v5089 = vadd.f32 %v4694, %v5024
    %v5090 = vld [vmem:[%s10] sm:$0x1]
    %v5092 = vperm.slane %v5090, 0
    %v5094 = vadd.f32 %v5026, %v5092
    %v5095 = vadd.f32 %v5027, %v5092
    %v5096 = vadd.f32 %v5028, %v5092
    %v5097 = vadd.f32 %v5029, %v5092
    %v5098 = vadd.f32 %v5030, %v5092
    %v5099 = vadd.f32 %v5031, %v5092
    %v5100 = vadd.f32 %v5032, %v5092
    %v5101 = vadd.f32 %v5033, %v5092
    %v5102 = vadd.f32 %v5034, %v5092
    %v5103 = vadd.f32 %v5035, %v5092
    %v5104 = vadd.f32 %v5036, %v5092
    %v5105 = vadd.f32 %v5037, %v5092
    %v5106 = vadd.f32 %v5038, %v5092
    %v5107 = vadd.f32 %v5039, %v5092
    %v5108 = vadd.f32 %v5040, %v5092
    %v5109 = vadd.f32 %v5041, %v5092
    %v5110 = vadd.f32 %v5042, %v5092
    %v5111 = vadd.f32 %v5043, %v5092
    %v5112 = vadd.f32 %v5044, %v5092
    %v5113 = vadd.f32 %v5045, %v5092
    %v5114 = vadd.f32 %v5046, %v5092
    %v5115 = vadd.f32 %v5047, %v5092
    %v5116 = vadd.f32 %v5048, %v5092
    %v5117 = vadd.f32 %v5049, %v5092
    %v5118 = vadd.f32 %v5050, %v5092
    %v5119 = vadd.f32 %v5051, %v5092
    %v5120 = vadd.f32 %v5052, %v5092
    %v5121 = vadd.f32 %v5053, %v5092
    %v5122 = vadd.f32 %v5054, %v5092
    %v5123 = vadd.f32 %v5055, %v5092
    %v5124 = vadd.f32 %v5056, %v5092
    %v5125 = vadd.f32 %v5057, %v5092
    %v5126 = vadd.f32 %v5058, %v5092
    %v5127 = vadd.f32 %v5059, %v5092
    %v5128 = vadd.f32 %v5060, %v5092
    %v5129 = vadd.f32 %v5061, %v5092
    %v5130 = vadd.f32 %v5062, %v5092
    %v5131 = vadd.f32 %v5063, %v5092
    %v5132 = vadd.f32 %v5064, %v5092
    %v5133 = vadd.f32 %v5065, %v5092
    %v5134 = vadd.f32 %v5066, %v5092
    %v5135 = vadd.f32 %v5067, %v5092
    %v5136 = vadd.f32 %v5068, %v5092
    %v5137 = vadd.f32 %v5069, %v5092
    %v5138 = vadd.f32 %v5070, %v5092
    %v5139 = vadd.f32 %v5071, %v5092
    %v5140 = vadd.f32 %v5072, %v5092
    %v5141 = vadd.f32 %v5073, %v5092
    %v5142 = vadd.f32 %v5074, %v5092
    %v5143 = vadd.f32 %v5075, %v5092
    %v5144 = vadd.f32 %v5076, %v5092
    %v5145 = vadd.f32 %v5077, %v5092
    %v5146 = vadd.f32 %v5078, %v5092
    %v5147 = vadd.f32 %v5079, %v5092
    %v5148 = vadd.f32 %v5080, %v5092
    %v5149 = vadd.f32 %v5081, %v5092
    %v5150 = vadd.f32 %v5082, %v5092
    %v5151 = vadd.f32 %v5083, %v5092
    %v5152 = vadd.f32 %v5084, %v5092
    %v5153 = vadd.f32 %v5085, %v5092
    %v5154 = vadd.f32 %v5086, %v5092
    %v5155 = vadd.f32 %v5087, %v5092
    %v5156 = vadd.f32 %v5088, %v5092
    %v5157 = vadd.f32 %v5089, %v5092
    %v5158 = vmax.f32 %v5094, 0.0
    %v5159 = vmax.f32 %v5095, 0.0
    %v5160 = vmax.f32 %v5096, 0.0
    %v5161 = vmax.f32 %v5097, 0.0
    %v5162 = vmax.f32 %v5098, 0.0
    %v5163 = vmax.f32 %v5099, 0.0
    %v5164 = vmax.f32 %v5100, 0.0
    %v5165 = vmax.f32 %v5101, 0.0
    %v5166 = vmax.f32 %v5102, 0.0
    %v5167 = vmax.f32 %v5103, 0.0
    %v5168 = vmax.f32 %v5104, 0.0
    %v5169 = vmax.f32 %v5105, 0.0
    %v5170 = vmax.f32 %v5106, 0.0
    %v5171 = vmax.f32 %v5107, 0.0
    %v5172 = vmax.f32 %v5108, 0.0
    %v5173 = vmax.f32 %v5109, 0.0
    %v5174 = vmax.f32 %v5110, 0.0
    %v5175 = vmax.f32 %v5111, 0.0
    %v5176 = vmax.f32 %v5112, 0.0
    %v5177 = vmax.f32 %v5113, 0.0
    %v5178 = vmax.f32 %v5114, 0.0
    %v5179 = vmax.f32 %v5115, 0.0
    %v5180 = vmax.f32 %v5116, 0.0
    %v5181 = vmax.f32 %v5117, 0.0
    %v5182 = vmax.f32 %v5118, 0.0
    %v5183 = vmax.f32 %v5119, 0.0
    %v5184 = vmax.f32 %v5120, 0.0
    %v5185 = vmax.f32 %v5121, 0.0
    %v5186 = vmax.f32 %v5122, 0.0
    %v5187 = vmax.f32 %v5123, 0.0
    %v5188 = vmax.f32 %v5124, 0.0
    %v5189 = vmax.f32 %v5125, 0.0
    %v5190 = vmax.f32 %v5126, 0.0
    %v5191 = vmax.f32 %v5127, 0.0
    %v5192 = vmax.f32 %v5128, 0.0
    %v5193 = vmax.f32 %v5129, 0.0
    %v5194 = vmax.f32 %v5130, 0.0
    %v5195 = vmax.f32 %v5131, 0.0
    %v5196 = vmax.f32 %v5132, 0.0
    %v5197 = vmax.f32 %v5133, 0.0
    %v5198 = vmax.f32 %v5134, 0.0
    %v5199 = vmax.f32 %v5135, 0.0
    %v5200 = vmax.f32 %v5136, 0.0
    %v5201 = vmax.f32 %v5137, 0.0
    %v5202 = vmax.f32 %v5138, 0.0
    %v5203 = vmax.f32 %v5139, 0.0
    %v5204 = vmax.f32 %v5140, 0.0
    %v5205 = vmax.f32 %v5141, 0.0
    %v5206 = vmax.f32 %v5142, 0.0
    %v5207 = vmax.f32 %v5143, 0.0
    %v5208 = vmax.f32 %v5144, 0.0
    %v5209 = vmax.f32 %v5145, 0.0
    %v5210 = vmax.f32 %v5146, 0.0
    %v5211 = vmax.f32 %v5147, 0.0
    %v5212 = vmax.f32 %v5148, 0.0
    %v5213 = vmax.f32 %v5149, 0.0
    %v5214 = vmax.f32 %v5150, 0.0
    %v5215 = vmax.f32 %v5151, 0.0
    %v5216 = vmax.f32 %v5152, 0.0
    %v5217 = vmax.f32 %v5153, 0.0
    %v5218 = vmax.f32 %v5154, 0.0
    %v5219 = vmax.f32 %v5155, 0.0
    %v5220 = vmax.f32 %v5156, 0.0
    %v5221 = vmax.f32 %v5157, 0.0
    %v5222 = vsel %vm2436, %v5158, 0.0
    %v5223 = vsel %vm2436, %v5159, 0.0
    %v5224 = vadd.f32 %v5222, %v5223
    %v5225 = vsel %vm2436, %v5160, 0.0
    %v5226 = vadd.f32 %v5224, %v5225
    %v5227 = vsel %vm2436, %v5161, 0.0
    %v5228 = vadd.f32 %v5226, %v5227
    %v5229 = vrot.slane %v5228, 4
    %v5230 = vadd.f32 %v5228, %v5229
    %v5231 = vrot.slane %v5230, 2
    %v5232 = vadd.f32 %v5230, %v5231
    %v5233 = vrot.slane %v5232, 1
    %v5234 = vadd.f32 %v5232, %v5233
    %v5235 = vsel %vm2436, %v5162, 0.0
    %v5236 = vsel %vm2436, %v5163, 0.0
    %v5237 = vadd.f32 %v5235, %v5236
    %v5238 = vsel %vm2436, %v5164, 0.0
    %v5239 = vadd.f32 %v5237, %v5238
    %v5240 = vsel %vm2436, %v5165, 0.0
    %v5241 = vadd.f32 %v5239, %v5240
    %v5242 = vrot.slane %v5241, 4
    %v5243 = vadd.f32 %v5241, %v5242
    %v5244 = vrot.slane %v5243, 2
    %v5245 = vadd.f32 %v5243, %v5244
    %v5246 = vrot.slane %v5245, 1
    %v5247 = vadd.f32 %v5245, %v5246
    %v5248 = vsel %vm2436, %v5166, 0.0
    %v5249 = vsel %vm2436, %v5167, 0.0
    %v5250 = vadd.f32 %v5248, %v5249
    %v5251 = vsel %vm2436, %v5168, 0.0
    %v5252 = vadd.f32 %v5250, %v5251
    %v5253 = vsel %vm2436, %v5169, 0.0
    %v5254 = vadd.f32 %v5252, %v5253
    %v5255 = vrot.slane %v5254, 4
    %v5256 = vadd.f32 %v5254, %v5255
    %v5257 = vrot.slane %v5256, 2
    %v5258 = vadd.f32 %v5256, %v5257
    %v5259 = vrot.slane %v5258, 1
    %v5260 = vadd.f32 %v5258, %v5259
    %v5261 = vsel %vm2436, %v5170, 0.0
    %v5262 = vsel %vm2436, %v5171, 0.0
    %v5263 = vadd.f32 %v5261, %v5262
    %v5264 = vsel %vm2436, %v5172, 0.0
    %v5265 = vadd.f32 %v5263, %v5264
    %v5266 = vsel %vm2436, %v5173, 0.0
    %v5267 = vadd.f32 %v5265, %v5266
    %v5268 = vrot.slane %v5267, 4
    %v5269 = vadd.f32 %v5267, %v5268
    %v5270 = vrot.slane %v5269, 2
    %v5271 = vadd.f32 %v5269, %v5270
    %v5272 = vrot.slane %v5271, 1
    %v5273 = vadd.f32 %v5271, %v5272
    %v5274 = vsel %vm2436, %v5174, 0.0
    %v5275 = vsel %vm2436, %v5175, 0.0
    %v5276 = vadd.f32 %v5274, %v5275
    %v5277 = vsel %vm2436, %v5176, 0.0
    %v5278 = vadd.f32 %v5276, %v5277
    %v5279 = vsel %vm2436, %v5177, 0.0
    %v5280 = vadd.f32 %v5278, %v5279
    %v5281 = vrot.slane %v5280, 4
    %v5282 = vadd.f32 %v5280, %v5281
    %v5283 = vrot.slane %v5282, 2
    %v5284 = vadd.f32 %v5282, %v5283
    %v5285 = vrot.slane %v5284, 1
    %v5286 = vadd.f32 %v5284, %v5285
    %v5287 = vsel %vm2436, %v5178, 0.0
    %v5288 = vsel %vm2436, %v5179, 0.0
    %v5289 = vadd.f32 %v5287, %v5288
    %v5290 = vsel %vm2436, %v5180, 0.0
    %v5291 = vadd.f32 %v5289, %v5290
    %v5292 = vsel %vm2436, %v5181, 0.0
    %v5293 = vadd.f32 %v5291, %v5292
    %v5294 = vrot.slane %v5293, 4
    %v5295 = vadd.f32 %v5293, %v5294
    %v5296 = vrot.slane %v5295, 2
    %v5297 = vadd.f32 %v5295, %v5296
    %v5298 = vrot.slane %v5297, 1
    %v5299 = vadd.f32 %v5297, %v5298
    %v5300 = vsel %vm2436, %v5182, 0.0
    %v5301 = vsel %vm2436, %v5183, 0.0
    %v5302 = vadd.f32 %v5300, %v5301
    %v5303 = vsel %vm2436, %v5184, 0.0
    %v5304 = vadd.f32 %v5302, %v5303
    %v5305 = vsel %vm2436, %v5185, 0.0
    %v5306 = vadd.f32 %v5304, %v5305
    %v5307 = vrot.slane %v5306, 4
    %v5308 = vadd.f32 %v5306, %v5307
    %v5309 = vrot.slane %v5308, 2
    %v5310 = vadd.f32 %v5308, %v5309
    %v5311 = vrot.slane %v5310, 1
    %v5312 = vadd.f32 %v5310, %v5311
    %v5313 = vsel %vm2436, %v5186, 0.0
    %v5314 = vsel %vm2436, %v5187, 0.0
    %v5315 = vadd.f32 %v5313, %v5314
    %v5316 = vsel %vm2436, %v5188, 0.0
    %v5317 = vadd.f32 %v5315, %v5316
    %v5318 = vsel %vm2436, %v5189, 0.0
    %v5319 = vadd.f32 %v5317, %v5318
    %v5320 = vrot.slane %v5319, 4
    %v5321 = vadd.f32 %v5319, %v5320
    %v5322 = vrot.slane %v5321, 2
    %v5323 = vadd.f32 %v5321, %v5322
    %v5324 = vrot.slane %v5323, 1
    %v5325 = vadd.f32 %v5323, %v5324
    %v5326 = vsel %vm2436, %v5190, 0.0
    %v5327 = vsel %vm2436, %v5191, 0.0
    %v5328 = vadd.f32 %v5326, %v5327
    %v5329 = vsel %vm2436, %v5192, 0.0
    %v5330 = vadd.f32 %v5328, %v5329
    %v5331 = vsel %vm2436, %v5193, 0.0
    %v5332 = vadd.f32 %v5330, %v5331
    %v5333 = vrot.slane %v5332, 4
    %v5334 = vadd.f32 %v5332, %v5333
    %v5335 = vrot.slane %v5334, 2
    %v5336 = vadd.f32 %v5334, %v5335
    %v5337 = vrot.slane %v5336, 1
    %v5338 = vadd.f32 %v5336, %v5337
    %v5339 = vsel %vm2436, %v5194, 0.0
    %v5340 = vsel %vm2436, %v5195, 0.0
    %v5341 = vadd.f32 %v5339, %v5340
    %v5342 = vsel %vm2436, %v5196, 0.0
    %v5343 = vadd.f32 %v5341, %v5342
    %v5344 = vsel %vm2436, %v5197, 0.0
    %v5345 = vadd.f32 %v5343, %v5344
    %v5346 = vrot.slane %v5345, 4
    %v5347 = vadd.f32 %v5345, %v5346
    %v5348 = vrot.slane %v5347, 2
    %v5349 = vadd.f32 %v5347, %v5348
    %v5350 = vrot.slane %v5349, 1
    %v5351 = vadd.f32 %v5349, %v5350
    %v5352 = vsel %vm2436, %v5198, 0.0
    %v5353 = vsel %vm2436, %v5199, 0.0
    %v5354 = vadd.f32 %v5352, %v5353
    %v5355 = vsel %vm2436, %v5200, 0.0
    %v5356 = vadd.f32 %v5354, %v5355
    %v5357 = vsel %vm2436, %v5201, 0.0
    %v5358 = vadd.f32 %v5356, %v5357
    %v5359 = vrot.slane %v5358, 4
    %v5360 = vadd.f32 %v5358, %v5359
    %v5361 = vrot.slane %v5360, 2
    %v5362 = vadd.f32 %v5360, %v5361
    %v5363 = vrot.slane %v5362, 1
    %v5364 = vadd.f32 %v5362, %v5363
    %v5365 = vsel %vm2436, %v5202, 0.0
    %v5366 = vsel %vm2436, %v5203, 0.0
    %v5367 = vadd.f32 %v5365, %v5366
    %v5368 = vsel %vm2436, %v5204, 0.0
    %v5369 = vadd.f32 %v5367, %v5368
    %v5370 = vsel %vm2436, %v5205, 0.0
    %v5371 = vadd.f32 %v5369, %v5370
    %v5372 = vrot.slane %v5371, 4
    %v5373 = vadd.f32 %v5371, %v5372
    %v5374 = vrot.slane %v5373, 2
    %v5375 = vadd.f32 %v5373, %v5374
    %v5376 = vrot.slane %v5375, 1
    %v5377 = vadd.f32 %v5375, %v5376
    %v5378 = vsel %vm2436, %v5206, 0.0
    %v5379 = vsel %vm2436, %v5207, 0.0
    %v5380 = vadd.f32 %v5378, %v5379
    %v5381 = vsel %vm2436, %v5208, 0.0
    %v5382 = vadd.f32 %v5380, %v5381
    %v5383 = vsel %vm2436, %v5209, 0.0
    %v5384 = vadd.f32 %v5382, %v5383
    %v5385 = vrot.slane %v5384, 4
    %v5386 = vadd.f32 %v5384, %v5385
    %v5387 = vrot.slane %v5386, 2
    %v5388 = vadd.f32 %v5386, %v5387
    %v5389 = vrot.slane %v5388, 1
    %v5390 = vadd.f32 %v5388, %v5389
    %v5391 = vsel %vm2436, %v5210, 0.0
    %v5392 = vsel %vm2436, %v5211, 0.0
    %v5393 = vadd.f32 %v5391, %v5392
    %v5394 = vsel %vm2436, %v5212, 0.0
    %v5395 = vadd.f32 %v5393, %v5394
    %v5396 = vsel %vm2436, %v5213, 0.0
    %v5397 = vadd.f32 %v5395, %v5396
    %v5398 = vrot.slane %v5397, 4
    %v5399 = vadd.f32 %v5397, %v5398
    %v5400 = vrot.slane %v5399, 2
    %v5401 = vadd.f32 %v5399, %v5400
    %v5402 = vrot.slane %v5401, 1
    %v5403 = vadd.f32 %v5401, %v5402
    %v5404 = vsel %vm2436, %v5214, 0.0
    %v5405 = vsel %vm2436, %v5215, 0.0
    %v5406 = vadd.f32 %v5404, %v5405
    %v5407 = vsel %vm2436, %v5216, 0.0
    %v5408 = vadd.f32 %v5406, %v5407
    %v5409 = vsel %vm2436, %v5217, 0.0
    %v5410 = vadd.f32 %v5408, %v5409
    %v5411 = vrot.slane %v5410, 4
    %v5412 = vadd.f32 %v5410, %v5411
    %v5413 = vrot.slane %v5412, 2
    %v5414 = vadd.f32 %v5412, %v5413
    %v5415 = vrot.slane %v5414, 1
    %v5416 = vadd.f32 %v5414, %v5415
    %v5417 = vsel %vm2436, %v5218, 0.0
    %v5418 = vsel %vm2436, %v5219, 0.0
    %v5419 = vadd.f32 %v5417, %v5418
    %v5420 = vsel %vm2436, %v5220, 0.0
    %v5421 = vadd.f32 %v5419, %v5420
    %v5422 = vsel %vm2436, %v5221, 0.0
    %v5423 = vadd.f32 %v5421, %v5422
    %v5424 = vrot.slane %v5423, 4
    %v5425 = vadd.f32 %v5423, %v5424
    %v5426 = vrot.slane %v5425, 2
    %v5427 = vadd.f32 %v5425, %v5426
    %v5428 = vrot.slane %v5427, 1
    %v5429 = vadd.f32 %v5427, %v5428
    %v5430 = vrcp.pop 32.0
    %v5431 = vmul.f32 32.0, %v5430
    %v5432 = vsub.f32 1.0, %v5431
    %v5433 = vmul.f32 %v5430, %v5432
    %v5434 = vadd.f32 %v5430, %v5433
    %vm5435 = vweird.f32 %v5430
    %v5436 = vsel %vm5435, %v5430, %v5434
    %v5437 = vmul.f32 %v5234, %v5436
    %v5438 = vmul.f32 %v5247, %v5436
    %v5439 = vmul.f32 %v5260, %v5436
    %v5440 = vmul.f32 %v5273, %v5436
    %v5441 = vmul.f32 %v5286, %v5436
    %v5442 = vmul.f32 %v5299, %v5436
    %v5443 = vmul.f32 %v5312, %v5436
    %v5444 = vmul.f32 %v5325, %v5436
    %v5445 = vmul.f32 %v5338, %v5436
    %v5446 = vmul.f32 %v5351, %v5436
    %v5447 = vmul.f32 %v5364, %v5436
    %v5448 = vmul.f32 %v5377, %v5436
    %v5449 = vmul.f32 %v5390, %v5436
    %v5450 = vmul.f32 %v5403, %v5436
    %v5451 = vmul.f32 %v5416, %v5436
    %v5452 = vmul.f32 %v5429, %v5436
    %v5453 = vld [vmem:[%s11] sm:$0x1]
    %v5455 = vperm.slane %v5453, 0
    %v5457 = vmul.f32 %v5437, %v5455
    %v5458 = vmul.f32 %v5438, %v5455
    %v5459 = vmul.f32 %v5439, %v5455
    %v5460 = vmul.f32 %v5440, %v5455
    %v5461 = vmul.f32 %v5441, %v5455
    %v5462 = vmul.f32 %v5442, %v5455
    %v5463 = vmul.f32 %v5443, %v5455
    %v5464 = vmul.f32 %v5444, %v5455
    %v5465 = vmul.f32 %v5445, %v5455
    %v5466 = vmul.f32 %v5446, %v5455
    %v5467 = vmul.f32 %v5447, %v5455
    %v5468 = vmul.f32 %v5448, %v5455
    %v5469 = vmul.f32 %v5449, %v5455
    %v5470 = vmul.f32 %v5450, %v5455
    %v5471 = vmul.f32 %v5451, %v5455
    %v5472 = vmul.f32 %v5452, %v5455
    %v5473 = vld [vmem:[%s12] sm:$0x1]
    %v5475 = vperm.slane %v5473, 0
    %v5477 = vadd.f32 %v5457, %v5475
    %v5478 = vadd.f32 %v5458, %v5475
    %v5479 = vadd.f32 %v5459, %v5475
    %v5480 = vadd.f32 %v5460, %v5475
    %v5481 = vadd.f32 %v5461, %v5475
    %v5482 = vadd.f32 %v5462, %v5475
    %v5483 = vadd.f32 %v5463, %v5475
    %v5484 = vadd.f32 %v5464, %v5475
    %v5485 = vadd.f32 %v5465, %v5475
    %v5486 = vadd.f32 %v5466, %v5475
    %v5487 = vadd.f32 %v5467, %v5475
    %v5488 = vadd.f32 %v5468, %v5475
    %v5489 = vadd.f32 %v5469, %v5475
    %v5490 = vadd.f32 %v5470, %v5475
    %v5491 = vadd.f32 %v5471, %v5475
    %v5492 = vadd.f32 %v5472, %v5475
    %v5493 = vpack.c.bf16 %v5477, %v5477
    %v5494 = vpack.c.bf16 %v5478, %v5478
    %v5495 = vpack.c.bf16 %v5479, %v5479
    %v5496 = vpack.c.bf16 %v5480, %v5480
    %v5497 = vpack.c.bf16 %v5481, %v5481
    %v5498 = vpack.c.bf16 %v5482, %v5482
    %v5499 = vpack.c.bf16 %v5483, %v5483
    %v5500 = vpack.c.bf16 %v5484, %v5484
    %v5501 = vpack.c.bf16 %v5485, %v5485
    %v5502 = vpack.c.bf16 %v5486, %v5486
    %v5503 = vpack.c.bf16 %v5487, %v5487
    %v5504 = vpack.c.bf16 %v5488, %v5488
    %v5505 = vpack.c.bf16 %v5489, %v5489
    %v5506 = vpack.c.bf16 %v5490, %v5490
    %v5507 = vpack.c.bf16 %v5491, %v5491
    %v5508 = vpack.c.bf16 %v5492, %v5492
    %v5509 = vld [vmem:[%s13] sm:$0xf]
    %v5510 = vld [vmem:[%s13 + $0x4] sm:$0xf]
    %v5511 = vld [vmem:[%s13 + $0x8] sm:$0xf]
    %v5512 = vld [vmem:[%s13 + $0xc] sm:$0xf]
    %v5513 = vld [vmem:[%s13 + $0x10] sm:$0xf]
    %v5514 = vld [vmem:[%s13 + $0x14] sm:$0xf]
    %v5515 = vld [vmem:[%s13 + $0x18] sm:$0xf]
    %v5516 = vld [vmem:[%s13 + $0x1c] sm:$0xf]
    %v5517 = vld [vmem:[%s14] sm:$0x1]
    %v5519 = vperm.slane %v5517, 0
    %v5537 = vunpack.c.l.b16 %v5493
    %v5538 = vunpack.c.l.b16 %v5494
    %v5539 = vunpack.c.l.b16 %v5495
    %v5540 = vunpack.c.l.b16 %v5496
    %v5541 = vunpack.c.l.b16 %v5497
    %v5542 = vunpack.c.l.b16 %v5498
    %v5543 = vunpack.c.l.b16 %v5499
    %v5544 = vunpack.c.l.b16 %v5500
    %v5545 = vunpack.c.l.b16 %v5501
    %v5546 = vunpack.c.l.b16 %v5502
    %v5547 = vunpack.c.l.b16 %v5503
    %v5548 = vunpack.c.l.b16 %v5504
    %v5549 = vunpack.c.l.b16 %v5505
    %v5550 = vunpack.c.l.b16 %v5506
    %v5551 = vunpack.c.l.b16 %v5507
    %v5552 = vunpack.c.l.b16 %v5508
    %v5553 = vrot.slane %v5538, 7
    %vm5554 = vcmask 1041409
    %v5555 = vsel %vm5554, %v5553, %v5537
    %v5556 = vrot.slane %v5539, 6
    %vm5557 = vcmask 1042434
    %v5558 = vsel %vm5557, %v5556, %v5555
    %v5559 = vrot.slane %v5540, 5
    %vm5560 = vcmask 1043459
    %v5561 = vsel %vm5560, %v5559, %v5558
    %v5562 = vrot.slane %v5541, 4
    %vm5563 = vcmask 1044484
    %v5564 = vsel %vm5563, %v5562, %v5561
    %v5565 = vrot.slane %v5542, 3
    %vm5566 = vcmask 1045509
    %v5567 = vsel %vm5566, %v5565, %v5564
    %v5568 = vrot.slane %v5543, 2
    %vm5569 = vcmask 1046534
    %v5570 = vsel %vm5569, %v5568, %v5567
    %v5571 = vrot.slane %v5544, 1
    %vm5572 = vcmask 1047559
    %v5573 = vsel %vm5572, %v5571, %v5570
    %v5574 = vrot.slane %v5546, 7
    %v5575 = vsel %vm5554, %v5574, %v5545
    %v5576 = vrot.slane %v5547, 6
    %v5577 = vsel %vm5557, %v5576, %v5575
    %v5578 = vrot.slane %v5548, 5
    %v5579 = vsel %vm5560, %v5578, %v5577
    %v5580 = vrot.slane %v5549, 4
    %v5581 = vsel %vm5563, %v5580, %v5579
    %v5582 = vrot.slane %v5550, 3
    %v5583 = vsel %vm5566, %v5582, %v5581
    %v5584 = vrot.slane %v5551, 2
    %v5585 = vsel %vm5569, %v5584, %v5583
    %v5586 = vrot.slane %v5552, 1
    %v5587 = vsel %vm5572, %v5586, %v5585
    %v5588 = vpack.c.b16 %v5587, %v5573
    %v5597 = vunpack.c.l.b16 %v5509
    %v5598 = vunpack.c.l.b16 %v5510
    %v5599 = vunpack.c.l.b16 %v5511
    %v5600 = vunpack.c.l.b16 %v5512
    %v5601 = vunpack.c.l.b16 %v5513
    %v5602 = vunpack.c.l.b16 %v5514
    %v5603 = vunpack.c.l.b16 %v5515
    %v5604 = vunpack.c.l.b16 %v5516
    %v5605 = vpack.c.b16 %v5598, %v5597
    %v5606 = vpack.c.b16 %v5600, %v5599
    %v5607 = vpack.c.b16 %v5602, %v5601
    %v5608 = vpack.c.b16 %v5604, %v5603
    %v5614 = vsel %vm2436, %v5588, 0
    %5616 = vmatpush.bf16.msra.mxu0 0
    %5617 = vmatpush.bf16.msra.mxu0 0
    %5618 = vmatpush.bf16.msra.mxu0 0
    %5619 = vmatpush.bf16.msra.mxu0 0
    %5620 = vmatpush.bf16.msra.mxu0 %v5608
    %5621 = vmatpush.bf16.msra.mxu0 %v5607
    %5622 = vmatpush.bf16.msra.mxu0 %v5606
    %5623 = vmatpush.bf16.msra.mxu0 %v5605
    %5624 = vmatmul.bf16.gmra.mxu0 %v5614
    %v5625 = vpop.f32.mrf.mxu0
    %v5626 = vadd.f32 %v5519, %v5625
    %v5627 = vpop.f32.mrf.mxu0
    %v5628 = vadd.f32 %v5519, %v5627
    %5629 = vdwg.mxu0
    %v5630 = vmax.f32 %v5626, 0.0
    %v5631 = vmax.f32 %v5628, 0.0
    %5632 = vst [vmem:[#allocation2] sm:$0xff] %v5630
    %5633 = vst [vmem:[#allocation2 + $0x8] sm:$0xff] %v5631
    %v5650 = vrot.slane %v5478, 7
    %v5651 = vsel %vm5554, %v5650, %v5477
    %v5652 = vrot.slane %v5479, 6
    %v5653 = vsel %vm5557, %v5652, %v5651
    %v5654 = vrot.slane %v5480, 5
    %v5655 = vsel %vm5560, %v5654, %v5653
    %v5656 = vrot.slane %v5481, 4
    %v5657 = vsel %vm5563, %v5656, %v5655
    %v5658 = vrot.slane %v5482, 3
    %v5659 = vsel %vm5566, %v5658, %v5657
    %v5660 = vrot.slane %v5483, 2
    %v5661 = vsel %vm5569, %v5660, %v5659
    %v5662 = vrot.slane %v5484, 1
    %v5663 = vsel %vm5572, %v5662, %v5661
    %v5664 = vrot.slane %v5486, 7
    %v5665 = vsel %vm5554, %v5664, %v5485
    %v5666 = vrot.slane %v5487, 6
    %v5667 = vsel %vm5557, %v5666, %v5665
    %v5668 = vrot.slane %v5488, 5
    %v5669 = vsel %vm5560, %v5668, %v5667
    %v5670 = vrot.slane %v5489, 4
    %v5671 = vsel %vm5563, %v5670, %v5669
    %v5672 = vrot.slane %v5490, 3
    %v5673 = vsel %vm5566, %v5672, %v5671
    %v5674 = vrot.slane %v5491, 2
    %v5675 = vsel %vm5569, %v5674, %v5673
    %v5676 = vrot.slane %v5492, 1
    %v5677 = vsel %vm5572, %v5676, %v5675
    %v5680 = vsel %vm2436, %v5663, 0.0
    %v5681 = vsel %vm2436, %v5677, 0.0
    %5682 = vst [vmem:[#allocation4] sm:$0xff] %v5680
    %5683 = vst [vmem:[#allocation4 + $0x8] sm:$0xff] %v5681
    // Predicated region
    $region62: #{tpu_custom_call.1} parent=1 // pred_check
      _
    $region63: #{tpu_custom_call.1} parent=1 // pred_check_branch
      %5685 = sbr.rel (0) target = $region65
    $region64: #{tpu_custom_call.1} parent=1 // pred_region
      %5687 = vsyncadd [#allocation3], 0
      %s5688 = sshll.u32 [#allocation2], 4
      %s5689 = int_to_ptr.vmem [resolvable:$true] %s5688
      %s5690 = sshll.u32 %s15, 4
      %s5691 = int_to_ptr.hbm [resolvable:$true] %s5690
      %5696 = dma.vmem_to_hbm [thread:$0]  %s5689, 256, %s5691, [#allocation3], 128, 128, 8
    $region65: #{tpu_custom_call.1} parent=1 // pred_fallthru
      _
    // Predicated region
    $region66: #{tpu_custom_call.1} parent=1 // pred_check
      _
    $region67: #{tpu_custom_call.1} parent=1 // pred_check_branch
      %5698 = sbr.rel (0) target = $region69
    $region68: #{tpu_custom_call.1} parent=1 // pred_region
      %5700 = vsyncadd [#allocation5], 0
      %s5701 = sshll.u32 [#allocation4], 4
      %s5702 = int_to_ptr.vmem [resolvable:$true] %s5701
      %s5703 = sshll.u32 %s16, 4
      %s5704 = int_to_ptr.hbm [resolvable:$true] %s5703
      %5709 = dma.vmem_to_hbm [thread:$0]  %s5702, 256, %s5704, [#allocation5], 128, 128, 8
    $region69: #{tpu_custom_call.1} parent=1 // pred_fallthru
      _
    // Predicated region
    $region70: #{tpu_custom_call.1} parent=1 // pred_check
      _
    $region71: #{tpu_custom_call.1} parent=1 // pred_check_branch
      %5711 = sbr.rel (0) target = $region73
    $region72: #{tpu_custom_call.1} parent=1 // pred_region
      %5713 = dma.done [#allocation3], 256
    $region73: #{tpu_custom_call.1} parent=1 // pred_fallthru
      _
    // Predicated region
    $region74: #{tpu_custom_call.1} parent=1 // pred_check
      _
    $region75: #{tpu_custom_call.1} parent=1 // pred_check_branch
      %5715 = sbr.rel (0) target = $region77
    $region76: #{tpu_custom_call.1} parent=1 // pred_region
      %5717 = dma.done [#allocation5], 256
    $region77: #{tpu_custom_call.1} parent=1 // pred_fallthru
      _
    %5718 = vsyncpa [#allocation3], 1
    %5719 = vsyncpa [#allocation5], 1

</llo_original>
